<compile_context>
chip_gen: v6e
topology: v6e:2x2x1
jax: 0.10.0
libtpu: 0.0.40
codegen_flags: <defaults>
</compile_context>

<pallas_src>
import functools
import math

import jax
import jax.numpy as jnp
from jax.experimental import pallas as pl
from jax.experimental.pallas import tpu as pltpu


_MXU_DTYPE = jnp.bfloat16     # matmul operand dtype (f32 accumulation everywhere)
_NEG = -1e30                  # additive mask value for cross-series score entries
_REVIN_EPS = 1e-5
_BN_EPS = 1e-5


def _mm(a, b):
    """2-D MXU matmul; operands are already bf16, accumulation is f32."""
    return jnp.dot(a, b, preferred_element_type=jnp.float32)


# ---------------------------------------------------------------------------
# Fused backbone kernel: one grid step == one tile of bn_blk series.
# Row layout inside a tile is patch-major: row = patch * bn_blk + series.
# ---------------------------------------------------------------------------

def _fused_backbone_kernel(
        patch_ref, mean_ref, std_ref, embbias_ref, we_ref,
        wqkv_ref, bqkv_ref, wo3_ref, bo_ref, n1s_ref, n1b_ref,
        w1_ref, b1_ref, w2_ref, b2_ref, n2s_ref, n2b_ref,
        wp3_ref, bp_ref, y_ref,
        *, n_heads, e_layers, n_patches, bn_blk, activation):
    H, E, L, bn = n_heads, e_layers, n_patches, bn_blk
    M = patch_ref.shape[0]                     # = L * bn (patch-major rows)
    D = we_ref.shape[1]
    dh = D // H
    scale = 1.0 / math.sqrt(dh)

    # ---- patch embedding (+ positional encoding / bias folded host-side) --
    h = _mm(patch_ref[...], we_ref[...]) + embbias_ref[...]            # (M, D) f32

    # ---- same-series additive mask, built once in-registers (no HBM I/O) --
    rid = jax.lax.broadcasted_iota(jnp.int32, (M, M), 0)
    cid = jax.lax.broadcasted_iota(jnp.int32, (M, M), 1)
    attn_bias = jnp.where((rid % bn) == (cid % bn), 0.0, _NEG)
    attn_bias = attn_bias.astype(jnp.float32)                          # (M, M)

    prev = None          # residual attention scores; None in layer 0 (no zero init)
    for li in range(E):
        h_bf = h.astype(_MXU_DTYPE)                                    # one cast/layer
        # Fused QKV projection: single lane-dense (M, D) @ (D, 3D) matmul.
        qkv = (_mm(h_bf, wqkv_ref[li]) + bqkv_ref[li]).astype(_MXU_DTYPE)   # (M, 3D)
        # Head-major (H, M, dh) stacks (cheap sub-vreg lane slices, one stack).
        q3 = jnp.stack([qkv[:, hh * dh:(hh + 1) * dh] for hh in range(H)], 0)
        k3 = jnp.stack([qkv[:, D + hh * dh:D + (hh + 1) * dh] for hh in range(H)], 0)
        v3 = jnp.stack([qkv[:, 2 * D + hh * dh:2 * D + (hh + 1) * dh] for hh in range(H)], 0)

        # All heads batched in single einsums (no per-head Python matmul loop).
        s = jnp.einsum('hmd,hnd->hmn', q3, k3,
                       preferred_element_type=jnp.float32) * scale     # (H, M, M)
        if prev is not None:
            s = s + prev                                               # residual scores
        prev = s
        sm = s + attn_bias[None]
        sm = sm - jnp.max(sm, axis=-1, keepdims=True)
        p = jnp.exp(sm)
        p = p * pl.reciprocal(jnp.sum(p, axis=-1, keepdims=True), approx=True)
        o3 = jnp.einsum('hmn,hnd->hmd', p.astype(_MXU_DTYPE), v3,
                        preferred_element_type=jnp.float32)            # (H, M, dh)

        # Output projection batched over heads then summed (replaces lane concat).
        wo3 = wo3_ref[li * H:(li + 1) * H]                             # (H, dh, D)
        attn_out = jnp.sum(
            jnp.einsum('hmd,hdk->hmk', o3.astype(_MXU_DTYPE), wo3,
                       preferred_element_type=jnp.float32), axis=0) + bo_ref[li]

        # Residual + folded BatchNorm1d (eval), then FFN + folded BatchNorm1d.
        h = (h + attn_out) * n1s_ref[li] + n1b_ref[li]
        f = _mm(h.astype(_MXU_DTYPE), w1_ref[li]) + b1_ref[li]
        if activation == 'relu':
            f = jnp.maximum(f, 0.0)
        else:
            # TODO(synk): PyTorch nn.GELU uses exact erf; tanh approx used here.
            f = jax.nn.gelu(f, approximate=True)
        f = _mm(f.astype(_MXU_DTYPE), w2_ref[li]) + b2_ref[li]
        h = (h + f) * n2s_ref[li] + n2b_ref[li]

    # ---- prediction head: (L, bn, D) x (L, D, pred_pad) batched matmul ----
    # (sublane-aligned row slices; pred padded to 128 lanes -> unmasked store)
    h3 = jnp.stack([h[l * bn:(l + 1) * bn, :] for l in range(L)], 0).astype(_MXU_DTYPE)
    y = jnp.sum(jnp.einsum('lbd,ldp->lbp', h3, wp3_ref[...],
                           preferred_element_type=jnp.float32), axis=0) + bp_ref[...]

    # ---- RevIN denormalisation (stats computed in the wrapper) ------------
    y_ref[...] = y * std_ref[...] + mean_ref[...]


# ---------------------------------------------------------------------------
# Host-side one-time parameter preparation (fused / reshaped / bf16 weights)
# ---------------------------------------------------------------------------

def prepare_params(params, cfg):
    D, H, E, L = cfg['d_model'], cfg['n_heads'], cfg['e_layers'], cfg['n_patches']
    pred_len = cfg['pred_len']
    pred_pad = -(-pred_len // 128) * 128
    dh = D // H
    bf = _MXU_DTYPE

    wqkv = jnp.concatenate([params['wq'], params['wk'], params['wv']],
                           axis=-1).astype(bf)                      # (E, D, 3D)
    bqkv = jnp.concatenate([params['bq'], params['bk'], params['bv']],
                           axis=-1)                                 # (E, 1, 3D)
    wo3 = params['wo'].reshape(E, H, dh, D).reshape(E * H, dh, D).astype(bf)

    # Head projection weight: row index = patch * D + d (patch-major flatten).
    # TODO(synk): PyTorch's Flatten_Head flattens d-major; permute imported
    #             PyTorch checkpoints accordingly before using them here.
    wp3 = params['w_proj'].reshape(L, D, pred_len)
    wp3 = jnp.pad(wp3, ((0, 0), (0, 0), (0, pred_pad - pred_len))).astype(bf)
    bp = jnp.pad(params['b_proj'], ((0, 0), (0, pred_pad - pred_len)))

    return dict(
        pred_pad=pred_pad,
        embbias=params['b_embed'] + params['pos'],                  # (L, D) f32
        w_embed=params['w_embed'].astype(bf),
        wqkv=wqkv, bqkv=bqkv, wo3=wo3, bo=params['bo'],
        bn1_scale=params['bn1_scale'], bn1_shift=params['bn1_shift'],
        w1=params['w1'].astype(bf), b1=params['b1'],
        w2=params['w2'].astype(bf), b2=params['b2'],
        bn2_scale=params['bn2_scale'], bn2_shift=params['bn2_shift'],
        wp3=wp3, bp=bp)


# ---------------------------------------------------------------------------
# Wrapper
# ---------------------------------------------------------------------------

def patchtst_backbone_forward(x, prepped, cfg):
    """x: (batch, seq_len, n_vars) -> (batch, pred_len, n_vars)."""
    B, T, V = x.shape
    L, P, S = cfg['n_patches'], cfg['patch_len'], cfg['patch_stride']
    D, H, E = cfg['d_model'], cfg['n_heads'], cfg['e_layers']
    pred_len = cfg['pred_len']
    pred_pad = prepped['pred_pad']
    BN = B * V

    # ---- tile sizing -------------------------------------------------------
    # Waste budget: masked cross-series attention FLOPs grow linearly with
    # bn_blk, so keep bn_blk in [8, 16] and M = bn_blk * L <= ~128.
    bn_cap = max(8, min(16, (128 // max(L, 1)) // 8 * 8))
    bn_blk = min(bn_cap, ((BN + 7) // 8) * 8)
    num_tiles = -(-BN // bn_blk)
    # v7x has 2 TensorCores: keep >= 2 parallel grid steps when the batch allows.
    if num_tiles < 2 and BN > 8:
        bn_blk = max(8, ((-(-BN // 2)) + 7) // 8 * 8)
        num_tiles = -(-BN // bn_blk)
    BN_pad = num_tiles * bn_blk
    M = bn_blk * L

    # ---- RevIN + patching done once in XLA (keeps narrow, unaligned time
    # slices out of the kernel); kernel receives a per-tile patch-major slab.
    xr = jnp.transpose(x, (0, 2, 1)).reshape(BN, T).astype(jnp.float32)
    if BN_pad != BN:
        xr = jnp.concatenate([xr, jnp.zeros((BN_pad - BN, T), jnp.float32)], 0)
    if cfg['revin']:
        mean = jnp.mean(xr, axis=-1, keepdims=True)
        std = jnp.sqrt(jnp.mean((xr - mean) ** 2, axis=-1, keepdims=True)
                       + _REVIN_EPS)
        xn = (xr - mean) / std
    else:
        mean = jnp.zeros((BN_pad, 1), jnp.float32)
        std = jnp.ones((BN_pad, 1), jnp.float32)
        xn = xr
    if cfg['patch_padding'] == 'end':
        xn = jnp.concatenate([xn, jnp.broadcast_to(xn[:, -1:], (BN_pad, S))], -1)
    patches = jnp.stack([xn[:, l * S:l * S + P] for l in range(L)], 0)  # (L, BN_pad, P)
    patches = patches.reshape(L, num_tiles, bn_blk, P).transpose(1, 0, 2, 3)
    patches = patches.reshape(num_tiles * M, P).astype(_MXU_DTYPE)

    # One tile's worth of (pos + embedding bias), patch-major row order.
    embbias = jnp.repeat(prepped['embbias'], bn_blk, axis=0)            # (M, D)

    def whole(arr):
        zeros = (0,) * arr.ndim
        return pl.BlockSpec(arr.shape, lambda i, z=zeros: z)

    # TODO(synk): mark the grid-invariant inputs below pipeline_mode=pl.Buffered(1)
    # once single-buffering is reliable; footprint is already small (bf16 weights,
    # no (M, M) bias input, pos expanded only to one tile).
    in_specs = [
        pl.BlockSpec((M, P), lambda i: (i, 0)),              # patches (per tile)
        pl.BlockSpec((bn_blk, 1), lambda i: (i, 0)),         # RevIN mean
        pl.BlockSpec((bn_blk, 1), lambda i: (i, 0)),         # RevIN std
        whole(embbias), whole(prepped['w_embed']),
        whole(prepped['wqkv']), whole(prepped['bqkv']),
        whole(prepped['wo3']), whole(prepped['bo']),
        whole(prepped['bn1_scale']), whole(prepped['bn1_shift']),
        whole(prepped['w1']), whole(prepped['b1']),
        whole(prepped['w2']), whole(prepped['b2']),
        whole(prepped['bn2_scale']), whole(prepped['bn2_shift']),
        whole(prepped['wp3']), whole(prepped['bp']),
    ]
    out_specs = pl.BlockSpec((bn_blk, pred_pad), lambda i: (i, 0))

    kernel = functools.partial(
        _fused_backbone_kernel, n_heads=H, e_layers=E, n_patches=L,
        bn_blk=bn_blk, activation=cfg['activation'])

    # Per-generation VMEM limit: ~3/4 of physical VMEM, capped at 100 MiB
    # (128 MiB on v5e/v6e -> 96 MiB, 64 MiB on v7x -> 48 MiB).
    try:
        vmem_cap = int(pltpu.get_tpu_info().vmem_capacity_bytes)
    except Exception:
        vmem_cap = 64 * 1024 * 1024
    vmem_limit = min(100 * 1024 * 1024,
                     max(32 * 1024 * 1024, (vmem_cap * 3) // 4))

    y = pl.pallas_call(
        kernel,
        grid=(num_tiles,),
        in_specs=in_specs,
        out_specs=out_specs,
        out_shape=jax.ShapeDtypeStruct((BN_pad, pred_pad), jnp.float32),
        compiler_params=pltpu.CompilerParams(
            dimension_semantics=("parallel",),
            vmem_limit_bytes=int(vmem_limit)),
    )(patches, mean, std, embbias, prepped['w_embed'],
      prepped['wqkv'], prepped['bqkv'], prepped['wo3'], prepped['bo'],
      prepped['bn1_scale'], prepped['bn1_shift'],
      prepped['w1'], prepped['b1'], prepped['w2'], prepped['b2'],
      prepped['bn2_scale'], prepped['bn2_shift'],
      prepped['wp3'], prepped['bp'])

    y = y[:BN, :pred_len].reshape(B, V, pred_len)
    return jnp.transpose(y, (0, 2, 1))                       # (B, pred_len, V)


# ---------------------------------------------------------------------------
# Deterministic parameter initialisation (matches module __init__ shapes)
# ---------------------------------------------------------------------------

def _linear_init(key, fan_in, fan_out):
    kw, kb = jax.random.split(key)
    bound = 1.0 / math.sqrt(fan_in)
    w = jax.random.uniform(kw, (fan_in, fan_out), jnp.float32, -bound, bound)
    b = jax.random.uniform(kb, (1, fan_out), jnp.float32, -bound, bound)
    return w, b


def init_params(key, cfg):
    D, F = cfg['d_model'], cfg['d_ff']
    L, P, E = cfg['n_patches'], cfg['patch_len'], cfg['e_layers']
    keys = jax.random.split(key, 3 + E)
    w_embed, b_embed = _linear_init(keys[0], P, D)
    pos = 0.02 * jax.random.normal(keys[1], (L, D), jnp.float32)
    w_proj, b_proj = _linear_init(keys[2], L * D, cfg['pred_len'])

    layer_ws = []
    for i in range(E):
        ks = jax.random.split(keys[3 + i], 6)
        wq, bq = _linear_init(ks[0], D, D)
        wk, bk = _linear_init(ks[1], D, D)
        wv, bv = _linear_init(ks[2], D, D)
        wo, bo = _linear_init(ks[3], D, D)
        w1, b1 = _linear_init(ks[4], D, F)
        w2, b2 = _linear_init(ks[5], F, D)
        layer_ws.append(dict(wq=wq, bq=bq, wk=wk, bk=bk, wv=wv, bv=bv,
                             wo=wo, bo=bo, w1=w1, b1=b1, w2=w2, b2=b2))
    stacked = {k: jnp.stack([lw[k] for lw in layer_ws], axis=0)
               for k in layer_ws[0]}                       # leading dim = E

    # BatchNorm1d(d_model), fresh running stats, eval mode -> scale/shift.
    scale = jnp.ones((1, D), jnp.float32) / jnp.sqrt(1.0 + _BN_EPS)
    shift = jnp.zeros((1, D), jnp.float32)
    bn_scale = jnp.stack([scale] * E, axis=0)              # (E, 1, D)
    bn_shift = jnp.stack([shift] * E, axis=0)

    return dict(w_embed=w_embed, b_embed=b_embed, pos=pos,
                w_proj=w_proj, b_proj=b_proj,
                bn1_scale=bn_scale, bn1_shift=bn_shift,
                bn2_scale=bn_scale, bn2_shift=bn_shift,
                **stacked)


# ---------------------------------------------------------------------------
# Driver
# ---------------------------------------------------------------------------

if __name__ == "__main__":
    cfg = dict(seq_len=16, n_vars=4, patch_len=8, patch_stride=8,
               patch_padding='end', d_model=32, n_heads=4, d_ff=64,
               e_layers=2, activation='relu', dropout=0.0,
               pred_len=8, shared_proj=True, revin=True)
    n_patches = (cfg['seq_len'] - cfg['patch_len']) // cfg['patch_stride'] + 1
    n_patches += int(cfg['patch_padding'] == 'end')
    cfg['n_patches'] = n_patches                           # = 3

    key = jax.random.PRNGKey(0)
    kx, kp = jax.random.split(key)
    x = jax.random.normal(kx, (2, cfg['seq_len'], cfg['n_vars']), jnp.float32)
    params = init_params(kp, cfg)
    prepped = prepare_params(params, cfg)

    out = jax.block_until_ready(patchtst_backbone_forward(x, prepped, cfg))

    assert out.shape == (2, cfg['pred_len'], cfg['n_vars']), out.shape
    assert bool(jnp.all(jnp.isfinite(out)))
    print("KERNEL_OK")
</pallas_src>

<mosaic_0001>
module attributes {stable_mosaic.version = 11 : i64} {
  func.func @_fused_backbone_kernel(%arg0: i32, %arg1: memref<24x8xbf16, #tpu.memory_space<vmem>>, %arg2: memref<8x1xf32, #tpu.memory_space<vmem>>, %arg3: memref<8x1xf32, #tpu.memory_space<vmem>>, %arg4: memref<24x32xf32, #tpu.memory_space<vmem>>, %arg5: memref<8x32xbf16, #tpu.memory_space<vmem>>, %arg6: memref<2x32x96xbf16, #tpu.memory_space<vmem>>, %arg7: memref<2x1x96xf32, #tpu.memory_space<vmem>>, %arg8: memref<8x8x32xbf16, #tpu.memory_space<vmem>>, %arg9: memref<2x1x32xf32, #tpu.memory_space<vmem>>, %arg10: memref<2x1x32xf32, #tpu.memory_space<vmem>>, %arg11: memref<2x1x32xf32, #tpu.memory_space<vmem>>, %arg12: memref<2x32x64xbf16, #tpu.memory_space<vmem>>, %arg13: memref<2x1x64xf32, #tpu.memory_space<vmem>>, %arg14: memref<2x64x32xbf16, #tpu.memory_space<vmem>>, %arg15: memref<2x1x32xf32, #tpu.memory_space<vmem>>, %arg16: memref<2x1x32xf32, #tpu.memory_space<vmem>>, %arg17: memref<2x1x32xf32, #tpu.memory_space<vmem>>, %arg18: memref<3x32x128xbf16, #tpu.memory_space<vmem>>, %arg19: memref<1x128xf32, #tpu.memory_space<vmem>>, %arg20: memref<8x128xf32, #tpu.memory_space<vmem>>) attributes {dimension_semantics = [#tpu.dimension_semantics<parallel>], iteration_bounds = array<i64: 1>, scalar_prefetch = 0 : i64, scratch_operands = 0 : i64, tpu.core_type = #tpu.core_type<tc>, window_params = [{transform_indices = @transform_0, window_bounds = array<i64: 24, 8>}, {transform_indices = @transform_1, window_bounds = array<i64: 8, 1>}, {transform_indices = @transform_2, window_bounds = array<i64: 8, 1>}, {pipeline_mode = #tpu.pipeline_mode<synchronous>, transform_indices = @transform_3, window_bounds = array<i64: 24, 32>}, {pipeline_mode = #tpu.pipeline_mode<synchronous>, transform_indices = @transform_4, window_bounds = array<i64: 8, 32>}, {pipeline_mode = #tpu.pipeline_mode<synchronous>, transform_indices = @transform_5, window_bounds = array<i64: 2, 32, 96>}, {pipeline_mode = #tpu.pipeline_mode<synchronous>, transform_indices = @transform_6, window_bounds = array<i64: 2, 1, 96>}, {pipeline_mode = #tpu.pipeline_mode<synchronous>, transform_indices = @transform_7, window_bounds = array<i64: 8, 8, 32>}, {pipeline_mode = #tpu.pipeline_mode<synchronous>, transform_indices = @transform_8, window_bounds = array<i64: 2, 1, 32>}, {pipeline_mode = #tpu.pipeline_mode<synchronous>, transform_indices = @transform_9, window_bounds = array<i64: 2, 1, 32>}, {pipeline_mode = #tpu.pipeline_mode<synchronous>, transform_indices = @transform_10, window_bounds = array<i64: 2, 1, 32>}, {pipeline_mode = #tpu.pipeline_mode<synchronous>, transform_indices = @transform_11, window_bounds = array<i64: 2, 32, 64>}, {pipeline_mode = #tpu.pipeline_mode<synchronous>, transform_indices = @transform_12, window_bounds = array<i64: 2, 1, 64>}, {pipeline_mode = #tpu.pipeline_mode<synchronous>, transform_indices = @transform_13, window_bounds = array<i64: 2, 64, 32>}, {pipeline_mode = #tpu.pipeline_mode<synchronous>, transform_indices = @transform_14, window_bounds = array<i64: 2, 1, 32>}, {pipeline_mode = #tpu.pipeline_mode<synchronous>, transform_indices = @transform_15, window_bounds = array<i64: 2, 1, 32>}, {pipeline_mode = #tpu.pipeline_mode<synchronous>, transform_indices = @transform_16, window_bounds = array<i64: 2, 1, 32>}, {pipeline_mode = #tpu.pipeline_mode<synchronous>, transform_indices = @transform_17, window_bounds = array<i64: 3, 32, 128>}, {pipeline_mode = #tpu.pipeline_mode<synchronous>, transform_indices = @transform_18, window_bounds = array<i64: 1, 128>}, {transform_indices = @transform_19, window_bounds = array<i64: 8, 128>}]} {
    %c0 = arith.constant 0 : index
    %c0_0 = arith.constant 0 : index
    %0 = vector.load %arg1[%c0, %c0_0] : memref<24x8xbf16, #tpu.memory_space<vmem>>, vector<24x8xbf16>
    %c0_1 = arith.constant 0 : index
    %c0_2 = arith.constant 0 : index
    %1 = vector.load %arg5[%c0_1, %c0_2] : memref<8x32xbf16, #tpu.memory_space<vmem>>, vector<8x32xbf16>
    %cst = arith.constant dense<0.000000e+00> : vector<24x32xf32>
    %2 = tpu.matmul %0, %1, %cst {dimension_numbers = #tpu.dot_dimension_numbers<[1], [0], [0], [1], [0, 0, 1, 1], [], []>} : vector<24x8xbf16>, vector<8x32xbf16>, vector<24x32xf32> -> vector<24x32xf32>
    %c0_3 = arith.constant 0 : index
    %c0_4 = arith.constant 0 : index
    %3 = vector.load %arg4[%c0_3, %c0_4] : memref<24x32xf32, #tpu.memory_space<vmem>>, vector<24x32xf32>
    %4 = arith.addf %2, %3 : vector<24x32xf32>
    %5 = tpu.iota {dimensions = array<i32: 0>} : vector<24x24xi32>
    %6 = tpu.iota {dimensions = array<i32: 1>} : vector<24x24xi32>
    %c8_i32 = arith.constant 8 : i32
    %c0_i32 = arith.constant 0 : i32
    %7 = arith.cmpi eq, %c8_i32, %c0_i32 : i32
    %c1_i32 = arith.constant 1 : i32
    %8 = arith.select %7, %c1_i32, %c8_i32 : i32
    %9 = vector.broadcast %8 : i32 to vector<24x24xi32>
    %10 = arith.remsi %5, %9 : vector<24x24xi32>
    %c0_i32_5 = arith.constant 0 : i32
    %11 = vector.broadcast %c0_i32_5 : i32 to vector<24x24xi32>
    %12 = arith.cmpi ne, %10, %11 : vector<24x24xi32>
    %c0_i32_6 = arith.constant 0 : i32
    %13 = vector.broadcast %c0_i32_6 : i32 to vector<24x24xi32>
    %14 = arith.cmpi slt, %10, %13 : vector<24x24xi32>
    %c0_i32_7 = arith.constant 0 : i32
    %15 = arith.cmpi slt, %8, %c0_i32_7 : i32
    %16 = vector.broadcast %15 : i1 to vector<24x24xi1>
    %17 = vector.broadcast %16 : vector<24x24xi1> to vector<24x24xi1>
    %18 = arith.xori %14, %17 : vector<24x24xi1>
    %19 = arith.andi %18, %12 : vector<24x24xi1>
    %20 = vector.broadcast %8 : i32 to vector<24x24xi32>
    %21 = arith.addi %10, %20 : vector<24x24xi32>
    %22 = arith.select %19, %21, %10 : vector<24x24xi1>, vector<24x24xi32>
    %c8_i32_8 = arith.constant 8 : i32
    %c0_i32_9 = arith.constant 0 : i32
    %23 = arith.cmpi eq, %c8_i32_8, %c0_i32_9 : i32
    %c1_i32_10 = arith.constant 1 : i32
    %24 = arith.select %23, %c1_i32_10, %c8_i32_8 : i32
    %25 = vector.broadcast %24 : i32 to vector<24x24xi32>
    %26 = arith.remsi %6, %25 : vector<24x24xi32>
    %c0_i32_11 = arith.constant 0 : i32
    %27 = vector.broadcast %c0_i32_11 : i32 to vector<24x24xi32>
    %28 = arith.cmpi ne, %26, %27 : vector<24x24xi32>
    %c0_i32_12 = arith.constant 0 : i32
    %29 = vector.broadcast %c0_i32_12 : i32 to vector<24x24xi32>
    %30 = arith.cmpi slt, %26, %29 : vector<24x24xi32>
    %c0_i32_13 = arith.constant 0 : i32
    %31 = arith.cmpi slt, %24, %c0_i32_13 : i32
    %32 = vector.broadcast %31 : i1 to vector<24x24xi1>
    %33 = vector.broadcast %32 : vector<24x24xi1> to vector<24x24xi1>
    %34 = arith.xori %30, %33 : vector<24x24xi1>
    %35 = arith.andi %34, %28 : vector<24x24xi1>
    %36 = vector.broadcast %24 : i32 to vector<24x24xi32>
    %37 = arith.addi %26, %36 : vector<24x24xi32>
    %38 = arith.select %35, %37, %26 : vector<24x24xi1>, vector<24x24xi32>
    %39 = arith.cmpi eq, %22, %38 : vector<24x24xi32>
    %cst_14 = arith.constant 0.000000e+00 : f32
    %cst_15 = arith.constant -1.000000e+30 : f32
    %40 = vector.broadcast %cst_14 : f32 to vector<24x24xf32>
    %41 = vector.broadcast %cst_15 : f32 to vector<24x24xf32>
    %42 = arith.select %39, %40, %41 : vector<24x24xi1>, vector<24x24xf32>
    %43 = arith.truncf %4 : vector<24x32xf32> to vector<24x32xbf16>
    %c0_16 = arith.constant 0 : index
    %c0_17 = arith.constant 0 : index
    %c0_18 = arith.constant 0 : index
    %44 = vector.load %arg6[%c0_16, %c0_17, %c0_18] : memref<2x32x96xbf16, #tpu.memory_space<vmem>>, vector<1x32x96xbf16>
    %45 = vector.shape_cast %44 : vector<1x32x96xbf16> to vector<32x96xbf16>
    %cst_19 = arith.constant dense<0.000000e+00> : vector<24x96xf32>
    %46 = tpu.matmul %43, %45, %cst_19 {dimension_numbers = #tpu.dot_dimension_numbers<[1], [0], [0], [1], [0, 0, 1, 1], [], []>} : vector<24x32xbf16>, vector<32x96xbf16>, vector<24x96xf32> -> vector<24x96xf32>
    %c0_20 = arith.constant 0 : index
    %c0_21 = arith.constant 0 : index
    %c0_22 = arith.constant 0 : index
    %47 = vector.load %arg7[%c0_20, %c0_21, %c0_22] : memref<2x1x96xf32, #tpu.memory_space<vmem>>, vector<1x1x96xf32>
    %48 = vector.shape_cast %47 : vector<1x1x96xf32> to vector<1x96xf32>
    %49 = vector.broadcast %48 : vector<1x96xf32> to vector<24x96xf32>
    %50 = arith.addf %46, %49 : vector<24x96xf32>
    %51 = arith.truncf %50 : vector<24x96xf32> to vector<24x96xbf16>
    %52 = vector.extract_strided_slice %51 {offsets = [0, 0], sizes = [24, 8], strides = [1, 1]} : vector<24x96xbf16> to vector<24x8xbf16>
    %53 = vector.extract_strided_slice %51 {offsets = [0, 8], sizes = [24, 8], strides = [1, 1]} : vector<24x96xbf16> to vector<24x8xbf16>
    %54 = vector.extract_strided_slice %51 {offsets = [0, 16], sizes = [24, 8], strides = [1, 1]} : vector<24x96xbf16> to vector<24x8xbf16>
    %55 = vector.extract_strided_slice %51 {offsets = [0, 24], sizes = [24, 8], strides = [1, 1]} : vector<24x96xbf16> to vector<24x8xbf16>
    %56 = vector.shape_cast %52 : vector<24x8xbf16> to vector<1x24x8xbf16>
    %57 = vector.shape_cast %53 : vector<24x8xbf16> to vector<1x24x8xbf16>
    %58 = vector.shape_cast %54 : vector<24x8xbf16> to vector<1x24x8xbf16>
    %59 = vector.shape_cast %55 : vector<24x8xbf16> to vector<1x24x8xbf16>
    %60 = tpu.concatenate %56, %57, %58, %59 in 0 : vector<1x24x8xbf16>, vector<1x24x8xbf16>, vector<1x24x8xbf16>, vector<1x24x8xbf16> -> vector<4x24x8xbf16>
    %61 = vector.extract_strided_slice %51 {offsets = [0, 32], sizes = [24, 8], strides = [1, 1]} : vector<24x96xbf16> to vector<24x8xbf16>
    %62 = vector.extract_strided_slice %51 {offsets = [0, 40], sizes = [24, 8], strides = [1, 1]} : vector<24x96xbf16> to vector<24x8xbf16>
    %63 = vector.extract_strided_slice %51 {offsets = [0, 48], sizes = [24, 8], strides = [1, 1]} : vector<24x96xbf16> to vector<24x8xbf16>
    %64 = vector.extract_strided_slice %51 {offsets = [0, 56], sizes = [24, 8], strides = [1, 1]} : vector<24x96xbf16> to vector<24x8xbf16>
    %65 = vector.shape_cast %61 : vector<24x8xbf16> to vector<1x24x8xbf16>
    %66 = vector.shape_cast %62 : vector<24x8xbf16> to vector<1x24x8xbf16>
    %67 = vector.shape_cast %63 : vector<24x8xbf16> to vector<1x24x8xbf16>
    %68 = vector.shape_cast %64 : vector<24x8xbf16> to vector<1x24x8xbf16>
    %69 = tpu.concatenate %65, %66, %67, %68 in 0 : vector<1x24x8xbf16>, vector<1x24x8xbf16>, vector<1x24x8xbf16>, vector<1x24x8xbf16> -> vector<4x24x8xbf16>
    %70 = vector.extract_strided_slice %51 {offsets = [0, 64], sizes = [24, 8], strides = [1, 1]} : vector<24x96xbf16> to vector<24x8xbf16>
    %71 = vector.extract_strided_slice %51 {offsets = [0, 72], sizes = [24, 8], strides = [1, 1]} : vector<24x96xbf16> to vector<24x8xbf16>
    %72 = vector.extract_strided_slice %51 {offsets = [0, 80], sizes = [24, 8], strides = [1, 1]} : vector<24x96xbf16> to vector<24x8xbf16>
    %73 = vector.extract_strided_slice %51 {offsets = [0, 88], sizes = [24, 8], strides = [1, 1]} : vector<24x96xbf16> to vector<24x8xbf16>
    %74 = vector.shape_cast %70 : vector<24x8xbf16> to vector<1x24x8xbf16>
    %75 = vector.shape_cast %71 : vector<24x8xbf16> to vector<1x24x8xbf16>
    %76 = vector.shape_cast %72 : vector<24x8xbf16> to vector<1x24x8xbf16>
    %77 = vector.shape_cast %73 : vector<24x8xbf16> to vector<1x24x8xbf16>
    %78 = tpu.concatenate %74, %75, %76, %77 in 0 : vector<1x24x8xbf16>, vector<1x24x8xbf16>, vector<1x24x8xbf16>, vector<1x24x8xbf16> -> vector<4x24x8xbf16>
    "tpu.trace_start"() <{level = 10 : i32, message = "hmd,hnd->hmn"}> : () -> ()
    %cst_23 = arith.constant dense<0.000000e+00> : vector<4x24x24xf32>
    %79 = tpu.matmul %60, %69, %cst_23 {dimension_numbers = #tpu.dot_dimension_numbers<[2], [2], [1], [1], [0, 0, 0, 1, 1, 1], [0], [0]>} : vector<4x24x8xbf16>, vector<4x24x8xbf16>, vector<4x24x24xf32> -> vector<4x24x24xf32>
    "tpu.trace_stop"() : () -> ()
    %cst_24 = arith.constant 0.353553385 : f32
    %80 = vector.broadcast %cst_24 : f32 to vector<4x24x24xf32>
    %81 = arith.mulf %79, %80 : vector<4x24x24xf32>
    %82 = vector.shape_cast %42 : vector<24x24xf32> to vector<1x24x24xf32>
    %83 = vector.broadcast %82 : vector<1x24x24xf32> to vector<4x24x24xf32>
    %84 = arith.addf %81, %83 : vector<4x24x24xf32>
    %cst_25 = arith.constant dense<0xFF800000> : vector<4x24xf32>
    %85 = vector.multi_reduction <maximumf>, %84, %cst_25 [2] : vector<4x24x24xf32> to vector<4x24xf32>
    %86 = vector.shape_cast %85 : vector<4x24xf32> to vector<4x24x1xf32>
    %87 = vector.broadcast %86 : vector<4x24x1xf32> to vector<4x24x24xf32>
    %88 = arith.subf %84, %87 : vector<4x24x24xf32>
    %89 = math.exp %88 : vector<4x24x24xf32>
    %cst_26 = arith.constant dense<0.000000e+00> : vector<4x24xf32>
    %90 = vector.multi_reduction <add>, %89, %cst_26 [2] : vector<4x24x24xf32> to vector<4x24xf32>
    %91 = vector.shape_cast %90 : vector<4x24xf32> to vector<4x24x1xf32>
    %92 = tpu.reciprocal %91 {approx = true} : vector<4x24x1xf32> -> vector<4x24x1xf32>
    %93 = vector.broadcast %92 : vector<4x24x1xf32> to vector<4x24x24xf32>
    %94 = arith.mulf %89, %93 : vector<4x24x24xf32>
    %95 = arith.truncf %94 : vector<4x24x24xf32> to vector<4x24x24xbf16>
    "tpu.trace_start"() <{level = 10 : i32, message = "hmn,hnd->hmd"}> : () -> ()
    %cst_27 = arith.constant dense<0.000000e+00> : vector<4x24x8xf32>
    %96 = tpu.matmul %95, %78, %cst_27 {dimension_numbers = #tpu.dot_dimension_numbers<[2], [1], [1], [2], [0, 0, 0, 1, 1, 2], [0], [0]>} : vector<4x24x24xbf16>, vector<4x24x8xbf16>, vector<4x24x8xf32> -> vector<4x24x8xf32>
    "tpu.trace_stop"() : () -> ()
    %c0_28 = arith.constant 0 : index
    %c0_29 = arith.constant 0 : index
    %c0_30 = arith.constant 0 : index
    %97 = vector.load %arg8[%c0_28, %c0_29, %c0_30] : memref<8x8x32xbf16, #tpu.memory_space<vmem>>, vector<4x8x32xbf16>
    %98 = arith.truncf %96 : vector<4x24x8xf32> to vector<4x24x8xbf16>
    "tpu.trace_start"() <{level = 10 : i32, message = "hmd,hdk->hmk"}> : () -> ()
    %cst_31 = arith.constant dense<0.000000e+00> : vector<4x24x32xf32>
    %99 = tpu.matmul %98, %97, %cst_31 {dimension_numbers = #tpu.dot_dimension_numbers<[2], [1], [1], [2], [0, 0, 0, 1, 1, 2], [0], [0]>} : vector<4x24x8xbf16>, vector<4x8x32xbf16>, vector<4x24x32xf32> -> vector<4x24x32xf32>
    "tpu.trace_stop"() : () -> ()
    %cst_32 = arith.constant dense<0.000000e+00> : vector<24x32xf32>
    %100 = vector.multi_reduction <add>, %99, %cst_32 [0] : vector<4x24x32xf32> to vector<24x32xf32>
    %c0_33 = arith.constant 0 : index
    %c0_34 = arith.constant 0 : index
    %c0_35 = arith.constant 0 : index
    %101 = vector.load %arg9[%c0_33, %c0_34, %c0_35] : memref<2x1x32xf32, #tpu.memory_space<vmem>>, vector<1x1x32xf32>
    %102 = vector.shape_cast %101 : vector<1x1x32xf32> to vector<1x32xf32>
    %103 = vector.broadcast %102 : vector<1x32xf32> to vector<24x32xf32>
    %104 = arith.addf %100, %103 : vector<24x32xf32>
    %105 = arith.addf %4, %104 : vector<24x32xf32>
    %c0_36 = arith.constant 0 : index
    %c0_37 = arith.constant 0 : index
    %c0_38 = arith.constant 0 : index
    %106 = vector.load %arg10[%c0_36, %c0_37, %c0_38] : memref<2x1x32xf32, #tpu.memory_space<vmem>>, vector<1x1x32xf32>
    %107 = vector.shape_cast %106 : vector<1x1x32xf32> to vector<1x32xf32>
    %108 = vector.broadcast %107 : vector<1x32xf32> to vector<24x32xf32>
    %109 = arith.mulf %105, %108 : vector<24x32xf32>
    %c0_39 = arith.constant 0 : index
    %c0_40 = arith.constant 0 : index
    %c0_41 = arith.constant 0 : index
    %110 = vector.load %arg11[%c0_39, %c0_40, %c0_41] : memref<2x1x32xf32, #tpu.memory_space<vmem>>, vector<1x1x32xf32>
    %111 = vector.shape_cast %110 : vector<1x1x32xf32> to vector<1x32xf32>
    %112 = vector.broadcast %111 : vector<1x32xf32> to vector<24x32xf32>
    %113 = arith.addf %109, %112 : vector<24x32xf32>
    %114 = arith.truncf %113 : vector<24x32xf32> to vector<24x32xbf16>
    %c0_42 = arith.constant 0 : index
    %c0_43 = arith.constant 0 : index
    %c0_44 = arith.constant 0 : index
    %115 = vector.load %arg12[%c0_42, %c0_43, %c0_44] : memref<2x32x64xbf16, #tpu.memory_space<vmem>>, vector<1x32x64xbf16>
    %116 = vector.shape_cast %115 : vector<1x32x64xbf16> to vector<32x64xbf16>
    %cst_45 = arith.constant dense<0.000000e+00> : vector<24x64xf32>
    %117 = tpu.matmul %114, %116, %cst_45 {dimension_numbers = #tpu.dot_dimension_numbers<[1], [0], [0], [1], [0, 0, 1, 1], [], []>} : vector<24x32xbf16>, vector<32x64xbf16>, vector<24x64xf32> -> vector<24x64xf32>
    %c0_46 = arith.constant 0 : index
    %c0_47 = arith.constant 0 : index
    %c0_48 = arith.constant 0 : index
    %118 = vector.load %arg13[%c0_46, %c0_47, %c0_48] : memref<2x1x64xf32, #tpu.memory_space<vmem>>, vector<1x1x64xf32>
    %119 = vector.shape_cast %118 : vector<1x1x64xf32> to vector<1x64xf32>
    %120 = vector.broadcast %119 : vector<1x64xf32> to vector<24x64xf32>
    %121 = arith.addf %117, %120 : vector<24x64xf32>
    %cst_49 = arith.constant 0.000000e+00 : f32
    %122 = vector.broadcast %cst_49 : f32 to vector<24x64xf32>
    %123 = arith.maximumf %121, %122 : vector<24x64xf32>
    %124 = arith.truncf %123 : vector<24x64xf32> to vector<24x64xbf16>
    %c0_50 = arith.constant 0 : index
    %c0_51 = arith.constant 0 : index
    %c0_52 = arith.constant 0 : index
    %125 = vector.load %arg14[%c0_50, %c0_51, %c0_52] : memref<2x64x32xbf16, #tpu.memory_space<vmem>>, vector<1x64x32xbf16>
    %126 = vector.shape_cast %125 : vector<1x64x32xbf16> to vector<64x32xbf16>
    %cst_53 = arith.constant dense<0.000000e+00> : vector<24x32xf32>
    %127 = tpu.matmul %124, %126, %cst_53 {dimension_numbers = #tpu.dot_dimension_numbers<[1], [0], [0], [1], [0, 0, 1, 1], [], []>} : vector<24x64xbf16>, vector<64x32xbf16>, vector<24x32xf32> -> vector<24x32xf32>
    %c0_54 = arith.constant 0 : index
    %c0_55 = arith.constant 0 : index
    %c0_56 = arith.constant 0 : index
    %128 = vector.load %arg15[%c0_54, %c0_55, %c0_56] : memref<2x1x32xf32, #tpu.memory_space<vmem>>, vector<1x1x32xf32>
    %129 = vector.shape_cast %128 : vector<1x1x32xf32> to vector<1x32xf32>
    %130 = vector.broadcast %129 : vector<1x32xf32> to vector<24x32xf32>
    %131 = arith.addf %127, %130 : vector<24x32xf32>
    %132 = arith.addf %113, %131 : vector<24x32xf32>
    %c0_57 = arith.constant 0 : index
    %c0_58 = arith.constant 0 : index
    %c0_59 = arith.constant 0 : index
    %133 = vector.load %arg16[%c0_57, %c0_58, %c0_59] : memref<2x1x32xf32, #tpu.memory_space<vmem>>, vector<1x1x32xf32>
    %134 = vector.shape_cast %133 : vector<1x1x32xf32> to vector<1x32xf32>
    %135 = vector.broadcast %134 : vector<1x32xf32> to vector<24x32xf32>
    %136 = arith.mulf %132, %135 : vector<24x32xf32>
    %c0_60 = arith.constant 0 : index
    %c0_61 = arith.constant 0 : index
    %c0_62 = arith.constant 0 : index
    %137 = vector.load %arg17[%c0_60, %c0_61, %c0_62] : memref<2x1x32xf32, #tpu.memory_space<vmem>>, vector<1x1x32xf32>
    %138 = vector.shape_cast %137 : vector<1x1x32xf32> to vector<1x32xf32>
    %139 = vector.broadcast %138 : vector<1x32xf32> to vector<24x32xf32>
    %140 = arith.addf %136, %139 : vector<24x32xf32>
    %141 = arith.truncf %140 : vector<24x32xf32> to vector<24x32xbf16>
    %c1 = arith.constant 1 : index
    %c0_63 = arith.constant 0 : index
    %c0_64 = arith.constant 0 : index
    %142 = vector.load %arg6[%c1, %c0_63, %c0_64] : memref<2x32x96xbf16, #tpu.memory_space<vmem>>, vector<1x32x96xbf16>
    %143 = vector.shape_cast %142 : vector<1x32x96xbf16> to vector<32x96xbf16>
    %cst_65 = arith.constant dense<0.000000e+00> : vector<24x96xf32>
    %144 = tpu.matmul %141, %143, %cst_65 {dimension_numbers = #tpu.dot_dimension_numbers<[1], [0], [0], [1], [0, 0, 1, 1], [], []>} : vector<24x32xbf16>, vector<32x96xbf16>, vector<24x96xf32> -> vector<24x96xf32>
    %c1_66 = arith.constant 1 : index
    %c0_67 = arith.constant 0 : index
    %c0_68 = arith.constant 0 : index
    %145 = vector.load %arg7[%c1_66, %c0_67, %c0_68] : memref<2x1x96xf32, #tpu.memory_space<vmem>>, vector<1x1x96xf32>
    %146 = vector.shape_cast %145 : vector<1x1x96xf32> to vector<1x96xf32>
    %147 = vector.broadcast %146 : vector<1x96xf32> to vector<24x96xf32>
    %148 = arith.addf %144, %147 : vector<24x96xf32>
    %149 = arith.truncf %148 : vector<24x96xf32> to vector<24x96xbf16>
    %150 = vector.extract_strided_slice %149 {offsets = [0, 0], sizes = [24, 8], strides = [1, 1]} : vector<24x96xbf16> to vector<24x8xbf16>
    %151 = vector.extract_strided_slice %149 {offsets = [0, 8], sizes = [24, 8], strides = [1, 1]} : vector<24x96xbf16> to vector<24x8xbf16>
    %152 = vector.extract_strided_slice %149 {offsets = [0, 16], sizes = [24, 8], strides = [1, 1]} : vector<24x96xbf16> to vector<24x8xbf16>
    %153 = vector.extract_strided_slice %149 {offsets = [0, 24], sizes = [24, 8], strides = [1, 1]} : vector<24x96xbf16> to vector<24x8xbf16>
    %154 = vector.shape_cast %150 : vector<24x8xbf16> to vector<1x24x8xbf16>
    %155 = vector.shape_cast %151 : vector<24x8xbf16> to vector<1x24x8xbf16>
    %156 = vector.shape_cast %152 : vector<24x8xbf16> to vector<1x24x8xbf16>
    %157 = vector.shape_cast %153 : vector<24x8xbf16> to vector<1x24x8xbf16>
    %158 = tpu.concatenate %154, %155, %156, %157 in 0 : vector<1x24x8xbf16>, vector<1x24x8xbf16>, vector<1x24x8xbf16>, vector<1x24x8xbf16> -> vector<4x24x8xbf16>
    %159 = vector.extract_strided_slice %149 {offsets = [0, 32], sizes = [24, 8], strides = [1, 1]} : vector<24x96xbf16> to vector<24x8xbf16>
    %160 = vector.extract_strided_slice %149 {offsets = [0, 40], sizes = [24, 8], strides = [1, 1]} : vector<24x96xbf16> to vector<24x8xbf16>
    %161 = vector.extract_strided_slice %149 {offsets = [0, 48], sizes = [24, 8], strides = [1, 1]} : vector<24x96xbf16> to vector<24x8xbf16>
    %162 = vector.extract_strided_slice %149 {offsets = [0, 56], sizes = [24, 8], strides = [1, 1]} : vector<24x96xbf16> to vector<24x8xbf16>
    %163 = vector.shape_cast %159 : vector<24x8xbf16> to vector<1x24x8xbf16>
    %164 = vector.shape_cast %160 : vector<24x8xbf16> to vector<1x24x8xbf16>
    %165 = vector.shape_cast %161 : vector<24x8xbf16> to vector<1x24x8xbf16>
    %166 = vector.shape_cast %162 : vector<24x8xbf16> to vector<1x24x8xbf16>
    %167 = tpu.concatenate %163, %164, %165, %166 in 0 : vector<1x24x8xbf16>, vector<1x24x8xbf16>, vector<1x24x8xbf16>, vector<1x24x8xbf16> -> vector<4x24x8xbf16>
    %168 = vector.extract_strided_slice %149 {offsets = [0, 64], sizes = [24, 8], strides = [1, 1]} : vector<24x96xbf16> to vector<24x8xbf16>
    %169 = vector.extract_strided_slice %149 {offsets = [0, 72], sizes = [24, 8], strides = [1, 1]} : vector<24x96xbf16> to vector<24x8xbf16>
    %170 = vector.extract_strided_slice %149 {offsets = [0, 80], sizes = [24, 8], strides = [1, 1]} : vector<24x96xbf16> to vector<24x8xbf16>
    %171 = vector.extract_strided_slice %149 {offsets = [0, 88], sizes = [24, 8], strides = [1, 1]} : vector<24x96xbf16> to vector<24x8xbf16>
    %172 = vector.shape_cast %168 : vector<24x8xbf16> to vector<1x24x8xbf16>
    %173 = vector.shape_cast %169 : vector<24x8xbf16> to vector<1x24x8xbf16>
    %174 = vector.shape_cast %170 : vector<24x8xbf16> to vector<1x24x8xbf16>
    %175 = vector.shape_cast %171 : vector<24x8xbf16> to vector<1x24x8xbf16>
    %176 = tpu.concatenate %172, %173, %174, %175 in 0 : vector<1x24x8xbf16>, vector<1x24x8xbf16>, vector<1x24x8xbf16>, vector<1x24x8xbf16> -> vector<4x24x8xbf16>
    "tpu.trace_start"() <{level = 10 : i32, message = "hmd,hnd->hmn"}> : () -> ()
    %cst_69 = arith.constant dense<0.000000e+00> : vector<4x24x24xf32>
    %177 = tpu.matmul %158, %167, %cst_69 {dimension_numbers = #tpu.dot_dimension_numbers<[2], [2], [1], [1], [0, 0, 0, 1, 1, 1], [0], [0]>} : vector<4x24x8xbf16>, vector<4x24x8xbf16>, vector<4x24x24xf32> -> vector<4x24x24xf32>
    "tpu.trace_stop"() : () -> ()
    %cst_70 = arith.constant 0.353553385 : f32
    %178 = vector.broadcast %cst_70 : f32 to vector<4x24x24xf32>
    %179 = arith.mulf %177, %178 : vector<4x24x24xf32>
    %180 = arith.addf %179, %81 : vector<4x24x24xf32>
    %181 = vector.shape_cast %42 : vector<24x24xf32> to vector<1x24x24xf32>
    %182 = vector.broadcast %181 : vector<1x24x24xf32> to vector<4x24x24xf32>
    %183 = arith.addf %180, %182 : vector<4x24x24xf32>
    %cst_71 = arith.constant dense<0xFF800000> : vector<4x24xf32>
    %184 = vector.multi_reduction <maximumf>, %183, %cst_71 [2] : vector<4x24x24xf32> to vector<4x24xf32>
    %185 = vector.shape_cast %184 : vector<4x24xf32> to vector<4x24x1xf32>
    %186 = vector.broadcast %185 : vector<4x24x1xf32> to vector<4x24x24xf32>
    %187 = arith.subf %183, %186 : vector<4x24x24xf32>
    %188 = math.exp %187 : vector<4x24x24xf32>
    %cst_72 = arith.constant dense<0.000000e+00> : vector<4x24xf32>
    %189 = vector.multi_reduction <add>, %188, %cst_72 [2] : vector<4x24x24xf32> to vector<4x24xf32>
    %190 = vector.shape_cast %189 : vector<4x24xf32> to vector<4x24x1xf32>
    %191 = tpu.reciprocal %190 {approx = true} : vector<4x24x1xf32> -> vector<4x24x1xf32>
    %192 = vector.broadcast %191 : vector<4x24x1xf32> to vector<4x24x24xf32>
    %193 = arith.mulf %188, %192 : vector<4x24x24xf32>
    %194 = arith.truncf %193 : vector<4x24x24xf32> to vector<4x24x24xbf16>
    "tpu.trace_start"() <{level = 10 : i32, message = "hmn,hnd->hmd"}> : () -> ()
    %cst_73 = arith.constant dense<0.000000e+00> : vector<4x24x8xf32>
    %195 = tpu.matmul %194, %176, %cst_73 {dimension_numbers = #tpu.dot_dimension_numbers<[2], [1], [1], [2], [0, 0, 0, 1, 1, 2], [0], [0]>} : vector<4x24x24xbf16>, vector<4x24x8xbf16>, vector<4x24x8xf32> -> vector<4x24x8xf32>
    "tpu.trace_stop"() : () -> ()
    %c4 = arith.constant 4 : index
    %c0_74 = arith.constant 0 : index
    %c0_75 = arith.constant 0 : index
    %196 = vector.load %arg8[%c4, %c0_74, %c0_75] : memref<8x8x32xbf16, #tpu.memory_space<vmem>>, vector<4x8x32xbf16>
    %197 = arith.truncf %195 : vector<4x24x8xf32> to vector<4x24x8xbf16>
    "tpu.trace_start"() <{level = 10 : i32, message = "hmd,hdk->hmk"}> : () -> ()
    %cst_76 = arith.constant dense<0.000000e+00> : vector<4x24x32xf32>
    %198 = tpu.matmul %197, %196, %cst_76 {dimension_numbers = #tpu.dot_dimension_numbers<[2], [1], [1], [2], [0, 0, 0, 1, 1, 2], [0], [0]>} : vector<4x24x8xbf16>, vector<4x8x32xbf16>, vector<4x24x32xf32> -> vector<4x24x32xf32>
    "tpu.trace_stop"() : () -> ()
    %cst_77 = arith.constant dense<0.000000e+00> : vector<24x32xf32>
    %199 = vector.multi_reduction <add>, %198, %cst_77 [0] : vector<4x24x32xf32> to vector<24x32xf32>
    %c1_78 = arith.constant 1 : index
    %c0_79 = arith.constant 0 : index
    %c0_80 = arith.constant 0 : index
    %200 = vector.load %arg9[%c1_78, %c0_79, %c0_80] : memref<2x1x32xf32, #tpu.memory_space<vmem>>, vector<1x1x32xf32>
    %201 = vector.shape_cast %200 : vector<1x1x32xf32> to vector<1x32xf32>
    %202 = vector.broadcast %201 : vector<1x32xf32> to vector<24x32xf32>
    %203 = arith.addf %199, %202 : vector<24x32xf32>
    %204 = arith.addf %140, %203 : vector<24x32xf32>
    %c1_81 = arith.constant 1 : index
    %c0_82 = arith.constant 0 : index
    %c0_83 = arith.constant 0 : index
    %205 = vector.load %arg10[%c1_81, %c0_82, %c0_83] : memref<2x1x32xf32, #tpu.memory_space<vmem>>, vector<1x1x32xf32>
    %206 = vector.shape_cast %205 : vector<1x1x32xf32> to vector<1x32xf32>
    %207 = vector.broadcast %206 : vector<1x32xf32> to vector<24x32xf32>
    %208 = arith.mulf %204, %207 : vector<24x32xf32>
    %c1_84 = arith.constant 1 : index
    %c0_85 = arith.constant 0 : index
    %c0_86 = arith.constant 0 : index
    %209 = vector.load %arg11[%c1_84, %c0_85, %c0_86] : memref<2x1x32xf32, #tpu.memory_space<vmem>>, vector<1x1x32xf32>
    %210 = vector.shape_cast %209 : vector<1x1x32xf32> to vector<1x32xf32>
    %211 = vector.broadcast %210 : vector<1x32xf32> to vector<24x32xf32>
    %212 = arith.addf %208, %211 : vector<24x32xf32>
    %213 = arith.truncf %212 : vector<24x32xf32> to vector<24x32xbf16>
    %c1_87 = arith.constant 1 : index
    %c0_88 = arith.constant 0 : index
    %c0_89 = arith.constant 0 : index
    %214 = vector.load %arg12[%c1_87, %c0_88, %c0_89] : memref<2x32x64xbf16, #tpu.memory_space<vmem>>, vector<1x32x64xbf16>
    %215 = vector.shape_cast %214 : vector<1x32x64xbf16> to vector<32x64xbf16>
    %cst_90 = arith.constant dense<0.000000e+00> : vector<24x64xf32>
    %216 = tpu.matmul %213, %215, %cst_90 {dimension_numbers = #tpu.dot_dimension_numbers<[1], [0], [0], [1], [0, 0, 1, 1], [], []>} : vector<24x32xbf16>, vector<32x64xbf16>, vector<24x64xf32> -> vector<24x64xf32>
    %c1_91 = arith.constant 1 : index
    %c0_92 = arith.constant 0 : index
    %c0_93 = arith.constant 0 : index
    %217 = vector.load %arg13[%c1_91, %c0_92, %c0_93] : memref<2x1x64xf32, #tpu.memory_space<vmem>>, vector<1x1x64xf32>
    %218 = vector.shape_cast %217 : vector<1x1x64xf32> to vector<1x64xf32>
    %219 = vector.broadcast %218 : vector<1x64xf32> to vector<24x64xf32>
    %220 = arith.addf %216, %219 : vector<24x64xf32>
    %cst_94 = arith.constant 0.000000e+00 : f32
    %221 = vector.broadcast %cst_94 : f32 to vector<24x64xf32>
    %222 = arith.maximumf %220, %221 : vector<24x64xf32>
    %223 = arith.truncf %222 : vector<24x64xf32> to vector<24x64xbf16>
    %c1_95 = arith.constant 1 : index
    %c0_96 = arith.constant 0 : index
    %c0_97 = arith.constant 0 : index
    %224 = vector.load %arg14[%c1_95, %c0_96, %c0_97] : memref<2x64x32xbf16, #tpu.memory_space<vmem>>, vector<1x64x32xbf16>
    %225 = vector.shape_cast %224 : vector<1x64x32xbf16> to vector<64x32xbf16>
    %cst_98 = arith.constant dense<0.000000e+00> : vector<24x32xf32>
    %226 = tpu.matmul %223, %225, %cst_98 {dimension_numbers = #tpu.dot_dimension_numbers<[1], [0], [0], [1], [0, 0, 1, 1], [], []>} : vector<24x64xbf16>, vector<64x32xbf16>, vector<24x32xf32> -> vector<24x32xf32>
    %c1_99 = arith.constant 1 : index
    %c0_100 = arith.constant 0 : index
    %c0_101 = arith.constant 0 : index
    %227 = vector.load %arg15[%c1_99, %c0_100, %c0_101] : memref<2x1x32xf32, #tpu.memory_space<vmem>>, vector<1x1x32xf32>
    %228 = vector.shape_cast %227 : vector<1x1x32xf32> to vector<1x32xf32>
    %229 = vector.broadcast %228 : vector<1x32xf32> to vector<24x32xf32>
    %230 = arith.addf %226, %229 : vector<24x32xf32>
    %231 = arith.addf %212, %230 : vector<24x32xf32>
    %c1_102 = arith.constant 1 : index
    %c0_103 = arith.constant 0 : index
    %c0_104 = arith.constant 0 : index
    %232 = vector.load %arg16[%c1_102, %c0_103, %c0_104] : memref<2x1x32xf32, #tpu.memory_space<vmem>>, vector<1x1x32xf32>
    %233 = vector.shape_cast %232 : vector<1x1x32xf32> to vector<1x32xf32>
    %234 = vector.broadcast %233 : vector<1x32xf32> to vector<24x32xf32>
    %235 = arith.mulf %231, %234 : vector<24x32xf32>
    %c1_105 = arith.constant 1 : index
    %c0_106 = arith.constant 0 : index
    %c0_107 = arith.constant 0 : index
    %236 = vector.load %arg17[%c1_105, %c0_106, %c0_107] : memref<2x1x32xf32, #tpu.memory_space<vmem>>, vector<1x1x32xf32>
    %237 = vector.shape_cast %236 : vector<1x1x32xf32> to vector<1x32xf32>
    %238 = vector.broadcast %237 : vector<1x32xf32> to vector<24x32xf32>
    %239 = arith.addf %235, %238 : vector<24x32xf32>
    %240 = vector.extract_strided_slice %239 {offsets = [0, 0], sizes = [8, 32], strides = [1, 1]} : vector<24x32xf32> to vector<8x32xf32>
    %241 = vector.extract_strided_slice %239 {offsets = [8, 0], sizes = [8, 32], strides = [1, 1]} : vector<24x32xf32> to vector<8x32xf32>
    %242 = vector.extract_strided_slice %239 {offsets = [16, 0], sizes = [8, 32], strides = [1, 1]} : vector<24x32xf32> to vector<8x32xf32>
    %243 = vector.shape_cast %240 : vector<8x32xf32> to vector<1x8x32xf32>
    %244 = vector.shape_cast %241 : vector<8x32xf32> to vector<1x8x32xf32>
    %245 = vector.shape_cast %242 : vector<8x32xf32> to vector<1x8x32xf32>
    %246 = tpu.concatenate %243, %244, %245 in 0 : vector<1x8x32xf32>, vector<1x8x32xf32>, vector<1x8x32xf32> -> vector<3x8x32xf32>
    %247 = arith.truncf %246 : vector<3x8x32xf32> to vector<3x8x32xbf16>
    %c0_108 = arith.constant 0 : index
    %c0_109 = arith.constant 0 : index
    %c0_110 = arith.constant 0 : index
    %248 = vector.load %arg18[%c0_108, %c0_109, %c0_110] : memref<3x32x128xbf16, #tpu.memory_space<vmem>>, vector<3x32x128xbf16>
    "tpu.trace_start"() <{level = 10 : i32, message = "lbd,ldp->lbp"}> : () -> ()
    %cst_111 = arith.constant dense<0.000000e+00> : vector<3x8x128xf32>
    %249 = tpu.matmul %247, %248, %cst_111 {dimension_numbers = #tpu.dot_dimension_numbers<[2], [1], [1], [2], [0, 0, 0, 1, 1, 2], [0], [0]>} : vector<3x8x32xbf16>, vector<3x32x128xbf16>, vector<3x8x128xf32> -> vector<3x8x128xf32>
    "tpu.trace_stop"() : () -> ()
    %cst_112 = arith.constant dense<0.000000e+00> : vector<8x128xf32>
    %250 = vector.multi_reduction <add>, %249, %cst_112 [0] : vector<3x8x128xf32> to vector<8x128xf32>
    %c0_113 = arith.constant 0 : index
    %c0_114 = arith.constant 0 : index
    %251 = vector.load %arg19[%c0_113, %c0_114] : memref<1x128xf32, #tpu.memory_space<vmem>>, vector<1x128xf32>
    %252 = vector.broadcast %251 : vector<1x128xf32> to vector<8x128xf32>
    %253 = arith.addf %250, %252 : vector<8x128xf32>
    %c0_115 = arith.constant 0 : index
    %c0_116 = arith.constant 0 : index
    %254 = vector.load %arg3[%c0_115, %c0_116] : memref<8x1xf32, #tpu.memory_space<vmem>>, vector<8x1xf32>
    %255 = vector.broadcast %254 : vector<8x1xf32> to vector<8x128xf32>
    %256 = arith.mulf %253, %255 : vector<8x128xf32>
    %c0_117 = arith.constant 0 : index
    %c0_118 = arith.constant 0 : index
    %257 = vector.load %arg2[%c0_117, %c0_118] : memref<8x1xf32, #tpu.memory_space<vmem>>, vector<8x1xf32>
    %258 = vector.broadcast %257 : vector<8x1xf32> to vector<8x128xf32>
    %259 = arith.addf %256, %258 : vector<8x128xf32>
    %c0_119 = arith.constant 0 : index
    %c0_120 = arith.constant 0 : index
    %260 = vector.load %arg20[%c0_119, %c0_120] : memref<8x128xf32, #tpu.memory_space<vmem>>, vector<8x128xf32>
    tpu.vector_store %arg20[%c0_119, %c0_120], %259 {strides = array<i32>} : memref<8x128xf32, #tpu.memory_space<vmem>>, vector<8x128xf32>,
    return
  }
  func.func @transform_0(%arg0: i32) -> (i32, i32) {
    %c0_i32 = arith.constant 0 : i32
    %c0_i32_0 = arith.constant 0 : i32
    return %arg0, %c0_i32 : i32, i32
  }
  func.func @transform_1(%arg0: i32) -> (i32, i32) {
    %c0_i32 = arith.constant 0 : i32
    %c0_i32_0 = arith.constant 0 : i32
    return %arg0, %c0_i32 : i32, i32
  }
  func.func @transform_2(%arg0: i32) -> (i32, i32) {
    %c0_i32 = arith.constant 0 : i32
    %c0_i32_0 = arith.constant 0 : i32
    return %arg0, %c0_i32 : i32, i32
  }
  func.func @transform_3(%arg0: i32) -> (i32, i32) {
    %c0_i32 = arith.constant 0 : i32
    %c0_i32_0 = arith.constant 0 : i32
    %c0_i32_1 = arith.constant 0 : i32
    return %c0_i32, %c0_i32_0 : i32, i32
  }
  func.func @transform_4(%arg0: i32) -> (i32, i32) {
    %c0_i32 = arith.constant 0 : i32
    %c0_i32_0 = arith.constant 0 : i32
    %c0_i32_1 = arith.constant 0 : i32
    return %c0_i32, %c0_i32_0 : i32, i32
  }
  func.func @transform_5(%arg0: i32) -> (i32, i32, i32) {
    %c0_i32 = arith.constant 0 : i32
    %c0_i32_0 = arith.constant 0 : i32
    %c0_i32_1 = arith.constant 0 : i32
    %c0_i32_2 = arith.constant 0 : i32
    return %c0_i32, %c0_i32_0, %c0_i32_1 : i32, i32, i32
  }
  func.func @transform_6(%arg0: i32) -> (i32, i32, i32) {
    %c0_i32 = arith.constant 0 : i32
    %c0_i32_0 = arith.constant 0 : i32
    %c0_i32_1 = arith.constant 0 : i32
    %c0_i32_2 = arith.constant 0 : i32
    return %c0_i32, %c0_i32_0, %c0_i32_1 : i32, i32, i32
  }
  func.func @transform_7(%arg0: i32) -> (i32, i32, i32) {
    %c0_i32 = arith.constant 0 : i32
    %c0_i32_0 = arith.constant 0 : i32
    %c0_i32_1 = arith.constant 0 : i32
    %c0_i32_2 = arith.constant 0 : i32
    return %c0_i32, %c0_i32_0, %c0_i32_1 : i32, i32, i32
  }
  func.func @transform_8(%arg0: i32) -> (i32, i32, i32) {
    %c0_i32 = arith.constant 0 : i32
    %c0_i32_0 = arith.constant 0 : i32
    %c0_i32_1 = arith.constant 0 : i32
    %c0_i32_2 = arith.constant 0 : i32
    return %c0_i32, %c0_i32_0, %c0_i32_1 : i32, i32, i32
  }
  func.func @transform_9(%arg0: i32) -> (i32, i32, i32) {
    %c0_i32 = arith.constant 0 : i32
    %c0_i32_0 = arith.constant 0 : i32
    %c0_i32_1 = arith.constant 0 : i32
    %c0_i32_2 = arith.constant 0 : i32
    return %c0_i32, %c0_i32_0, %c0_i32_1 : i32, i32, i32
  }
  func.func @transform_10(%arg0: i32) -> (i32, i32, i32) {
    %c0_i32 = arith.constant 0 : i32
    %c0_i32_0 = arith.constant 0 : i32
    %c0_i32_1 = arith.constant 0 : i32
    %c0_i32_2 = arith.constant 0 : i32
    return %c0_i32, %c0_i32_0, %c0_i32_1 : i32, i32, i32
  }
  func.func @transform_11(%arg0: i32) -> (i32, i32, i32) {
    %c0_i32 = arith.constant 0 : i32
    %c0_i32_0 = arith.constant 0 : i32
    %c0_i32_1 = arith.constant 0 : i32
    %c0_i32_2 = arith.constant 0 : i32
    return %c0_i32, %c0_i32_0, %c0_i32_1 : i32, i32, i32
  }
  func.func @transform_12(%arg0: i32) -> (i32, i32, i32) {
    %c0_i32 = arith.constant 0 : i32
    %c0_i32_0 = arith.constant 0 : i32
    %c0_i32_1 = arith.constant 0 : i32
    %c0_i32_2 = arith.constant 0 : i32
    return %c0_i32, %c0_i32_0, %c0_i32_1 : i32, i32, i32
  }
  func.func @transform_13(%arg0: i32) -> (i32, i32, i32) {
    %c0_i32 = arith.constant 0 : i32
    %c0_i32_0 = arith.constant 0 : i32
    %c0_i32_1 = arith.constant 0 : i32
    %c0_i32_2 = arith.constant 0 : i32
    return %c0_i32, %c0_i32_0, %c0_i32_1 : i32, i32, i32
  }
  func.func @transform_14(%arg0: i32) -> (i32, i32, i32) {
    %c0_i32 = arith.constant 0 : i32
    %c0_i32_0 = arith.constant 0 : i32
    %c0_i32_1 = arith.constant 0 : i32
    %c0_i32_2 = arith.constant 0 : i32
    return %c0_i32, %c0_i32_0, %c0_i32_1 : i32, i32, i32
  }
  func.func @transform_15(%arg0: i32) -> (i32, i32, i32) {
    %c0_i32 = arith.constant 0 : i32
    %c0_i32_0 = arith.constant 0 : i32
    %c0_i32_1 = arith.constant 0 : i32
    %c0_i32_2 = arith.constant 0 : i32
    return %c0_i32, %c0_i32_0, %c0_i32_1 : i32, i32, i32
  }
  func.func @transform_16(%arg0: i32) -> (i32, i32, i32) {
    %c0_i32 = arith.constant 0 : i32
    %c0_i32_0 = arith.constant 0 : i32
    %c0_i32_1 = arith.constant 0 : i32
    %c0_i32_2 = arith.constant 0 : i32
    return %c0_i32, %c0_i32_0, %c0_i32_1 : i32, i32, i32
  }
  func.func @transform_17(%arg0: i32) -> (i32, i32, i32) {
    %c0_i32 = arith.constant 0 : i32
    %c0_i32_0 = arith.constant 0 : i32
    %c0_i32_1 = arith.constant 0 : i32
    %c0_i32_2 = arith.constant 0 : i32
    return %c0_i32, %c0_i32_0, %c0_i32_1 : i32, i32, i32
  }
  func.func @transform_18(%arg0: i32) -> (i32, i32) {
    %c0_i32 = arith.constant 0 : i32
    %c0_i32_0 = arith.constant 0 : i32
    %c0_i32_1 = arith.constant 0 : i32
    return %c0_i32, %c0_i32_0 : i32, i32
  }
  func.func @transform_19(%arg0: i32) -> (i32, i32) {
    %c0_i32 = arith.constant 0 : i32
    %c0_i32_0 = arith.constant 0 : i32
    return %arg0, %c0_i32 : i32, i32
  }
}

</mosaic_0001>

<llo_original>
// kernel: tpu_custom_call.1
$region0: #{tpu_custom_call.1}
  #allocation0 [shape = 'u32[]', space=smem, size = 0x4, offset = 0x4, fixed_abs, tag = 'smem constant byte address 0x4 - core index']
  #allocation1 [shape = 'u32[144,128]{1,0:T(1,128)}', space=vmem, size = 0x12000, scoped, tag = 'internal scratch']
  %s0 = inlined_call_operand.vmem [shape: bf16[24,8], index: 0, kind: input, shape index: {}]
  %s1 = inlined_call_operand.vmem [shape: f32[8,1], index: 1, kind: input, shape index: {}]
  %s2 = inlined_call_operand.vmem [shape: f32[8,1], index: 2, kind: input, shape index: {}]
  %s3 = inlined_call_operand.hbm [shape: f32[24,32], index: 3, kind: input, shape index: {}]
  %s4 = inlined_call_operand.vmem [shape: bf16[8,32], index: 4, kind: input, shape index: {}]
  %s5 = inlined_call_operand.vmem [shape: bf16[2,32,96], index: 5, kind: input, shape index: {}]
  %s6 = inlined_call_operand.hbm [shape: f32[2,1,96], index: 6, kind: input, shape index: {}]
  %s7 = inlined_call_operand.vmem [shape: bf16[8,8,32], index: 7, kind: input, shape index: {}]
  %s8 = inlined_call_operand.hbm [shape: f32[2,1,32], index: 8, kind: input, shape index: {}]
  %s9 = inlined_call_operand.hbm [shape: f32[2,1,32], index: 9, kind: input, shape index: {}]
  %s10 = inlined_call_operand.hbm [shape: f32[2,1,32], index: 10, kind: input, shape index: {}]
  %s11 = inlined_call_operand.hbm [shape: bf16[2,32,64], index: 11, kind: input, shape index: {}]
  %s12 = inlined_call_operand.hbm [shape: f32[2,1,64], index: 12, kind: input, shape index: {}]
  %s13 = inlined_call_operand.vmem [shape: bf16[2,64,32], index: 13, kind: input, shape index: {}]
  %s14 = inlined_call_operand.vmem [shape: f32[2,1,32], index: 14, kind: input, shape index: {}]
  %s15 = inlined_call_operand.vmem [shape: f32[2,1,32], index: 15, kind: input, shape index: {}]
  %s16 = inlined_call_operand.vmem [shape: f32[2,1,32], index: 16, kind: input, shape index: {}]
  %s17 = inlined_call_operand.vmem [shape: bf16[3,32,128], index: 17, kind: input, shape index: {}]
  %s18 = inlined_call_operand.vmem [shape: f32[1,128], index: 18, kind: input, shape index: {}]
  %s19 = inlined_call_operand.hbm [shape: f32[8,128], index: 19, kind: output, shape index: {}]
  %s20 = sld [smem:[#allocation0]]
  $region114: #{tpu_custom_call.1} parent=0
    _
  %s22 = ssub.s32 1, %s20
  %s23 = scalar_select 0, %s22, %s20
  $region1: #{tpu_custom_call.1} parent=0
    #allocation2 [shape = 'u8[12288]{0}', space=vmem, size = 0x3000, scoped, tag = 'input window, operand 3, single buffered']
    #allocation3 [shape = 's32[1]{0}', space=sflag, size = 0x4, scoped, tag = 'scoped memory for tpu_custom_call.1']
    #allocation4 [shape = 's32[1]{0}', space=sflag, size = 0x4, scoped, tag = 'scoped memory for tpu_custom_call.1']
    #allocation5 [shape = 'u8[1024]{0}', space=vmem, size = 0x400, scoped, tag = 'input window, operand 6, single buffered']
    #allocation6 [shape = 's32[1]{0}', space=sflag, size = 0x4, scoped, tag = 'scoped memory for tpu_custom_call.1']
    #allocation7 [shape = 'u8[1024]{0}', space=vmem, size = 0x400, scoped, tag = 'input window, operand 8, single buffered']
    #allocation8 [shape = 'u8[1024]{0}', space=vmem, size = 0x400, scoped, tag = 'input window, operand 9, single buffered']
    #allocation9 [shape = 's32[1]{0}', space=sflag, size = 0x4, scoped, tag = 'scoped memory for tpu_custom_call.1']
    #allocation10 [shape = 'u8[1024]{0}', space=vmem, size = 0x400, scoped, tag = 'input window, operand 10, single buffered']
    #allocation11 [shape = 'u8[16384]{0}', space=vmem, size = 0x4000, scoped, tag = 'input window, operand 11, single buffered']
    #allocation12 [shape = 's32[1]{0}', space=sflag, size = 0x4, scoped, tag = 'scoped memory for tpu_custom_call.1']
    #allocation13 [shape = 'u8[1024]{0}', space=vmem, size = 0x400, scoped, tag = 'input window, operand 12, single buffered']
    #allocation14 [shape = 'u8[4096]{0}', space=vmem, size = 0x1000, scoped, tag = 'output window, operand 0, single buffered']
    %24 = vsyncpa [#allocation3], 0
    %25 = vsyncpa [#allocation6], 0
    %26 = vsyncpa [#allocation9], 0
    %27 = vsyncpa [#allocation12], 0
    %28 = vsyncpa [#allocation4], 0
    // Predicated region
    $region2: #{tpu_custom_call.1} parent=1 // pred_check
      _
    $region3: #{tpu_custom_call.1} parent=1 // pred_check_branch
      %30 = sbr.rel (0) target = $region5
    $region4: #{tpu_custom_call.1} parent=1 // pred_region
      _
    $region5: #{tpu_custom_call.1} parent=1 // pred_fallthru
      _
    // Predicated region
    $region6: #{tpu_custom_call.1} parent=1 // pred_check
      _
    $region7: #{tpu_custom_call.1} parent=1 // pred_check_branch
      %32 = sbr.rel (0) target = $region9
    $region8: #{tpu_custom_call.1} parent=1 // pred_region
      _
    $region9: #{tpu_custom_call.1} parent=1 // pred_fallthru
      _
    // Predicated region
    $region10: #{tpu_custom_call.1} parent=1 // pred_check
      _
    $region11: #{tpu_custom_call.1} parent=1 // pred_check_branch
      %34 = sbr.rel (0) target = $region13
    $region12: #{tpu_custom_call.1} parent=1 // pred_region
      _
    $region13: #{tpu_custom_call.1} parent=1 // pred_fallthru
      _
    // Predicated region
    $region14: #{tpu_custom_call.1} parent=1 // pred_check
      _
    $region15: #{tpu_custom_call.1} parent=1 // pred_check_branch
      %36 = sbr.rel (0) target = $region17
    $region16: #{tpu_custom_call.1} parent=1 // pred_region
      %s38 = ssub.s32 384, 384
      %39 = vsyncadd [#allocation3], %s38
      %s40 = sshll.u32 [#allocation2], 4
      %s41 = int_to_ptr.vmem [resolvable:$true] %s40
      %46 = dma.hbm_to_vmem [thread:$0]  %s3, 384, %s41, [#allocation3], 128, 128, 8
    $region17: #{tpu_custom_call.1} parent=1 // pred_fallthru
      _
    // Predicated region
    $region18: #{tpu_custom_call.1} parent=1 // pred_check
      _
    $region19: #{tpu_custom_call.1} parent=1 // pred_check_branch
      %48 = sbr.rel (0) target = $region21
    $region20: #{tpu_custom_call.1} parent=1 // pred_region
      _
    $region21: #{tpu_custom_call.1} parent=1 // pred_fallthru
      _
    // Predicated region
    $region22: #{tpu_custom_call.1} parent=1 // pred_check
      _
    $region23: #{tpu_custom_call.1} parent=1 // pred_check_branch
      %50 = sbr.rel (0) target = $region25
    $region24: #{tpu_custom_call.1} parent=1 // pred_region
      _
    $region25: #{tpu_custom_call.1} parent=1 // pred_fallthru
      _
    // Predicated region
    $region26: #{tpu_custom_call.1} parent=1 // pred_check
      _
    $region27: #{tpu_custom_call.1} parent=1 // pred_check_branch
      %52 = sbr.rel (0) target = $region29
    $region28: #{tpu_custom_call.1} parent=1 // pred_region
      %s54 = ssub.s32 32, 32
      %55 = vsyncadd [#allocation6], %s54
      %s56 = sshll.u32 [#allocation5], 4
      %s57 = int_to_ptr.vmem [resolvable:$true] %s56
      %62 = dma.hbm_to_vmem [thread:$0]  %s6, 32, %s57, [#allocation6], 16, 16, 1
    $region29: #{tpu_custom_call.1} parent=1 // pred_fallthru
      _
    // Predicated region
    $region30: #{tpu_custom_call.1} parent=1 // pred_check
      _
    $region31: #{tpu_custom_call.1} parent=1 // pred_check_branch
      %64 = sbr.rel (0) target = $region33
    $region32: #{tpu_custom_call.1} parent=1 // pred_region
      _
    $region33: #{tpu_custom_call.1} parent=1 // pred_fallthru
      _
    // Predicated region
    $region34: #{tpu_custom_call.1} parent=1 // pred_check
      _
    $region35: #{tpu_custom_call.1} parent=1 // pred_check_branch
      %66 = sbr.rel (0) target = $region37
    $region36: #{tpu_custom_call.1} parent=1 // pred_region
      %s68 = ssub.s32 32, 32
      %69 = vsyncadd [#allocation6], %s68
      %s70 = sshll.u32 [#allocation7], 4
      %s71 = int_to_ptr.vmem [resolvable:$true] %s70
      %76 = dma.hbm_to_vmem [thread:$0]  %s8, 32, %s71, [#allocation6], 16, 16, 1
    $region37: #{tpu_custom_call.1} parent=1 // pred_fallthru
      _
    // Predicated region
    $region38: #{tpu_custom_call.1} parent=1 // pred_check
      _
    $region39: #{tpu_custom_call.1} parent=1 // pred_check_branch
      %78 = sbr.rel (0) target = $region41
    $region40: #{tpu_custom_call.1} parent=1 // pred_region
      %s80 = ssub.s32 32, 32
      %81 = vsyncadd [#allocation9], %s80
      %s82 = sshll.u32 [#allocation8], 4
      %s83 = int_to_ptr.vmem [resolvable:$true] %s82
      %88 = dma.hbm_to_vmem [thread:$0]  %s9, 32, %s83, [#allocation9], 16, 16, 1
    $region41: #{tpu_custom_call.1} parent=1 // pred_fallthru
      _
    // Predicated region
    $region42: #{tpu_custom_call.1} parent=1 // pred_check
      _
    $region43: #{tpu_custom_call.1} parent=1 // pred_check_branch
      %90 = sbr.rel (0) target = $region45
    $region44: #{tpu_custom_call.1} parent=1 // pred_region
      %s92 = ssub.s32 32, 32
      %93 = vsyncadd [#allocation9], %s92
      %s94 = sshll.u32 [#allocation10], 4
      %s95 = int_to_ptr.vmem [resolvable:$true] %s94
      %100 = dma.hbm_to_vmem [thread:$0]  %s10, 32, %s95, [#allocation9], 16, 16, 1
    $region45: #{tpu_custom_call.1} parent=1 // pred_fallthru
      _
    // Predicated region
    $region46: #{tpu_custom_call.1} parent=1 // pred_check
      _
    $region47: #{tpu_custom_call.1} parent=1 // pred_check_branch
      %102 = sbr.rel (0) target = $region49
    $region48: #{tpu_custom_call.1} parent=1 // pred_region
      %s104 = ssub.s32 512, 512
      %105 = vsyncadd [#allocation12], %s104
      %s106 = sshll.u32 [#allocation11], 4
      %s107 = int_to_ptr.vmem [resolvable:$true] %s106
      %112 = dma.hbm_to_vmem [thread:$0]  %s11, 512, %s107, [#allocation12], 64, 64, 4
    $region49: #{tpu_custom_call.1} parent=1 // pred_fallthru
      _
    // Predicated region
    $region50: #{tpu_custom_call.1} parent=1 // pred_check
      _
    $region51: #{tpu_custom_call.1} parent=1 // pred_check_branch
      %114 = sbr.rel (0) target = $region53
    $region52: #{tpu_custom_call.1} parent=1 // pred_region
      %s116 = ssub.s32 32, 32
      %117 = vsyncadd [#allocation12], %s116
      %s118 = sshll.u32 [#allocation13], 4
      %s119 = int_to_ptr.vmem [resolvable:$true] %s118
      %124 = dma.hbm_to_vmem [thread:$0]  %s12, 32, %s119, [#allocation12], 16, 16, 1
    $region53: #{tpu_custom_call.1} parent=1 // pred_fallthru
      _
    // Predicated region
    $region54: #{tpu_custom_call.1} parent=1 // pred_check
      _
    $region55: #{tpu_custom_call.1} parent=1 // pred_check_branch
      %126 = sbr.rel (0) target = $region57
    $region56: #{tpu_custom_call.1} parent=1 // pred_region
      _
    $region57: #{tpu_custom_call.1} parent=1 // pred_fallthru
      _
    // Predicated region
    $region58: #{tpu_custom_call.1} parent=1 // pred_check
      _
    $region59: #{tpu_custom_call.1} parent=1 // pred_check_branch
      %128 = sbr.rel (0) target = $region61
    $region60: #{tpu_custom_call.1} parent=1 // pred_region
      _
    $region61: #{tpu_custom_call.1} parent=1 // pred_fallthru
      _
    // Predicated region
    $region62: #{tpu_custom_call.1} parent=1 // pred_check
      _
    $region63: #{tpu_custom_call.1} parent=1 // pred_check_branch
      %130 = sbr.rel (0) target = $region65
    $region64: #{tpu_custom_call.1} parent=1 // pred_region
      _
    $region65: #{tpu_custom_call.1} parent=1 // pred_fallthru
      _
    // Predicated region
    $region66: #{tpu_custom_call.1} parent=1 // pred_check
      _
    $region67: #{tpu_custom_call.1} parent=1 // pred_check_branch
      %132 = sbr.rel (0) target = $region69
    $region68: #{tpu_custom_call.1} parent=1 // pred_region
      _
    $region69: #{tpu_custom_call.1} parent=1 // pred_fallthru
      _
    // Predicated region
    $region70: #{tpu_custom_call.1} parent=1 // pred_check
      _
    $region71: #{tpu_custom_call.1} parent=1 // pred_check_branch
      %134 = sbr.rel (0) target = $region73
    $region72: #{tpu_custom_call.1} parent=1 // pred_region
      _
    $region73: #{tpu_custom_call.1} parent=1 // pred_fallthru
      _
    // Predicated region
    $region74: #{tpu_custom_call.1} parent=1 // pred_check
      _
    $region75: #{tpu_custom_call.1} parent=1 // pred_check_branch
      %136 = sbr.rel (0) target = $region77
    $region76: #{tpu_custom_call.1} parent=1 // pred_region
      _
    $region77: #{tpu_custom_call.1} parent=1 // pred_fallthru
      _
    // Predicated region
    $region78: #{tpu_custom_call.1} parent=1 // pred_check
      _
    $region79: #{tpu_custom_call.1} parent=1 // pred_check_branch
      %138 = sbr.rel (0) target = $region81
    $region80: #{tpu_custom_call.1} parent=1 // pred_region
      %139 = dma.done [#allocation3], 384
    $region81: #{tpu_custom_call.1} parent=1 // pred_fallthru
      _
    // Predicated region
    $region82: #{tpu_custom_call.1} parent=1 // pred_check
      _
    $region83: #{tpu_custom_call.1} parent=1 // pred_check_branch
      %141 = sbr.rel (0) target = $region85
    $region84: #{tpu_custom_call.1} parent=1 // pred_region
      %142 = dma.done [#allocation6], 32
    $region85: #{tpu_custom_call.1} parent=1 // pred_fallthru
      _
    // Predicated region
    $region86: #{tpu_custom_call.1} parent=1 // pred_check
      _
    $region87: #{tpu_custom_call.1} parent=1 // pred_check_branch
      %144 = sbr.rel (0) target = $region89
    $region88: #{tpu_custom_call.1} parent=1 // pred_region
      %145 = dma.done [#allocation6], 32
    $region89: #{tpu_custom_call.1} parent=1 // pred_fallthru
      _
    // Predicated region
    $region90: #{tpu_custom_call.1} parent=1 // pred_check
      _
    $region91: #{tpu_custom_call.1} parent=1 // pred_check_branch
      %147 = sbr.rel (0) target = $region93
    $region92: #{tpu_custom_call.1} parent=1 // pred_region
      %148 = dma.done [#allocation9], 32
    $region93: #{tpu_custom_call.1} parent=1 // pred_fallthru
      _
    // Predicated region
    $region94: #{tpu_custom_call.1} parent=1 // pred_check
      _
    $region95: #{tpu_custom_call.1} parent=1 // pred_check_branch
      %150 = sbr.rel (0) target = $region97
    $region96: #{tpu_custom_call.1} parent=1 // pred_region
      %151 = dma.done [#allocation9], 32
    $region97: #{tpu_custom_call.1} parent=1 // pred_fallthru
      _
    // Predicated region
    $region98: #{tpu_custom_call.1} parent=1 // pred_check
      _
    $region99: #{tpu_custom_call.1} parent=1 // pred_check_branch
      %153 = sbr.rel (0) target = $region101
    $region100: #{tpu_custom_call.1} parent=1 // pred_region
      %154 = dma.done [#allocation12], 512
    $region101: #{tpu_custom_call.1} parent=1 // pred_fallthru
      _
    // Predicated region
    $region102: #{tpu_custom_call.1} parent=1 // pred_check
      _
    $region103: #{tpu_custom_call.1} parent=1 // pred_check_branch
      %156 = sbr.rel (0) target = $region105
    $region104: #{tpu_custom_call.1} parent=1 // pred_region
      %157 = dma.done [#allocation12], 32
    $region105: #{tpu_custom_call.1} parent=1 // pred_fallthru
      _
    %v159 = vld [vmem:[%s0] sm:$0xf]
    %v160 = vld [vmem:[%s0 + $0x4] sm:$0xf]
    %v161 = vld [vmem:[%s0 + $0x8] sm:$0xf]
    %v162 = vld [vmem:[%s4] sm:$0xf]
    %v163 = vld [vmem:[#allocation2] sm:$0xff]
    %v164 = vld [vmem:[#allocation2 + $0x8] sm:$0xff]
    %v165 = vld [vmem:[#allocation2 + $0x10] sm:$0xff]
    %v169 = vunpack.c.l.b16 %v159
    %v170 = vunpack.c.l.b16 %v160
    %v171 = vunpack.c.l.b16 %v161
    %v172 = vpack.c.b16 %v170, %v169
    %v173 = vpack.c.b16 %v171, %v171
    %vm174 = vcmask 64512
    %v176 = vsel %vm174, %v172, 0
    %v179 = vsel %vm174, %v173, 0
    %vm181 = vcmask 1043456
    %v183 = vsel %vm181, %v162, 0
    %185 = vmatprep.subr.bf16.mxu0 0
    %186 = vmatpush1.bf16.msra.mxu0 0
    %187 = vmatprep.subr.bf16.mxu0 0
    %188 = vmatpush1.bf16.msra.mxu0 0
    %189 = vmatprep.subr.bf16.mxu0 0
    %190 = vmatpush1.bf16.msra.mxu0 0
    %191 = vmatprep.subr.bf16.mxu0 0
    %192 = vmatpush1.bf16.msra.mxu0 0
    %193 = vmatprep.subr.bf16.mxu0 0
    %194 = vmatpush1.bf16.msra.mxu0 0
    %195 = vmatprep.subr.bf16.mxu0 0
    %196 = vmatpush1.bf16.msra.mxu0 0
    %197 = vmatprep.subr.bf16.mxu0 0
    %198 = vmatpush1.bf16.msra.mxu0 0
    %199 = vmatprep.subr.bf16.mxu0 0
    %200 = vmatpush1.bf16.msra.mxu0 %v183
    %201 = vmatprep.subr.bf16.mxu0 0
    %202 = vmatpush2.bf16.msra.mxu0 0
    %203 = vmatprep.subr.bf16.mxu0 0
    %204 = vmatpush2.bf16.msra.mxu0 0
    %205 = vmatprep.subr.bf16.mxu0 0
    %206 = vmatpush2.bf16.msra.mxu0 0
    %207 = vmatprep.subr.bf16.mxu0 0
    %208 = vmatpush2.bf16.msra.mxu0 0
    %209 = vmatprep.subr.bf16.mxu0 0
    %210 = vmatpush2.bf16.msra.mxu0 0
    %211 = vmatprep.subr.bf16.mxu0 0
    %212 = vmatpush2.bf16.msra.mxu0 0
    %213 = vmatprep.subr.bf16.mxu0 0
    %214 = vmatpush2.bf16.msra.mxu0 0
    %215 = vmatprep.subr.bf16.mxu0 0
    %216 = vmatpush2.bf16.msra.mxu0 0
    %217 = vmatprep.mubr.bf16.mxu0 0
    %218 = vmatmul.mubr.bf16.gmra.mxu0 %v176
    %v219 = vpop.f32.mrf.mxu0
    %v220 = vadd.f32 %v163, %v219
    %v221 = vpop.f32.mrf.mxu0
    %v222 = vpop.f32.mrf.mxu0
    %v223 = vadd.f32 %v164, %v222
    %v224 = vpop.f32.mrf.mxu0
    %225 = vmatprep.mubr.bf16.mxu0 0
    %226 = vmatmul.mubr.bf16.gmra.mxu0 %v179
    %v227 = vpop.f32.mrf.mxu0
    %v228 = vadd.f32 %v165, %v227
    %v229 = vpop.f32.mrf.mxu0
    %v230 = vpop.f32.mrf.mxu0
    %v231 = vpop.f32.mrf.mxu0
    %232 = vdwg.mxu0
    %v233 = vlaneseq
    %v234 = vshrl.u32 %v233, 7
    %v235 = vadd.s32 %v234, 8
    %v236 = vadd.s32 %v234, 16
    %v237 = vlaneseq
    %v238 = vand.u32 %v237, 127
    %vm239 = vcmp.lt.s32.totalorder %v234, 0
    %v240 = vsub.s32 0, %v234
    %v241 = vsel %vm239, %v240, %v234
    %v242 = vshrl.u32 %v241, 3
    %v243 = vand.u32 %v241, 7
    %v244 = vsub.s32 0, %v243
    %v245 = vsel %vm239, %v244, %v243
    %vm246 = vcmp.lt.s32.totalorder %v235, 0
    %v247 = vsub.s32 0, %v235
    %v248 = vsel %vm246, %v247, %v235
    %v249 = vshrl.u32 %v248, 3
    %v250 = vand.u32 %v248, 7
    %v251 = vsub.s32 0, %v250
    %v252 = vsel %vm246, %v251, %v250
    %vm253 = vcmp.lt.s32.totalorder %v236, 0
    %v254 = vsub.s32 0, %v236
    %v255 = vsel %vm253, %v254, %v236
    %v256 = vshrl.u32 %v255, 3
    %v257 = vand.u32 %v255, 7
    %v258 = vsub.s32 0, %v257
    %v259 = vsel %vm253, %v258, %v257
    %vm260 = vcmp.ne.s32.totalorder %v245, 0
    %vm261 = vcmp.ne.s32.totalorder %v252, 0
    %vm262 = vcmp.ne.s32.totalorder %v259, 0
    %vm263 = vcmp.lt.s32.totalorder %v245, 0
    %vm264 = vcmp.lt.s32.totalorder %v252, 0
    %vm265 = vcmp.lt.s32.totalorder %v259, 0
    %vm266 = vmand %vm263, %vm260
    %vm267 = vmand %vm264, %vm261
    %vm268 = vmand %vm265, %vm262
    %v269 = vadd.s32 %v245, 8
    %v270 = vadd.s32 %v252, 8
    %v271 = vadd.s32 %v259, 8
    %v272 = vsel %vm266, %v269, %v245
    %v273 = vsel %vm267, %v270, %v252
    %v274 = vsel %vm268, %v271, %v259
    %vm275 = vcmp.lt.s32.totalorder %v238, 0
    %v276 = vsub.s32 0, %v238
    %v277 = vsel %vm275, %v276, %v238
    %v278 = vshrl.u32 %v277, 3
    %v279 = vand.u32 %v277, 7
    %v280 = vsub.s32 0, %v279
    %v281 = vsel %vm275, %v280, %v279
    %vm282 = vcmp.ne.s32.totalorder %v281, 0
    %vm283 = vcmp.lt.s32.totalorder %v281, 0
    %vm284 = vmand %vm283, %vm282
    %v285 = vadd.s32 %v281, 8
    %v286 = vsel %vm284, %v285, %v281
    %vm287 = vcmp.eq.s32.totalorder %v272, %v286
    %vm288 = vcmp.eq.s32.totalorder %v273, %v286
    %vm289 = vcmp.eq.s32.totalorder %v274, %v286
    %v290 = vsel %vm287, 0.0, -1e+30
    %v291 = vsel %vm288, 0.0, -1e+30
    %v292 = vsel %vm289, 0.0, -1e+30
    %v293 = vpack.c.bf16 %v223, %v220
    %v294 = vpack.c.bf16 %v228, %v228
    %v295 = vld [vmem:[%s5] sm:$0xf]
    %v296 = vld [vmem:[%s5 + $0x4] sm:$0xf]
    %v297 = vld [vmem:[%s5 + $0x8] sm:$0xf]
    %v298 = vld [vmem:[%s5 + $0xc] sm:$0xf]
    %v299 = vld [vmem:[#allocation5] sm:$0x1]
    %v301 = vlaneseq
    %v302 = vshrl.u32 %v301, 7
    %v303 = vsub.s32 0, %v302
    %v304 = vrot.slane %v299, %v303
    %v310 = vunpack.c.l.b16 %v295
    %v311 = vunpack.c.l.b16 %v296
    %v312 = vunpack.c.l.b16 %v297
    %v313 = vunpack.c.l.b16 %v298
    %v314 = vpack.c.b16 %v311, %v310
    %v315 = vpack.c.b16 %v313, %v312
    %vm318 = vcmask 261120
    %v320 = vsel %vm318, %v293, 0
    %v323 = vsel %vm318, %v294, 0
    %325 = vmatprep.subr.bf16.mxu0 0
    %326 = vmatpush1.bf16.msra.mxu0 0
    %327 = vmatprep.subr.bf16.mxu0 0
    %328 = vmatpush1.bf16.msra.mxu0 0
    %329 = vmatprep.subr.bf16.mxu0 0
    %330 = vmatpush1.bf16.msra.mxu0 0
    %331 = vmatprep.subr.bf16.mxu0 0
    %332 = vmatpush1.bf16.msra.mxu0 0
    %333 = vmatprep.subr.bf16.mxu0 0
    %334 = vmatpush1.bf16.msra.mxu0 0
    %335 = vmatprep.subr.bf16.mxu0 0
    %336 = vmatpush1.bf16.msra.mxu0 0
    %337 = vmatprep.subr.bf16.mxu0 0
    %338 = vmatpush1.bf16.msra.mxu0 %v315
    %339 = vmatprep.subr.bf16.mxu0 0
    %340 = vmatpush1.bf16.msra.mxu0 %v314
    %341 = vmatprep.subr.bf16.mxu0 0
    %342 = vmatpush2.bf16.msra.mxu0 0
    %343 = vmatprep.subr.bf16.mxu0 0
    %344 = vmatpush2.bf16.msra.mxu0 0
    %345 = vmatprep.subr.bf16.mxu0 0
    %346 = vmatpush2.bf16.msra.mxu0 0
    %347 = vmatprep.subr.bf16.mxu0 0
    %348 = vmatpush2.bf16.msra.mxu0 0
    %349 = vmatprep.subr.bf16.mxu0 0
    %350 = vmatpush2.bf16.msra.mxu0 0
    %351 = vmatprep.subr.bf16.mxu0 0
    %352 = vmatpush2.bf16.msra.mxu0 0
    %353 = vmatprep.subr.bf16.mxu0 0
    %354 = vmatpush2.bf16.msra.mxu0 0
    %355 = vmatprep.subr.bf16.mxu0 0
    %356 = vmatpush2.bf16.msra.mxu0 0
    %357 = vmatprep.mubr.bf16.mxu0 0
    %358 = vmatmul.mubr.bf16.gmra.mxu0 %v320
    %v359 = vpop.f32.mrf.mxu0
    %v360 = vadd.f32 %v304, %v359
    %v361 = vpop.f32.mrf.mxu0
    %v362 = vpop.f32.mrf.mxu0
    %v363 = vadd.f32 %v304, %v362
    %v364 = vpop.f32.mrf.mxu0
    %365 = vmatprep.mubr.bf16.mxu0 0
    %366 = vmatmul.mubr.bf16.gmra.mxu0 %v323
    %v367 = vpop.f32.mrf.mxu0
    %v368 = vadd.f32 %v304, %v367
    %v369 = vpop.f32.mrf.mxu0
    %v370 = vpop.f32.mrf.mxu0
    %v371 = vpop.f32.mrf.mxu0
    %372 = vdwg.mxu0
    %v373 = vpack.c.bf16 %v363, %v360
    %v374 = vpack.c.bf16 %v368, %v368
    %377 = vrot.lane.b32.xlu0 %v373, 120
    %v378 = vpop.permute.xlu0 %377
    %379 = vrot.lane.b32.xlu0 %v374, 120
    %v380 = vpop.permute.xlu0 %379
    %381 = vrot.lane.b32.xlu0 %v373, 112
    %v382 = vpop.permute.xlu0 %381
    %383 = vrot.lane.b32.xlu0 %v374, 112
    %v384 = vpop.permute.xlu0 %383
    %385 = vrot.lane.b32.xlu0 %v373, 104
    %v386 = vpop.permute.xlu0 %385
    %387 = vrot.lane.b32.xlu0 %v374, 104
    %v388 = vpop.permute.xlu0 %387
    %389 = vrot.lane.b32.xlu0 %v373, 96
    %v390 = vpop.permute.xlu0 %389
    %391 = vrot.lane.b32.xlu0 %v374, 96
    %v392 = vpop.permute.xlu0 %391
    %v394 = vsel %vm174, %v373, 0
    %v397 = vsel %vm174, %v374, 0
    %v400 = vsel %vm174, %v390, 0
    %v403 = vsel %vm174, %v392, 0
    %405 = vmatprep.subr.bf16.mxu0 0
    %406 = vmatpush1.bf16.xpose.msra.mxu0 0
    %407 = vmatprep.subr.bf16.mxu0 0
    %408 = vmatpush1.bf16.xpose.msra.mxu0 0
    %409 = vmatprep.subr.bf16.mxu0 0
    %410 = vmatpush1.bf16.xpose.msra.mxu0 0
    %411 = vmatprep.subr.bf16.mxu0 0
    %412 = vmatpush1.bf16.xpose.msra.mxu0 0
    %413 = vmatprep.subr.bf16.mxu0 0
    %414 = vmatpush1.bf16.xpose.msra.mxu0 0
    %415 = vmatprep.subr.bf16.mxu0 0
    %416 = vmatpush1.bf16.xpose.msra.mxu0 0
    %417 = vmatprep.subr.bf16.mxu0 0
    %418 = vmatpush1.bf16.xpose.msra.mxu0 %v403
    %419 = vmatprep.subr.bf16.mxu0 0
    %420 = vmatpush1.bf16.xpose.msra.mxu0 %v400
    %421 = vmatprep.subr.bf16.mxu0 0
    %422 = vmatpush2.bf16.xpose.msra.mxu0 0
    %423 = vmatprep.subr.bf16.mxu0 0
    %424 = vmatpush2.bf16.xpose.msra.mxu0 0
    %425 = vmatprep.subr.bf16.mxu0 0
    %426 = vmatpush2.bf16.xpose.msra.mxu0 0
    %427 = vmatprep.subr.bf16.mxu0 0
    %428 = vmatpush2.bf16.xpose.msra.mxu0 0
    %429 = vmatprep.subr.bf16.mxu0 0
    %430 = vmatpush2.bf16.xpose.msra.mxu0 0
    %431 = vmatprep.subr.bf16.mxu0 0
    %432 = vmatpush2.bf16.xpose.msra.mxu0 0
    %433 = vmatprep.subr.bf16.mxu0 0
    %434 = vmatpush2.bf16.xpose.msra.mxu0 0
    %435 = vmatprep.subr.bf16.mxu0 0
    %436 = vmatpush2.bf16.xpose.msra.mxu0 0
    %437 = vmatprep.mubr.bf16.mxu0 0
    %438 = vmatmul.mubr.bf16.gmra.mxu0 %v394
    %v439 = vpop.f32.mrf.mxu0
    %v440 = vadd.f32 0.0, %v439
    %v441 = vpop.f32.mrf.mxu0
    %v442 = vpop.f32.mrf.mxu0
    %v443 = vadd.f32 0.0, %v442
    %v444 = vpop.f32.mrf.mxu0
    %445 = vmatprep.mubr.bf16.mxu0 0
    %446 = vmatmul.mubr.bf16.gmra.mxu0 %v397
    %v447 = vpop.f32.mrf.mxu0
    %v448 = vadd.f32 0.0, %v447
    %v449 = vpop.f32.mrf.mxu0
    %v450 = vpop.f32.mrf.mxu0
    %v451 = vpop.f32.mrf.mxu0
    %452 = vdwg.mxu0
    %453 = vrot.lane.b32.xlu0 %v378, 96
    %v454 = vpop.permute.xlu0 %453
    %455 = vrot.lane.b32.xlu0 %v380, 96
    %v456 = vpop.permute.xlu0 %455
    %v458 = vsel %vm174, %v378, 0
    %v461 = vsel %vm174, %v380, 0
    %v464 = vsel %vm174, %v454, 0
    %v467 = vsel %vm174, %v456, 0
    %469 = vmatprep.subr.bf16.mxu0 0
    %470 = vmatpush1.bf16.xpose.msra.mxu0 0
    %471 = vmatprep.subr.bf16.mxu0 0
    %472 = vmatpush1.bf16.xpose.msra.mxu0 0
    %473 = vmatprep.subr.bf16.mxu0 0
    %474 = vmatpush1.bf16.xpose.msra.mxu0 0
    %475 = vmatprep.subr.bf16.mxu0 0
    %476 = vmatpush1.bf16.xpose.msra.mxu0 0
    %477 = vmatprep.subr.bf16.mxu0 0
    %478 = vmatpush1.bf16.xpose.msra.mxu0 0
    %479 = vmatprep.subr.bf16.mxu0 0
    %480 = vmatpush1.bf16.xpose.msra.mxu0 0
    %481 = vmatprep.subr.bf16.mxu0 0
    %482 = vmatpush1.bf16.xpose.msra.mxu0 %v467
    %483 = vmatprep.subr.bf16.mxu0 0
    %484 = vmatpush1.bf16.xpose.msra.mxu0 %v464
    %485 = vmatprep.subr.bf16.mxu0 0
    %486 = vmatpush2.bf16.xpose.msra.mxu0 0
    %487 = vmatprep.subr.bf16.mxu0 0
    %488 = vmatpush2.bf16.xpose.msra.mxu0 0
    %489 = vmatprep.subr.bf16.mxu0 0
    %490 = vmatpush2.bf16.xpose.msra.mxu0 0
    %491 = vmatprep.subr.bf16.mxu0 0
    %492 = vmatpush2.bf16.xpose.msra.mxu0 0
    %493 = vmatprep.subr.bf16.mxu0 0
    %494 = vmatpush2.bf16.xpose.msra.mxu0 0
    %495 = vmatprep.subr.bf16.mxu0 0
    %496 = vmatpush2.bf16.xpose.msra.mxu0 0
    %497 = vmatprep.subr.bf16.mxu0 0
    %498 = vmatpush2.bf16.xpose.msra.mxu0 0
    %499 = vmatprep.subr.bf16.mxu0 0
    %500 = vmatpush2.bf16.xpose.msra.mxu0 0
    %501 = vmatprep.mubr.bf16.mxu0 0
    %502 = vmatmul.mubr.bf16.gmra.mxu0 %v458
    %v503 = vpop.f32.mrf.mxu0
    %v504 = vadd.f32 0.0, %v503
    %v505 = vpop.f32.mrf.mxu0
    %v506 = vpop.f32.mrf.mxu0
    %v507 = vadd.f32 0.0, %v506
    %v508 = vpop.f32.mrf.mxu0
    %509 = vmatprep.mubr.bf16.mxu0 0
    %510 = vmatmul.mubr.bf16.gmra.mxu0 %v461
    %v511 = vpop.f32.mrf.mxu0
    %v512 = vadd.f32 0.0, %v511
    %v513 = vpop.f32.mrf.mxu0
    %v514 = vpop.f32.mrf.mxu0
    %v515 = vpop.f32.mrf.mxu0
    %516 = vdwg.mxu0
    %517 = vrot.lane.b32.xlu0 %v382, 96
    %v518 = vpop.permute.xlu0 %517
    %519 = vrot.lane.b32.xlu0 %v384, 96
    %v520 = vpop.permute.xlu0 %519
    %v522 = vsel %vm174, %v382, 0
    %v525 = vsel %vm174, %v384, 0
    %v528 = vsel %vm174, %v518, 0
    %v531 = vsel %vm174, %v520, 0
    %533 = vmatprep.subr.bf16.mxu0 0
    %534 = vmatpush1.bf16.xpose.msra.mxu0 0
    %535 = vmatprep.subr.bf16.mxu0 0
    %536 = vmatpush1.bf16.xpose.msra.mxu0 0
    %537 = vmatprep.subr.bf16.mxu0 0
    %538 = vmatpush1.bf16.xpose.msra.mxu0 0
    %539 = vmatprep.subr.bf16.mxu0 0
    %540 = vmatpush1.bf16.xpose.msra.mxu0 0
    %541 = vmatprep.subr.bf16.mxu0 0
    %542 = vmatpush1.bf16.xpose.msra.mxu0 0
    %543 = vmatprep.subr.bf16.mxu0 0
    %544 = vmatpush1.bf16.xpose.msra.mxu0 0
    %545 = vmatprep.subr.bf16.mxu0 0
    %546 = vmatpush1.bf16.xpose.msra.mxu0 %v531
    %547 = vmatprep.subr.bf16.mxu0 0
    %548 = vmatpush1.bf16.xpose.msra.mxu0 %v528
    %549 = vmatprep.subr.bf16.mxu0 0
    %550 = vmatpush2.bf16.xpose.msra.mxu0 0
    %551 = vmatprep.subr.bf16.mxu0 0
    %552 = vmatpush2.bf16.xpose.msra.mxu0 0
    %553 = vmatprep.subr.bf16.mxu0 0
    %554 = vmatpush2.bf16.xpose.msra.mxu0 0
    %555 = vmatprep.subr.bf16.mxu0 0
    %556 = vmatpush2.bf16.xpose.msra.mxu0 0
    %557 = vmatprep.subr.bf16.mxu0 0
    %558 = vmatpush2.bf16.xpose.msra.mxu0 0
    %559 = vmatprep.subr.bf16.mxu0 0
    %560 = vmatpush2.bf16.xpose.msra.mxu0 0
    %561 = vmatprep.subr.bf16.mxu0 0
    %562 = vmatpush2.bf16.xpose.msra.mxu0 0
    %563 = vmatprep.subr.bf16.mxu0 0
    %564 = vmatpush2.bf16.xpose.msra.mxu0 0
    %565 = vmatprep.mubr.bf16.mxu0 0
    %566 = vmatmul.mubr.bf16.gmra.mxu0 %v522
    %v567 = vpop.f32.mrf.mxu0
    %v568 = vadd.f32 0.0, %v567
    %v569 = vpop.f32.mrf.mxu0
    %v570 = vpop.f32.mrf.mxu0
    %v571 = vadd.f32 0.0, %v570
    %v572 = vpop.f32.mrf.mxu0
    %573 = vmatprep.mubr.bf16.mxu0 0
    %574 = vmatmul.mubr.bf16.gmra.mxu0 %v525
    %v575 = vpop.f32.mrf.mxu0
    %v576 = vadd.f32 0.0, %v575
    %v577 = vpop.f32.mrf.mxu0
    %v578 = vpop.f32.mrf.mxu0
    %v579 = vpop.f32.mrf.mxu0
    %580 = vdwg.mxu0
    %581 = vrot.lane.b32.xlu0 %v386, 96
    %v582 = vpop.permute.xlu0 %581
    %583 = vrot.lane.b32.xlu0 %v388, 96
    %v584 = vpop.permute.xlu0 %583
    %v586 = vsel %vm174, %v386, 0
    %v589 = vsel %vm174, %v388, 0
    %v592 = vsel %vm174, %v582, 0
    %v595 = vsel %vm174, %v584, 0
    %597 = vmatprep.subr.bf16.mxu0 0
    %598 = vmatpush1.bf16.xpose.msra.mxu0 0
    %599 = vmatprep.subr.bf16.mxu0 0
    %600 = vmatpush1.bf16.xpose.msra.mxu0 0
    %601 = vmatprep.subr.bf16.mxu0 0
    %602 = vmatpush1.bf16.xpose.msra.mxu0 0
    %603 = vmatprep.subr.bf16.mxu0 0
    %604 = vmatpush1.bf16.xpose.msra.mxu0 0
    %605 = vmatprep.subr.bf16.mxu0 0
    %606 = vmatpush1.bf16.xpose.msra.mxu0 0
    %607 = vmatprep.subr.bf16.mxu0 0
    %608 = vmatpush1.bf16.xpose.msra.mxu0 0
    %609 = vmatprep.subr.bf16.mxu0 0
    %610 = vmatpush1.bf16.xpose.msra.mxu0 %v595
    %611 = vmatprep.subr.bf16.mxu0 0
    %612 = vmatpush1.bf16.xpose.msra.mxu0 %v592
    %613 = vmatprep.subr.bf16.mxu0 0
    %614 = vmatpush2.bf16.xpose.msra.mxu0 0
    %615 = vmatprep.subr.bf16.mxu0 0
    %616 = vmatpush2.bf16.xpose.msra.mxu0 0
    %617 = vmatprep.subr.bf16.mxu0 0
    %618 = vmatpush2.bf16.xpose.msra.mxu0 0
    %619 = vmatprep.subr.bf16.mxu0 0
    %620 = vmatpush2.bf16.xpose.msra.mxu0 0
    %621 = vmatprep.subr.bf16.mxu0 0
    %622 = vmatpush2.bf16.xpose.msra.mxu0 0
    %623 = vmatprep.subr.bf16.mxu0 0
    %624 = vmatpush2.bf16.xpose.msra.mxu0 0
    %625 = vmatprep.subr.bf16.mxu0 0
    %626 = vmatpush2.bf16.xpose.msra.mxu0 0
    %627 = vmatprep.subr.bf16.mxu0 0
    %628 = vmatpush2.bf16.xpose.msra.mxu0 0
    %629 = vmatprep.mubr.bf16.mxu0 0
    %630 = vmatmul.mubr.bf16.gmra.mxu0 %v586
    %v631 = vpop.f32.mrf.mxu0
    %v632 = vadd.f32 0.0, %v631
    %v633 = vpop.f32.mrf.mxu0
    %v634 = vpop.f32.mrf.mxu0
    %v635 = vadd.f32 0.0, %v634
    %v636 = vpop.f32.mrf.mxu0
    %637 = vmatprep.mubr.bf16.mxu0 0
    %638 = vmatmul.mubr.bf16.gmra.mxu0 %v589
    %v639 = vpop.f32.mrf.mxu0
    %v640 = vadd.f32 0.0, %v639
    %v641 = vpop.f32.mrf.mxu0
    %v642 = vpop.f32.mrf.mxu0
    %v643 = vpop.f32.mrf.mxu0
    %644 = vdwg.mxu0
    %v645 = vmul.f32 %v440, 0.35355338
    %v646 = vmul.f32 %v443, 0.35355338
    %v647 = vmul.f32 %v448, 0.35355338
    %v648 = vmul.f32 %v504, 0.35355338
    %v649 = vmul.f32 %v507, 0.35355338
    %v650 = vmul.f32 %v512, 0.35355338
    %v651 = vmul.f32 %v568, 0.35355338
    %v652 = vmul.f32 %v571, 0.35355338
    %v653 = vmul.f32 %v576, 0.35355338
    %v654 = vmul.f32 %v632, 0.35355338
    %v655 = vmul.f32 %v635, 0.35355338
    %v656 = vmul.f32 %v640, 0.35355338
    %v657 = vadd.f32 %v645, %v290
    %v658 = vadd.f32 %v646, %v291
    %v659 = vadd.f32 %v647, %v292
    %v660 = vadd.f32 %v648, %v290
    %v661 = vadd.f32 %v649, %v291
    %v662 = vadd.f32 %v650, %v292
    %v663 = vadd.f32 %v651, %v290
    %v664 = vadd.f32 %v652, %v291
    %v665 = vadd.f32 %v653, %v292
    %v666 = vadd.f32 %v654, %v290
    %v667 = vadd.f32 %v655, %v291
    %v668 = vadd.f32 %v656, %v292
    %vm669 = vcmask 195584
    %v670 = vsel %vm669, %v657, -inf
    %671 = vmax.xlane.f32.xlu0 %v670
    %v672 = vpop.xlane.xlu0 %671
    %v673 = vsel %vm669, %v658, -inf
    %674 = vmax.xlane.f32.xlu0 %v673
    %v675 = vpop.xlane.xlu0 %674
    %v676 = vsel %vm669, %v659, -inf
    %677 = vmax.xlane.f32.xlu0 %v676
    %v678 = vpop.xlane.xlu0 %677
    %v679 = vsel %vm669, %v660, -inf
    %680 = vmax.xlane.f32.xlu0 %v679
    %v681 = vpop.xlane.xlu0 %680
    %v682 = vsel %vm669, %v661, -inf
    %683 = vmax.xlane.f32.xlu0 %v682
    %v684 = vpop.xlane.xlu0 %683
    %v685 = vsel %vm669, %v662, -inf
    %686 = vmax.xlane.f32.xlu0 %v685
    %v687 = vpop.xlane.xlu0 %686
    %v688 = vsel %vm669, %v663, -inf
    %689 = vmax.xlane.f32.xlu0 %v688
    %v690 = vpop.xlane.xlu0 %689
    %v691 = vsel %vm669, %v664, -inf
    %692 = vmax.xlane.f32.xlu0 %v691
    %v693 = vpop.xlane.xlu0 %692
    %v694 = vsel %vm669, %v665, -inf
    %695 = vmax.xlane.f32.xlu0 %v694
    %v696 = vpop.xlane.xlu0 %695
    %v697 = vsel %vm669, %v666, -inf
    %698 = vmax.xlane.f32.xlu0 %v697
    %v699 = vpop.xlane.xlu0 %698
    %v700 = vsel %vm669, %v667, -inf
    %701 = vmax.xlane.f32.xlu0 %v700
    %v702 = vpop.xlane.xlu0 %701
    %v703 = vsel %vm669, %v668, -inf
    %704 = vmax.xlane.f32.xlu0 %v703
    %v705 = vpop.xlane.xlu0 %704
    %v706 = vsub.f32 %v657, %v672
    %v707 = vsub.f32 %v658, %v675
    %v708 = vsub.f32 %v659, %v678
    %v709 = vsub.f32 %v660, %v681
    %v710 = vsub.f32 %v661, %v684
    %v711 = vsub.f32 %v662, %v687
    %v712 = vsub.f32 %v663, %v690
    %v713 = vsub.f32 %v664, %v693
    %v714 = vsub.f32 %v665, %v696
    %v715 = vsub.f32 %v666, %v699
    %v716 = vsub.f32 %v667, %v702
    %v717 = vsub.f32 %v668, %v705
    %v718 = vmul.f32 %v706, 1.442695
    %v719 = vpow.pop %v718
    %v720 = vmul.f32 %v707, 1.442695
    %v721 = vpow.pop %v720
    %v722 = vmul.f32 %v708, 1.442695
    %v723 = vpow.pop %v722
    %v724 = vmul.f32 %v709, 1.442695
    %v725 = vpow.pop %v724
    %v726 = vmul.f32 %v710, 1.442695
    %v727 = vpow.pop %v726
    %v728 = vmul.f32 %v711, 1.442695
    %v729 = vpow.pop %v728
    %v730 = vmul.f32 %v712, 1.442695
    %v731 = vpow.pop %v730
    %v732 = vmul.f32 %v713, 1.442695
    %v733 = vpow.pop %v732
    %v734 = vmul.f32 %v714, 1.442695
    %v735 = vpow.pop %v734
    %v736 = vmul.f32 %v715, 1.442695
    %v737 = vpow.pop %v736
    %v738 = vmul.f32 %v716, 1.442695
    %v739 = vpow.pop %v738
    %v740 = vmul.f32 %v717, 1.442695
    %v741 = vpow.pop %v740
    %v742 = vsel %vm669, %v719, 0.0
    %743 = vadd.xlane.f32.xlu0 %v742
    %v744 = vpop.xlane.xlu0 %743
    %v745 = vsel %vm669, %v721, 0.0
    %746 = vadd.xlane.f32.xlu0 %v745
    %v747 = vpop.xlane.xlu0 %746
    %v748 = vsel %vm669, %v723, 0.0
    %749 = vadd.xlane.f32.xlu0 %v748
    %v750 = vpop.xlane.xlu0 %749
    %v751 = vsel %vm669, %v725, 0.0
    %752 = vadd.xlane.f32.xlu0 %v751
    %v753 = vpop.xlane.xlu0 %752
    %v754 = vsel %vm669, %v727, 0.0
    %755 = vadd.xlane.f32.xlu0 %v754
    %v756 = vpop.xlane.xlu0 %755
    %v757 = vsel %vm669, %v729, 0.0
    %758 = vadd.xlane.f32.xlu0 %v757
    %v759 = vpop.xlane.xlu0 %758
    %v760 = vsel %vm669, %v731, 0.0
    %761 = vadd.xlane.f32.xlu0 %v760
    %v762 = vpop.xlane.xlu0 %761
    %v763 = vsel %vm669, %v733, 0.0
    %764 = vadd.xlane.f32.xlu0 %v763
    %v765 = vpop.xlane.xlu0 %764
    %v766 = vsel %vm669, %v735, 0.0
    %767 = vadd.xlane.f32.xlu0 %v766
    %v768 = vpop.xlane.xlu0 %767
    %v769 = vsel %vm669, %v737, 0.0
    %770 = vadd.xlane.f32.xlu0 %v769
    %v771 = vpop.xlane.xlu0 %770
    %v772 = vsel %vm669, %v739, 0.0
    %773 = vadd.xlane.f32.xlu0 %v772
    %v774 = vpop.xlane.xlu0 %773
    %v775 = vsel %vm669, %v741, 0.0
    %776 = vadd.xlane.f32.xlu0 %v775
    %v777 = vpop.xlane.xlu0 %776
    %v778 = vrcp.pop %v744
    %v779 = vrcp.pop %v747
    %v780 = vrcp.pop %v750
    %v781 = vrcp.pop %v753
    %v782 = vrcp.pop %v756
    %v783 = vrcp.pop %v759
    %v784 = vrcp.pop %v762
    %v785 = vrcp.pop %v765
    %v786 = vrcp.pop %v768
    %v787 = vrcp.pop %v771
    %v788 = vrcp.pop %v774
    %v789 = vrcp.pop %v777
    %v790 = vmul.f32 %v719, %v778
    %v791 = vmul.f32 %v721, %v779
    %v792 = vmul.f32 %v723, %v780
    %v793 = vmul.f32 %v725, %v781
    %v794 = vmul.f32 %v727, %v782
    %v795 = vmul.f32 %v729, %v783
    %v796 = vmul.f32 %v731, %v784
    %v797 = vmul.f32 %v733, %v785
    %v798 = vmul.f32 %v735, %v786
    %v799 = vmul.f32 %v737, %v787
    %v800 = vmul.f32 %v739, %v788
    %v801 = vmul.f32 %v741, %v789
    %v802 = vpack.c.bf16 %v791, %v790
    %v803 = vpack.c.bf16 %v792, %v792
    %v804 = vpack.c.bf16 %v794, %v793
    %v805 = vpack.c.bf16 %v795, %v795
    %v806 = vpack.c.bf16 %v797, %v796
    %v807 = vpack.c.bf16 %v798, %v798
    %v808 = vpack.c.bf16 %v800, %v799
    %v809 = vpack.c.bf16 %v801, %v801
    %810 = vrot.lane.b32.xlu0 %v373, 64
    %v811 = vpop.permute.xlu0 %810
    %812 = vrot.lane.b32.xlu0 %v374, 64
    %v813 = vpop.permute.xlu0 %812
    %v816 = vsel %vm669, %v802, 0
    %v819 = vsel %vm669, %v803, 0
    %v822 = vsel %vm181, %v813, 0
    %824 = vmatprep.subr.bf16.mxu0 0
    %825 = vmatpush1.bf16.msra.mxu0 0
    %826 = vmatprep.subr.bf16.mxu0 0
    %827 = vmatpush1.bf16.msra.mxu0 0
    %828 = vmatprep.subr.bf16.mxu0 0
    %829 = vmatpush1.bf16.msra.mxu0 0
    %830 = vmatprep.subr.bf16.mxu0 0
    %831 = vmatpush1.bf16.msra.mxu0 0
    %832 = vmatprep.subr.bf16.mxu0 0
    %833 = vmatpush1.bf16.msra.mxu0 0
    %834 = vmatprep.subr.bf16.mxu0 0
    %835 = vmatpush1.bf16.msra.mxu0 0
    %836 = vmatprep.subr.bf16.mxu0 0
    %837 = vmatpush1.bf16.msra.mxu0 %v822
    %838 = vmatprep.subr.bf16.mxu0 0
    %839 = vmatpush1.bf16.msra.mxu0 %v811
    %840 = vmatprep.subr.bf16.mxu0 0
    %841 = vmatpush2.bf16.msra.mxu0 0
    %842 = vmatprep.subr.bf16.mxu0 0
    %843 = vmatpush2.bf16.msra.mxu0 0
    %844 = vmatprep.subr.bf16.mxu0 0
    %845 = vmatpush2.bf16.msra.mxu0 0
    %846 = vmatprep.subr.bf16.mxu0 0
    %847 = vmatpush2.bf16.msra.mxu0 0
    %848 = vmatprep.subr.bf16.mxu0 0
    %849 = vmatpush2.bf16.msra.mxu0 0
    %850 = vmatprep.subr.bf16.mxu0 0
    %851 = vmatpush2.bf16.msra.mxu0 0
    %852 = vmatprep.subr.bf16.mxu0 0
    %853 = vmatpush2.bf16.msra.mxu0 0
    %854 = vmatprep.subr.bf16.mxu0 0
    %855 = vmatpush2.bf16.msra.mxu0 0
    %856 = vmatprep.mubr.bf16.mxu0 0
    %857 = vmatmul.mubr.bf16.gmra.mxu0 %v816
    %v858 = vpop.f32.mrf.mxu0
    %v859 = vadd.f32 0.0, %v858
    %v860 = vpop.f32.mrf.mxu0
    %v861 = vpop.f32.mrf.mxu0
    %v862 = vadd.f32 0.0, %v861
    %v863 = vpop.f32.mrf.mxu0
    %864 = vmatprep.mubr.bf16.mxu0 0
    %865 = vmatmul.mubr.bf16.gmra.mxu0 %v819
    %v866 = vpop.f32.mrf.mxu0
    %v867 = vadd.f32 0.0, %v866
    %v868 = vpop.f32.mrf.mxu0
    %v869 = vpop.f32.mrf.mxu0
    %v870 = vpop.f32.mrf.mxu0
    %871 = vdwg.mxu0
    %872 = vrot.lane.b32.xlu0 %v378, 64
    %v873 = vpop.permute.xlu0 %872
    %874 = vrot.lane.b32.xlu0 %v380, 64
    %v875 = vpop.permute.xlu0 %874
    %v878 = vsel %vm669, %v804, 0
    %v881 = vsel %vm669, %v805, 0
    %v884 = vsel %vm181, %v875, 0
    %886 = vmatprep.subr.bf16.mxu0 0
    %887 = vmatpush1.bf16.msra.mxu0 0
    %888 = vmatprep.subr.bf16.mxu0 0
    %889 = vmatpush1.bf16.msra.mxu0 0
    %890 = vmatprep.subr.bf16.mxu0 0
    %891 = vmatpush1.bf16.msra.mxu0 0
    %892 = vmatprep.subr.bf16.mxu0 0
    %893 = vmatpush1.bf16.msra.mxu0 0
    %894 = vmatprep.subr.bf16.mxu0 0
    %895 = vmatpush1.bf16.msra.mxu0 0
    %896 = vmatprep.subr.bf16.mxu0 0
    %897 = vmatpush1.bf16.msra.mxu0 0
    %898 = vmatprep.subr.bf16.mxu0 0
    %899 = vmatpush1.bf16.msra.mxu0 %v884
    %900 = vmatprep.subr.bf16.mxu0 0
    %901 = vmatpush1.bf16.msra.mxu0 %v873
    %902 = vmatprep.subr.bf16.mxu0 0
    %903 = vmatpush2.bf16.msra.mxu0 0
    %904 = vmatprep.subr.bf16.mxu0 0
    %905 = vmatpush2.bf16.msra.mxu0 0
    %906 = vmatprep.subr.bf16.mxu0 0
    %907 = vmatpush2.bf16.msra.mxu0 0
    %908 = vmatprep.subr.bf16.mxu0 0
    %909 = vmatpush2.bf16.msra.mxu0 0
    %910 = vmatprep.subr.bf16.mxu0 0
    %911 = vmatpush2.bf16.msra.mxu0 0
    %912 = vmatprep.subr.bf16.mxu0 0
    %913 = vmatpush2.bf16.msra.mxu0 0
    %914 = vmatprep.subr.bf16.mxu0 0
    %915 = vmatpush2.bf16.msra.mxu0 0
    %916 = vmatprep.subr.bf16.mxu0 0
    %917 = vmatpush2.bf16.msra.mxu0 0
    %918 = vmatprep.mubr.bf16.mxu0 0
    %919 = vmatmul.mubr.bf16.gmra.mxu0 %v878
    %v920 = vpop.f32.mrf.mxu0
    %v921 = vadd.f32 0.0, %v920
    %v922 = vpop.f32.mrf.mxu0
    %v923 = vpop.f32.mrf.mxu0
    %v924 = vadd.f32 0.0, %v923
    %v925 = vpop.f32.mrf.mxu0
    %926 = vmatprep.mubr.bf16.mxu0 0
    %927 = vmatmul.mubr.bf16.gmra.mxu0 %v881
    %v928 = vpop.f32.mrf.mxu0
    %v929 = vadd.f32 0.0, %v928
    %v930 = vpop.f32.mrf.mxu0
    %v931 = vpop.f32.mrf.mxu0
    %v932 = vpop.f32.mrf.mxu0
    %933 = vdwg.mxu0
    %934 = vrot.lane.b32.xlu0 %v382, 64
    %v935 = vpop.permute.xlu0 %934
    %936 = vrot.lane.b32.xlu0 %v384, 64
    %v937 = vpop.permute.xlu0 %936
    %v940 = vsel %vm669, %v806, 0
    %v943 = vsel %vm669, %v807, 0
    %v946 = vsel %vm181, %v937, 0
    %948 = vmatprep.subr.bf16.mxu0 0
    %949 = vmatpush1.bf16.msra.mxu0 0
    %950 = vmatprep.subr.bf16.mxu0 0
    %951 = vmatpush1.bf16.msra.mxu0 0
    %952 = vmatprep.subr.bf16.mxu0 0
    %953 = vmatpush1.bf16.msra.mxu0 0
    %954 = vmatprep.subr.bf16.mxu0 0
    %955 = vmatpush1.bf16.msra.mxu0 0
    %956 = vmatprep.subr.bf16.mxu0 0
    %957 = vmatpush1.bf16.msra.mxu0 0
    %958 = vmatprep.subr.bf16.mxu0 0
    %959 = vmatpush1.bf16.msra.mxu0 0
    %960 = vmatprep.subr.bf16.mxu0 0
    %961 = vmatpush1.bf16.msra.mxu0 %v946
    %962 = vmatprep.subr.bf16.mxu0 0
    %963 = vmatpush1.bf16.msra.mxu0 %v935
    %964 = vmatprep.subr.bf16.mxu0 0
    %965 = vmatpush2.bf16.msra.mxu0 0
    %966 = vmatprep.subr.bf16.mxu0 0
    %967 = vmatpush2.bf16.msra.mxu0 0
    %968 = vmatprep.subr.bf16.mxu0 0
    %969 = vmatpush2.bf16.msra.mxu0 0
    %970 = vmatprep.subr.bf16.mxu0 0
    %971 = vmatpush2.bf16.msra.mxu0 0
    %972 = vmatprep.subr.bf16.mxu0 0
    %973 = vmatpush2.bf16.msra.mxu0 0
    %974 = vmatprep.subr.bf16.mxu0 0
    %975 = vmatpush2.bf16.msra.mxu0 0
    %976 = vmatprep.subr.bf16.mxu0 0
    %977 = vmatpush2.bf16.msra.mxu0 0
    %978 = vmatprep.subr.bf16.mxu0 0
    %979 = vmatpush2.bf16.msra.mxu0 0
    %980 = vmatprep.mubr.bf16.mxu0 0
    %981 = vmatmul.mubr.bf16.gmra.mxu0 %v940
    %v982 = vpop.f32.mrf.mxu0
    %v983 = vadd.f32 0.0, %v982
    %v984 = vpop.f32.mrf.mxu0
    %v985 = vpop.f32.mrf.mxu0
    %v986 = vadd.f32 0.0, %v985
    %v987 = vpop.f32.mrf.mxu0
    %988 = vmatprep.mubr.bf16.mxu0 0
    %989 = vmatmul.mubr.bf16.gmra.mxu0 %v943
    %v990 = vpop.f32.mrf.mxu0
    %v991 = vadd.f32 0.0, %v990
    %v992 = vpop.f32.mrf.mxu0
    %v993 = vpop.f32.mrf.mxu0
    %v994 = vpop.f32.mrf.mxu0
    %995 = vdwg.mxu0
    %996 = vrot.lane.b32.xlu0 %v386, 64
    %v997 = vpop.permute.xlu0 %996
    %998 = vrot.lane.b32.xlu0 %v388, 64
    %v999 = vpop.permute.xlu0 %998
    %v1002 = vsel %vm669, %v808, 0
    %v1005 = vsel %vm669, %v809, 0
    %v1008 = vsel %vm181, %v999, 0
    %1010 = vmatprep.subr.bf16.mxu0 0
    %1011 = vmatpush1.bf16.msra.mxu0 0
    %1012 = vmatprep.subr.bf16.mxu0 0
    %1013 = vmatpush1.bf16.msra.mxu0 0
    %1014 = vmatprep.subr.bf16.mxu0 0
    %1015 = vmatpush1.bf16.msra.mxu0 0
    %1016 = vmatprep.subr.bf16.mxu0 0
    %1017 = vmatpush1.bf16.msra.mxu0 0
    %1018 = vmatprep.subr.bf16.mxu0 0
    %1019 = vmatpush1.bf16.msra.mxu0 0
    %1020 = vmatprep.subr.bf16.mxu0 0
    %1021 = vmatpush1.bf16.msra.mxu0 0
    %1022 = vmatprep.subr.bf16.mxu0 0
    %1023 = vmatpush1.bf16.msra.mxu0 %v1008
    %1024 = vmatprep.subr.bf16.mxu0 0
    %1025 = vmatpush1.bf16.msra.mxu0 %v997
    %1026 = vmatprep.subr.bf16.mxu0 0
    %1027 = vmatpush2.bf16.msra.mxu0 0
    %1028 = vmatprep.subr.bf16.mxu0 0
    %1029 = vmatpush2.bf16.msra.mxu0 0
    %1030 = vmatprep.subr.bf16.mxu0 0
    %1031 = vmatpush2.bf16.msra.mxu0 0
    %1032 = vmatprep.subr.bf16.mxu0 0
    %1033 = vmatpush2.bf16.msra.mxu0 0
    %1034 = vmatprep.subr.bf16.mxu0 0
    %1035 = vmatpush2.bf16.msra.mxu0 0
    %1036 = vmatprep.subr.bf16.mxu0 0
    %1037 = vmatpush2.bf16.msra.mxu0 0
    %1038 = vmatprep.subr.bf16.mxu0 0
    %1039 = vmatpush2.bf16.msra.mxu0 0
    %1040 = vmatprep.subr.bf16.mxu0 0
    %1041 = vmatpush2.bf16.msra.mxu0 0
    %1042 = vmatprep.mubr.bf16.mxu0 0
    %1043 = vmatmul.mubr.bf16.gmra.mxu0 %v1002
    %v1044 = vpop.f32.mrf.mxu0
    %v1045 = vadd.f32 0.0, %v1044
    %v1046 = vpop.f32.mrf.mxu0
    %v1047 = vpop.f32.mrf.mxu0
    %v1048 = vadd.f32 0.0, %v1047
    %v1049 = vpop.f32.mrf.mxu0
    %1050 = vmatprep.mubr.bf16.mxu0 0
    %1051 = vmatmul.mubr.bf16.gmra.mxu0 %v1005
    %v1052 = vpop.f32.mrf.mxu0
    %v1053 = vadd.f32 0.0, %v1052
    %v1054 = vpop.f32.mrf.mxu0
    %v1055 = vpop.f32.mrf.mxu0
    %v1056 = vpop.f32.mrf.mxu0
    %1057 = vdwg.mxu0
    %v1058 = vld [vmem:[%s7] sm:$0xf]
    %v1059 = vld [vmem:[%s7 + $0x4] sm:$0xf]
    %v1060 = vld [vmem:[%s7 + $0x8] sm:$0xf]
    %v1061 = vld [vmem:[%s7 + $0xc] sm:$0xf]
    %v1062 = vpack.c.bf16 %v862, %v859
    %v1063 = vpack.c.bf16 %v867, %v867
    %v1064 = vpack.c.bf16 %v924, %v921
    %v1065 = vpack.c.bf16 %v929, %v929
    %v1066 = vpack.c.bf16 %v986, %v983
    %v1067 = vpack.c.bf16 %v991, %v991
    %v1068 = vpack.c.bf16 %v1048, %v1045
    %v1069 = vpack.c.bf16 %v1053, %v1053
    %v1071 = vsel %vm174, %v1062, 0
    %v1074 = vsel %vm174, %v1063, 0
    %v1077 = vsel %vm181, %v1058, 0
    %1079 = vmatprep.subr.bf16.mxu0 0
    %1080 = vmatpush1.bf16.msra.mxu0 0
    %1081 = vmatprep.subr.bf16.mxu0 0
    %1082 = vmatpush1.bf16.msra.mxu0 0
    %1083 = vmatprep.subr.bf16.mxu0 0
    %1084 = vmatpush1.bf16.msra.mxu0 0
    %1085 = vmatprep.subr.bf16.mxu0 0
    %1086 = vmatpush1.bf16.msra.mxu0 0
    %1087 = vmatprep.subr.bf16.mxu0 0
    %1088 = vmatpush1.bf16.msra.mxu0 0
    %1089 = vmatprep.subr.bf16.mxu0 0
    %1090 = vmatpush1.bf16.msra.mxu0 0
    %1091 = vmatprep.subr.bf16.mxu0 0
    %1092 = vmatpush1.bf16.msra.mxu0 0
    %1093 = vmatprep.subr.bf16.mxu0 0
    %1094 = vmatpush1.bf16.msra.mxu0 %v1077
    %1095 = vmatprep.subr.bf16.mxu0 0
    %1096 = vmatpush2.bf16.msra.mxu0 0
    %1097 = vmatprep.subr.bf16.mxu0 0
    %1098 = vmatpush2.bf16.msra.mxu0 0
    %1099 = vmatprep.subr.bf16.mxu0 0
    %1100 = vmatpush2.bf16.msra.mxu0 0
    %1101 = vmatprep.subr.bf16.mxu0 0
    %1102 = vmatpush2.bf16.msra.mxu0 0
    %1103 = vmatprep.subr.bf16.mxu0 0
    %1104 = vmatpush2.bf16.msra.mxu0 0
    %1105 = vmatprep.subr.bf16.mxu0 0
    %1106 = vmatpush2.bf16.msra.mxu0 0
    %1107 = vmatprep.subr.bf16.mxu0 0
    %1108 = vmatpush2.bf16.msra.mxu0 0
    %1109 = vmatprep.subr.bf16.mxu0 0
    %1110 = vmatpush2.bf16.msra.mxu0 0
    %1111 = vmatprep.mubr.bf16.mxu0 0
    %1112 = vmatmul.mubr.bf16.gmra.mxu0 %v1071
    %v1113 = vpop.f32.mrf.mxu0
    %v1114 = vadd.f32 0.0, %v1113
    %v1115 = vpop.f32.mrf.mxu0
    %v1116 = vpop.f32.mrf.mxu0
    %v1117 = vadd.f32 0.0, %v1116
    %v1118 = vpop.f32.mrf.mxu0
    %1119 = vmatprep.mubr.bf16.mxu0 0
    %1120 = vmatmul.mubr.bf16.gmra.mxu0 %v1074
    %v1121 = vpop.f32.mrf.mxu0
    %v1122 = vadd.f32 0.0, %v1121
    %v1123 = vpop.f32.mrf.mxu0
    %v1124 = vpop.f32.mrf.mxu0
    %v1125 = vpop.f32.mrf.mxu0
    %1126 = vdwg.mxu0
    %v1128 = vsel %vm174, %v1064, 0
    %v1131 = vsel %vm174, %v1065, 0
    %v1134 = vsel %vm181, %v1059, 0
    %1136 = vmatprep.subr.bf16.mxu0 0
    %1137 = vmatpush1.bf16.msra.mxu0 0
    %1138 = vmatprep.subr.bf16.mxu0 0
    %1139 = vmatpush1.bf16.msra.mxu0 0
    %1140 = vmatprep.subr.bf16.mxu0 0
    %1141 = vmatpush1.bf16.msra.mxu0 0
    %1142 = vmatprep.subr.bf16.mxu0 0
    %1143 = vmatpush1.bf16.msra.mxu0 0
    %1144 = vmatprep.subr.bf16.mxu0 0
    %1145 = vmatpush1.bf16.msra.mxu0 0
    %1146 = vmatprep.subr.bf16.mxu0 0
    %1147 = vmatpush1.bf16.msra.mxu0 0
    %1148 = vmatprep.subr.bf16.mxu0 0
    %1149 = vmatpush1.bf16.msra.mxu0 0
    %1150 = vmatprep.subr.bf16.mxu0 0
    %1151 = vmatpush1.bf16.msra.mxu0 %v1134
    %1152 = vmatprep.subr.bf16.mxu0 0
    %1153 = vmatpush2.bf16.msra.mxu0 0
    %1154 = vmatprep.subr.bf16.mxu0 0
    %1155 = vmatpush2.bf16.msra.mxu0 0
    %1156 = vmatprep.subr.bf16.mxu0 0
    %1157 = vmatpush2.bf16.msra.mxu0 0
    %1158 = vmatprep.subr.bf16.mxu0 0
    %1159 = vmatpush2.bf16.msra.mxu0 0
    %1160 = vmatprep.subr.bf16.mxu0 0
    %1161 = vmatpush2.bf16.msra.mxu0 0
    %1162 = vmatprep.subr.bf16.mxu0 0
    %1163 = vmatpush2.bf16.msra.mxu0 0
    %1164 = vmatprep.subr.bf16.mxu0 0
    %1165 = vmatpush2.bf16.msra.mxu0 0
    %1166 = vmatprep.subr.bf16.mxu0 0
    %1167 = vmatpush2.bf16.msra.mxu0 0
    %1168 = vmatprep.mubr.bf16.mxu0 0
    %1169 = vmatmul.mubr.bf16.gmra.mxu0 %v1128
    %v1170 = vpop.f32.mrf.mxu0
    %v1171 = vadd.f32 0.0, %v1170
    %v1172 = vpop.f32.mrf.mxu0
    %v1173 = vpop.f32.mrf.mxu0
    %v1174 = vadd.f32 0.0, %v1173
    %v1175 = vpop.f32.mrf.mxu0
    %1176 = vmatprep.mubr.bf16.mxu0 0
    %1177 = vmatmul.mubr.bf16.gmra.mxu0 %v1131
    %v1178 = vpop.f32.mrf.mxu0
    %v1179 = vadd.f32 0.0, %v1178
    %v1180 = vpop.f32.mrf.mxu0
    %v1181 = vpop.f32.mrf.mxu0
    %v1182 = vpop.f32.mrf.mxu0
    %1183 = vdwg.mxu0
    %v1185 = vsel %vm174, %v1066, 0
    %v1188 = vsel %vm174, %v1067, 0
    %v1191 = vsel %vm181, %v1060, 0
    %1193 = vmatprep.subr.bf16.mxu0 0
    %1194 = vmatpush1.bf16.msra.mxu0 0
    %1195 = vmatprep.subr.bf16.mxu0 0
    %1196 = vmatpush1.bf16.msra.mxu0 0
    %1197 = vmatprep.subr.bf16.mxu0 0
    %1198 = vmatpush1.bf16.msra.mxu0 0
    %1199 = vmatprep.subr.bf16.mxu0 0
    %1200 = vmatpush1.bf16.msra.mxu0 0
    %1201 = vmatprep.subr.bf16.mxu0 0
    %1202 = vmatpush1.bf16.msra.mxu0 0
    %1203 = vmatprep.subr.bf16.mxu0 0
    %1204 = vmatpush1.bf16.msra.mxu0 0
    %1205 = vmatprep.subr.bf16.mxu0 0
    %1206 = vmatpush1.bf16.msra.mxu0 0
    %1207 = vmatprep.subr.bf16.mxu0 0
    %1208 = vmatpush1.bf16.msra.mxu0 %v1191
    %1209 = vmatprep.subr.bf16.mxu0 0
    %1210 = vmatpush2.bf16.msra.mxu0 0
    %1211 = vmatprep.subr.bf16.mxu0 0
    %1212 = vmatpush2.bf16.msra.mxu0 0
    %1213 = vmatprep.subr.bf16.mxu0 0
    %1214 = vmatpush2.bf16.msra.mxu0 0
    %1215 = vmatprep.subr.bf16.mxu0 0
    %1216 = vmatpush2.bf16.msra.mxu0 0
    %1217 = vmatprep.subr.bf16.mxu0 0
    %1218 = vmatpush2.bf16.msra.mxu0 0
    %1219 = vmatprep.subr.bf16.mxu0 0
    %1220 = vmatpush2.bf16.msra.mxu0 0
    %1221 = vmatprep.subr.bf16.mxu0 0
    %1222 = vmatpush2.bf16.msra.mxu0 0
    %1223 = vmatprep.subr.bf16.mxu0 0
    %1224 = vmatpush2.bf16.msra.mxu0 0
    %1225 = vmatprep.mubr.bf16.mxu0 0
    %1226 = vmatmul.mubr.bf16.gmra.mxu0 %v1185
    %v1227 = vpop.f32.mrf.mxu0
    %v1228 = vadd.f32 0.0, %v1227
    %v1229 = vpop.f32.mrf.mxu0
    %v1230 = vpop.f32.mrf.mxu0
    %v1231 = vadd.f32 0.0, %v1230
    %v1232 = vpop.f32.mrf.mxu0
    %1233 = vmatprep.mubr.bf16.mxu0 0
    %1234 = vmatmul.mubr.bf16.gmra.mxu0 %v1188
    %v1235 = vpop.f32.mrf.mxu0
    %v1236 = vadd.f32 0.0, %v1235
    %v1237 = vpop.f32.mrf.mxu0
    %v1238 = vpop.f32.mrf.mxu0
    %v1239 = vpop.f32.mrf.mxu0
    %1240 = vdwg.mxu0
    %v1242 = vsel %vm174, %v1068, 0
    %v1245 = vsel %vm174, %v1069, 0
    %v1248 = vsel %vm181, %v1061, 0
    %1250 = vmatprep.subr.bf16.mxu0 0
    %1251 = vmatpush1.bf16.msra.mxu0 0
    %1252 = vmatprep.subr.bf16.mxu0 0
    %1253 = vmatpush1.bf16.msra.mxu0 0
    %1254 = vmatprep.subr.bf16.mxu0 0
    %1255 = vmatpush1.bf16.msra.mxu0 0
    %1256 = vmatprep.subr.bf16.mxu0 0
    %1257 = vmatpush1.bf16.msra.mxu0 0
    %1258 = vmatprep.subr.bf16.mxu0 0
    %1259 = vmatpush1.bf16.msra.mxu0 0
    %1260 = vmatprep.subr.bf16.mxu0 0
    %1261 = vmatpush1.bf16.msra.mxu0 0
    %1262 = vmatprep.subr.bf16.mxu0 0
    %1263 = vmatpush1.bf16.msra.mxu0 0
    %1264 = vmatprep.subr.bf16.mxu0 0
    %1265 = vmatpush1.bf16.msra.mxu0 %v1248
    %1266 = vmatprep.subr.bf16.mxu0 0
    %1267 = vmatpush2.bf16.msra.mxu0 0
    %1268 = vmatprep.subr.bf16.mxu0 0
    %1269 = vmatpush2.bf16.msra.mxu0 0
    %1270 = vmatprep.subr.bf16.mxu0 0
    %1271 = vmatpush2.bf16.msra.mxu0 0
    %1272 = vmatprep.subr.bf16.mxu0 0
    %1273 = vmatpush2.bf16.msra.mxu0 0
    %1274 = vmatprep.subr.bf16.mxu0 0
    %1275 = vmatpush2.bf16.msra.mxu0 0
    %1276 = vmatprep.subr.bf16.mxu0 0
    %1277 = vmatpush2.bf16.msra.mxu0 0
    %1278 = vmatprep.subr.bf16.mxu0 0
    %1279 = vmatpush2.bf16.msra.mxu0 0
    %1280 = vmatprep.subr.bf16.mxu0 0
    %1281 = vmatpush2.bf16.msra.mxu0 0
    %1282 = vmatprep.mubr.bf16.mxu0 0
    %1283 = vmatmul.mubr.bf16.gmra.mxu0 %v1242
    %v1284 = vpop.f32.mrf.mxu0
    %v1285 = vadd.f32 0.0, %v1284
    %v1286 = vpop.f32.mrf.mxu0
    %v1287 = vpop.f32.mrf.mxu0
    %v1288 = vadd.f32 0.0, %v1287
    %v1289 = vpop.f32.mrf.mxu0
    %1290 = vmatprep.mubr.bf16.mxu0 0
    %1291 = vmatmul.mubr.bf16.gmra.mxu0 %v1245
    %v1292 = vpop.f32.mrf.mxu0
    %v1293 = vadd.f32 0.0, %v1292
    %v1294 = vpop.f32.mrf.mxu0
    %v1295 = vpop.f32.mrf.mxu0
    %v1296 = vpop.f32.mrf.mxu0
    %1297 = vdwg.mxu0
    %v1298 = vsel %vm318, %v1114, 0.0
    %v1299 = vsel %vm318, %v1171, 0.0
    %v1300 = vadd.f32 %v1298, %v1299
    %v1301 = vsel %vm318, %v1228, 0.0
    %v1302 = vadd.f32 %v1300, %v1301
    %v1303 = vsel %vm318, %v1285, 0.0
    %v1304 = vadd.f32 %v1302, %v1303
    %v1305 = vsel %vm318, %v1117, 0.0
    %v1306 = vsel %vm318, %v1174, 0.0
    %v1307 = vadd.f32 %v1305, %v1306
    %v1308 = vsel %vm318, %v1231, 0.0
    %v1309 = vadd.f32 %v1307, %v1308
    %v1310 = vsel %vm318, %v1288, 0.0
    %v1311 = vadd.f32 %v1309, %v1310
    %v1312 = vsel %vm318, %v1122, 0.0
    %v1313 = vsel %vm318, %v1179, 0.0
    %v1314 = vadd.f32 %v1312, %v1313
    %v1315 = vsel %vm318, %v1236, 0.0
    %v1316 = vadd.f32 %v1314, %v1315
    %v1317 = vsel %vm318, %v1293, 0.0
    %v1318 = vadd.f32 %v1316, %v1317
    %v1319 = vld [vmem:[#allocation7] sm:$0x1]
    %v1321 = vlaneseq
    %v1322 = vshrl.u32 %v1321, 7
    %v1323 = vsub.s32 0, %v1322
    %v1324 = vrot.slane %v1319, %v1323
    %v1326 = vadd.f32 %v1304, %v1324
    %v1327 = vadd.f32 %v1311, %v1324
    %v1328 = vadd.f32 %v1318, %v1324
    %v1329 = vadd.f32 %v220, %v1326
    %v1330 = vadd.f32 %v223, %v1327
    %v1331 = vadd.f32 %v228, %v1328
    %v1332 = vld [vmem:[#allocation8] sm:$0x1]
    %v1334 = vlaneseq
    %v1335 = vshrl.u32 %v1334, 7
    %v1336 = vsub.s32 0, %v1335
    %v1337 = vrot.slane %v1332, %v1336
    %v1339 = vmul.f32 %v1329, %v1337
    %v1340 = vmul.f32 %v1330, %v1337
    %v1341 = vmul.f32 %v1331, %v1337
    %v1342 = vld [vmem:[#allocation10] sm:$0x1]
    %v1344 = vlaneseq
    %v1345 = vshrl.u32 %v1344, 7
    %v1346 = vsub.s32 0, %v1345
    %v1347 = vrot.slane %v1342, %v1346
    %v1349 = vadd.f32 %v1339, %v1347
    %v1350 = vadd.f32 %v1340, %v1347
    %v1351 = vadd.f32 %v1341, %v1347
    %v1352 = vpack.c.bf16 %v1350, %v1349
    %v1353 = vpack.c.bf16 %v1351, %v1351
    %v1354 = vld [vmem:[#allocation11] sm:$0xf]
    %v1355 = vld [vmem:[#allocation11 + $0x4] sm:$0xf]
    %v1356 = vld [vmem:[#allocation11 + $0x8] sm:$0xf]
    %v1357 = vld [vmem:[#allocation11 + $0xc] sm:$0xf]
    %v1358 = vld [vmem:[#allocation13] sm:$0x1]
    %v1360 = vlaneseq
    %v1361 = vshrl.u32 %v1360, 7
    %v1362 = vsub.s32 0, %v1361
    %v1363 = vrot.slane %v1358, %v1362
    %v1369 = vunpack.c.l.b16 %v1354
    %v1370 = vunpack.c.l.b16 %v1355
    %v1371 = vunpack.c.l.b16 %v1356
    %v1372 = vunpack.c.l.b16 %v1357
    %v1373 = vpack.c.b16 %v1370, %v1369
    %v1374 = vpack.c.b16 %v1372, %v1371
    %v1378 = vsel %vm318, %v1352, 0
    %v1381 = vsel %vm318, %v1353, 0
    %1383 = vmatprep.subr.bf16.mxu0 0
    %1384 = vmatpush1.bf16.msra.mxu0 0
    %1385 = vmatprep.subr.bf16.mxu0 0
    %1386 = vmatpush1.bf16.msra.mxu0 0
    %1387 = vmatprep.subr.bf16.mxu0 0
    %1388 = vmatpush1.bf16.msra.mxu0 0
    %1389 = vmatprep.subr.bf16.mxu0 0
    %1390 = vmatpush1.bf16.msra.mxu0 0
    %1391 = vmatprep.subr.bf16.mxu0 0
    %1392 = vmatpush1.bf16.msra.mxu0 0
    %1393 = vmatprep.subr.bf16.mxu0 0
    %1394 = vmatpush1.bf16.msra.mxu0 0
    %1395 = vmatprep.subr.bf16.mxu0 0
    %1396 = vmatpush1.bf16.msra.mxu0 %v1374
    %1397 = vmatprep.subr.bf16.mxu0 0
    %1398 = vmatpush1.bf16.msra.mxu0 %v1373
    %1399 = vmatprep.subr.bf16.mxu0 0
    %1400 = vmatpush2.bf16.msra.mxu0 0
    %1401 = vmatprep.subr.bf16.mxu0 0
    %1402 = vmatpush2.bf16.msra.mxu0 0
    %1403 = vmatprep.subr.bf16.mxu0 0
    %1404 = vmatpush2.bf16.msra.mxu0 0
    %1405 = vmatprep.subr.bf16.mxu0 0
    %1406 = vmatpush2.bf16.msra.mxu0 0
    %1407 = vmatprep.subr.bf16.mxu0 0
    %1408 = vmatpush2.bf16.msra.mxu0 0
    %1409 = vmatprep.subr.bf16.mxu0 0
    %1410 = vmatpush2.bf16.msra.mxu0 0
    %1411 = vmatprep.subr.bf16.mxu0 0
    %1412 = vmatpush2.bf16.msra.mxu0 0
    %1413 = vmatprep.subr.bf16.mxu0 0
    %1414 = vmatpush2.bf16.msra.mxu0 0
    %1415 = vmatprep.mubr.bf16.mxu0 0
    %1416 = vmatmul.mubr.bf16.gmra.mxu0 %v1378
    %v1417 = vpop.f32.mrf.mxu0
    %v1418 = vadd.f32 %v1363, %v1417
    %v1419 = vpop.f32.mrf.mxu0
    %v1420 = vpop.f32.mrf.mxu0
    %v1421 = vadd.f32 %v1363, %v1420
    %v1422 = vpop.f32.mrf.mxu0
    %1423 = vmatprep.mubr.bf16.mxu0 0
    %1424 = vmatmul.mubr.bf16.gmra.mxu0 %v1381
    %v1425 = vpop.f32.mrf.mxu0
    %v1426 = vadd.f32 %v1363, %v1425
    %v1427 = vpop.f32.mrf.mxu0
    %v1428 = vpop.f32.mrf.mxu0
    %v1429 = vpop.f32.mrf.mxu0
    %1430 = vdwg.mxu0
    %v1431 = vmax.f32 %v1418, 0.0
    %v1432 = vmax.f32 %v1421, 0.0
    %v1433 = vmax.f32 %v1426, 0.0
    %v1434 = vpack.c.bf16 %v1432, %v1431
    %v1435 = vpack.c.bf16 %v1433, %v1433
    %v1436 = vld [vmem:[%s13] sm:$0xf]
    %v1437 = vld [vmem:[%s13 + $0x4] sm:$0xf]
    %v1438 = vld [vmem:[%s13 + $0x8] sm:$0xf]
    %v1439 = vld [vmem:[%s13 + $0xc] sm:$0xf]
    %v1440 = vld [vmem:[%s13 + $0x10] sm:$0xf]
    %v1441 = vld [vmem:[%s13 + $0x14] sm:$0xf]
    %v1442 = vld [vmem:[%s13 + $0x18] sm:$0xf]
    %v1443 = vld [vmem:[%s13 + $0x1c] sm:$0xf]
    %v1444 = vld [vmem:[%s14] sm:$0x1]
    %v1446 = vlaneseq
    %v1447 = vshrl.u32 %v1446, 7
    %v1448 = vsub.s32 0, %v1447
    %v1449 = vrot.slane %v1444, %v1448
    %v1459 = vunpack.c.l.b16 %v1436
    %v1460 = vunpack.c.l.b16 %v1437
    %v1461 = vunpack.c.l.b16 %v1438
    %v1462 = vunpack.c.l.b16 %v1439
    %v1463 = vunpack.c.l.b16 %v1440
    %v1464 = vunpack.c.l.b16 %v1441
    %v1465 = vunpack.c.l.b16 %v1442
    %v1466 = vunpack.c.l.b16 %v1443
    %v1467 = vpack.c.b16 %v1460, %v1459
    %v1468 = vpack.c.b16 %v1462, %v1461
    %v1469 = vpack.c.b16 %v1464, %v1463
    %v1470 = vpack.c.b16 %v1466, %v1465
    %vm1475 = vcmask 523264
    %v1477 = vsel %vm1475, %v1434, 0
    %v1480 = vsel %vm1475, %v1435, 0
    %1482 = vmatprep.subr.bf16.mxu0 0
    %1483 = vmatpush1.bf16.msra.mxu0 0
    %1484 = vmatprep.subr.bf16.mxu0 0
    %1485 = vmatpush1.bf16.msra.mxu0 0
    %1486 = vmatprep.subr.bf16.mxu0 0
    %1487 = vmatpush1.bf16.msra.mxu0 0
    %1488 = vmatprep.subr.bf16.mxu0 0
    %1489 = vmatpush1.bf16.msra.mxu0 0
    %1490 = vmatprep.subr.bf16.mxu0 0
    %1491 = vmatpush1.bf16.msra.mxu0 %v1470
    %1492 = vmatprep.subr.bf16.mxu0 0
    %1493 = vmatpush1.bf16.msra.mxu0 %v1469
    %1494 = vmatprep.subr.bf16.mxu0 0
    %1495 = vmatpush1.bf16.msra.mxu0 %v1468
    %1496 = vmatprep.subr.bf16.mxu0 0
    %1497 = vmatpush1.bf16.msra.mxu0 %v1467
    %1498 = vmatprep.subr.bf16.mxu0 0
    %1499 = vmatpush2.bf16.msra.mxu0 0
    %1500 = vmatprep.subr.bf16.mxu0 0
    %1501 = vmatpush2.bf16.msra.mxu0 0
    %1502 = vmatprep.subr.bf16.mxu0 0
    %1503 = vmatpush2.bf16.msra.mxu0 0
    %1504 = vmatprep.subr.bf16.mxu0 0
    %1505 = vmatpush2.bf16.msra.mxu0 0
    %1506 = vmatprep.subr.bf16.mxu0 0
    %1507 = vmatpush2.bf16.msra.mxu0 0
    %1508 = vmatprep.subr.bf16.mxu0 0
    %1509 = vmatpush2.bf16.msra.mxu0 0
    %1510 = vmatprep.subr.bf16.mxu0 0
    %1511 = vmatpush2.bf16.msra.mxu0 0
    %1512 = vmatprep.subr.bf16.mxu0 0
    %1513 = vmatpush2.bf16.msra.mxu0 0
    %1514 = vmatprep.mubr.bf16.mxu0 0
    %1515 = vmatmul.mubr.bf16.gmra.mxu0 %v1477
    %v1516 = vpop.f32.mrf.mxu0
    %v1517 = vadd.f32 %v1449, %v1516
    %v1518 = vpop.f32.mrf.mxu0
    %v1519 = vpop.f32.mrf.mxu0
    %v1520 = vadd.f32 %v1449, %v1519
    %v1521 = vpop.f32.mrf.mxu0
    %1522 = vmatprep.mubr.bf16.mxu0 0
    %1523 = vmatmul.mubr.bf16.gmra.mxu0 %v1480
    %v1524 = vpop.f32.mrf.mxu0
    %v1525 = vadd.f32 %v1449, %v1524
    %v1526 = vpop.f32.mrf.mxu0
    %v1527 = vpop.f32.mrf.mxu0
    %v1528 = vpop.f32.mrf.mxu0
    %1529 = vdwg.mxu0
    %v1530 = vadd.f32 %v1349, %v1517
    %v1531 = vadd.f32 %v1350, %v1520
    %v1532 = vadd.f32 %v1351, %v1525
    %v1533 = vld [vmem:[%s15] sm:$0x1]
    %v1535 = vlaneseq
    %v1536 = vshrl.u32 %v1535, 7
    %v1537 = vsub.s32 0, %v1536
    %v1538 = vrot.slane %v1533, %v1537
    %v1540 = vmul.f32 %v1530, %v1538
    %v1541 = vmul.f32 %v1531, %v1538
    %v1542 = vmul.f32 %v1532, %v1538
    %v1543 = vld [vmem:[%s16] sm:$0x1]
    %v1545 = vlaneseq
    %v1546 = vshrl.u32 %v1545, 7
    %v1547 = vsub.s32 0, %v1546
    %v1548 = vrot.slane %v1543, %v1547
    %v1550 = vadd.f32 %v1540, %v1548
    %v1551 = vadd.f32 %v1541, %v1548
    %v1552 = vadd.f32 %v1542, %v1548
    %v1553 = vpack.c.bf16 %v1551, %v1550
    %v1554 = vpack.c.bf16 %v1552, %v1552
    %s1555 = scalar_lea.vmem %s5, 16
    %v1556 = vld [vmem:[%s1555] sm:$0xf]
    %v1557 = vld [vmem:[%s1555 + $0x4] sm:$0xf]
    %v1558 = vld [vmem:[%s1555 + $0x8] sm:$0xf]
    %v1559 = vld [vmem:[%s1555 + $0xc] sm:$0xf]
    %s1560 = scalar_lea.vmem [#allocation5], 1
    %v1561 = vld [vmem:[%s1560] sm:$0x1]
    %v1563 = vlaneseq
    %v1564 = vshrl.u32 %v1563, 7
    %v1565 = vsub.s32 0, %v1564
    %v1566 = vrot.slane %v1561, %v1565
    %v1572 = vunpack.c.l.b16 %v1556
    %v1573 = vunpack.c.l.b16 %v1557
    %v1574 = vunpack.c.l.b16 %v1558
    %v1575 = vunpack.c.l.b16 %v1559
    %v1576 = vpack.c.b16 %v1573, %v1572
    %v1577 = vpack.c.b16 %v1575, %v1574
    %v1581 = vsel %vm318, %v1553, 0
    %v1584 = vsel %vm318, %v1554, 0
    %1586 = vmatprep.subr.bf16.mxu0 0
    %1587 = vmatpush1.bf16.msra.mxu0 0
    %1588 = vmatprep.subr.bf16.mxu0 0
    %1589 = vmatpush1.bf16.msra.mxu0 0
    %1590 = vmatprep.subr.bf16.mxu0 0
    %1591 = vmatpush1.bf16.msra.mxu0 0
    %1592 = vmatprep.subr.bf16.mxu0 0
    %1593 = vmatpush1.bf16.msra.mxu0 0
    %1594 = vmatprep.subr.bf16.mxu0 0
    %1595 = vmatpush1.bf16.msra.mxu0 0
    %1596 = vmatprep.subr.bf16.mxu0 0
    %1597 = vmatpush1.bf16.msra.mxu0 0
    %1598 = vmatprep.subr.bf16.mxu0 0
    %1599 = vmatpush1.bf16.msra.mxu0 %v1577
    %1600 = vmatprep.subr.bf16.mxu0 0
    %1601 = vmatpush1.bf16.msra.mxu0 %v1576
    %1602 = vmatprep.subr.bf16.mxu0 0
    %1603 = vmatpush2.bf16.msra.mxu0 0
    %1604 = vmatprep.subr.bf16.mxu0 0
    %1605 = vmatpush2.bf16.msra.mxu0 0
    %1606 = vmatprep.subr.bf16.mxu0 0
    %1607 = vmatpush2.bf16.msra.mxu0 0
    %1608 = vmatprep.subr.bf16.mxu0 0
    %1609 = vmatpush2.bf16.msra.mxu0 0
    %1610 = vmatprep.subr.bf16.mxu0 0
    %1611 = vmatpush2.bf16.msra.mxu0 0
    %1612 = vmatprep.subr.bf16.mxu0 0
    %1613 = vmatpush2.bf16.msra.mxu0 0
    %1614 = vmatprep.subr.bf16.mxu0 0
    %1615 = vmatpush2.bf16.msra.mxu0 0
    %1616 = vmatprep.subr.bf16.mxu0 0
    %1617 = vmatpush2.bf16.msra.mxu0 0
    %1618 = vmatprep.mubr.bf16.mxu0 0
    %1619 = vmatmul.mubr.bf16.gmra.mxu0 %v1581
    %v1620 = vpop.f32.mrf.mxu0
    %v1621 = vadd.f32 %v1566, %v1620
    %v1622 = vpop.f32.mrf.mxu0
    %v1623 = vpop.f32.mrf.mxu0
    %v1624 = vadd.f32 %v1566, %v1623
    %v1625 = vpop.f32.mrf.mxu0
    %1626 = vmatprep.mubr.bf16.mxu0 0
    %1627 = vmatmul.mubr.bf16.gmra.mxu0 %v1584
    %v1628 = vpop.f32.mrf.mxu0
    %v1629 = vadd.f32 %v1566, %v1628
    %v1630 = vpop.f32.mrf.mxu0
    %v1631 = vpop.f32.mrf.mxu0
    %v1632 = vpop.f32.mrf.mxu0
    %1633 = vdwg.mxu0
    %v1634 = vpack.c.bf16 %v1624, %v1621
    %v1635 = vpack.c.bf16 %v1629, %v1629
    %1638 = vrot.lane.b32.xlu0 %v1634, 120
    %v1639 = vpop.permute.xlu0 %1638
    %1640 = vrot.lane.b32.xlu0 %v1635, 120
    %v1641 = vpop.permute.xlu0 %1640
    %1642 = vrot.lane.b32.xlu0 %v1634, 112
    %v1643 = vpop.permute.xlu0 %1642
    %1644 = vrot.lane.b32.xlu0 %v1635, 112
    %v1645 = vpop.permute.xlu0 %1644
    %1646 = vrot.lane.b32.xlu0 %v1634, 104
    %v1647 = vpop.permute.xlu0 %1646
    %1648 = vrot.lane.b32.xlu0 %v1635, 104
    %v1649 = vpop.permute.xlu0 %1648
    %1650 = vrot.lane.b32.xlu0 %v1634, 96
    %v1651 = vpop.permute.xlu0 %1650
    %1652 = vrot.lane.b32.xlu0 %v1635, 96
    %v1653 = vpop.permute.xlu0 %1652
    %v1655 = vsel %vm174, %v1634, 0
    %v1658 = vsel %vm174, %v1635, 0
    %v1661 = vsel %vm174, %v1651, 0
    %v1664 = vsel %vm174, %v1653, 0
    %1666 = vmatprep.subr.bf16.mxu0 0
    %1667 = vmatpush1.bf16.xpose.msra.mxu0 0
    %1668 = vmatprep.subr.bf16.mxu0 0
    %1669 = vmatpush1.bf16.xpose.msra.mxu0 0
    %1670 = vmatprep.subr.bf16.mxu0 0
    %1671 = vmatpush1.bf16.xpose.msra.mxu0 0
    %1672 = vmatprep.subr.bf16.mxu0 0
    %1673 = vmatpush1.bf16.xpose.msra.mxu0 0
    %1674 = vmatprep.subr.bf16.mxu0 0
    %1675 = vmatpush1.bf16.xpose.msra.mxu0 0
    %1676 = vmatprep.subr.bf16.mxu0 0
    %1677 = vmatpush1.bf16.xpose.msra.mxu0 0
    %1678 = vmatprep.subr.bf16.mxu0 0
    %1679 = vmatpush1.bf16.xpose.msra.mxu0 %v1664
    %1680 = vmatprep.subr.bf16.mxu0 0
    %1681 = vmatpush1.bf16.xpose.msra.mxu0 %v1661
    %1682 = vmatprep.subr.bf16.mxu0 0
    %1683 = vmatpush2.bf16.xpose.msra.mxu0 0
    %1684 = vmatprep.subr.bf16.mxu0 0
    %1685 = vmatpush2.bf16.xpose.msra.mxu0 0
    %1686 = vmatprep.subr.bf16.mxu0 0
    %1687 = vmatpush2.bf16.xpose.msra.mxu0 0
    %1688 = vmatprep.subr.bf16.mxu0 0
    %1689 = vmatpush2.bf16.xpose.msra.mxu0 0
    %1690 = vmatprep.subr.bf16.mxu0 0
    %1691 = vmatpush2.bf16.xpose.msra.mxu0 0
    %1692 = vmatprep.subr.bf16.mxu0 0
    %1693 = vmatpush2.bf16.xpose.msra.mxu0 0
    %1694 = vmatprep.subr.bf16.mxu0 0
    %1695 = vmatpush2.bf16.xpose.msra.mxu0 0
    %1696 = vmatprep.subr.bf16.mxu0 0
    %1697 = vmatpush2.bf16.xpose.msra.mxu0 0
    %1698 = vmatprep.mubr.bf16.mxu0 0
    %1699 = vmatmul.mubr.bf16.gmra.mxu0 %v1655
    %v1700 = vpop.f32.mrf.mxu0
    %v1701 = vadd.f32 0.0, %v1700
    %v1702 = vpop.f32.mrf.mxu0
    %v1703 = vpop.f32.mrf.mxu0
    %v1704 = vadd.f32 0.0, %v1703
    %v1705 = vpop.f32.mrf.mxu0
    %1706 = vmatprep.mubr.bf16.mxu0 0
    %1707 = vmatmul.mubr.bf16.gmra.mxu0 %v1658
    %v1708 = vpop.f32.mrf.mxu0
    %v1709 = vadd.f32 0.0, %v1708
    %v1710 = vpop.f32.mrf.mxu0
    %v1711 = vpop.f32.mrf.mxu0
    %v1712 = vpop.f32.mrf.mxu0
    %1713 = vdwg.mxu0
    %1714 = vrot.lane.b32.xlu0 %v1639, 96
    %v1715 = vpop.permute.xlu0 %1714
    %1716 = vrot.lane.b32.xlu0 %v1641, 96
    %v1717 = vpop.permute.xlu0 %1716
    %v1719 = vsel %vm174, %v1639, 0
    %v1722 = vsel %vm174, %v1641, 0
    %v1725 = vsel %vm174, %v1715, 0
    %v1728 = vsel %vm174, %v1717, 0
    %1730 = vmatprep.subr.bf16.mxu0 0
    %1731 = vmatpush1.bf16.xpose.msra.mxu0 0
    %1732 = vmatprep.subr.bf16.mxu0 0
    %1733 = vmatpush1.bf16.xpose.msra.mxu0 0
    %1734 = vmatprep.subr.bf16.mxu0 0
    %1735 = vmatpush1.bf16.xpose.msra.mxu0 0
    %1736 = vmatprep.subr.bf16.mxu0 0
    %1737 = vmatpush1.bf16.xpose.msra.mxu0 0
    %1738 = vmatprep.subr.bf16.mxu0 0
    %1739 = vmatpush1.bf16.xpose.msra.mxu0 0
    %1740 = vmatprep.subr.bf16.mxu0 0
    %1741 = vmatpush1.bf16.xpose.msra.mxu0 0
    %1742 = vmatprep.subr.bf16.mxu0 0
    %1743 = vmatpush1.bf16.xpose.msra.mxu0 %v1728
    %1744 = vmatprep.subr.bf16.mxu0 0
    %1745 = vmatpush1.bf16.xpose.msra.mxu0 %v1725
    %1746 = vmatprep.subr.bf16.mxu0 0
    %1747 = vmatpush2.bf16.xpose.msra.mxu0 0
    %1748 = vmatprep.subr.bf16.mxu0 0
    %1749 = vmatpush2.bf16.xpose.msra.mxu0 0
    %1750 = vmatprep.subr.bf16.mxu0 0
    %1751 = vmatpush2.bf16.xpose.msra.mxu0 0
    %1752 = vmatprep.subr.bf16.mxu0 0
    %1753 = vmatpush2.bf16.xpose.msra.mxu0 0
    %1754 = vmatprep.subr.bf16.mxu0 0
    %1755 = vmatpush2.bf16.xpose.msra.mxu0 0
    %1756 = vmatprep.subr.bf16.mxu0 0
    %1757 = vmatpush2.bf16.xpose.msra.mxu0 0
    %1758 = vmatprep.subr.bf16.mxu0 0
    %1759 = vmatpush2.bf16.xpose.msra.mxu0 0
    %1760 = vmatprep.subr.bf16.mxu0 0
    %1761 = vmatpush2.bf16.xpose.msra.mxu0 0
    %1762 = vmatprep.mubr.bf16.mxu0 0
    %1763 = vmatmul.mubr.bf16.gmra.mxu0 %v1719
    %v1764 = vpop.f32.mrf.mxu0
    %v1765 = vadd.f32 0.0, %v1764
    %v1766 = vpop.f32.mrf.mxu0
    %v1767 = vpop.f32.mrf.mxu0
    %v1768 = vadd.f32 0.0, %v1767
    %v1769 = vpop.f32.mrf.mxu0
    %1770 = vmatprep.mubr.bf16.mxu0 0
    %1771 = vmatmul.mubr.bf16.gmra.mxu0 %v1722
    %v1772 = vpop.f32.mrf.mxu0
    %v1773 = vadd.f32 0.0, %v1772
    %v1774 = vpop.f32.mrf.mxu0
    %v1775 = vpop.f32.mrf.mxu0
    %v1776 = vpop.f32.mrf.mxu0
    %1777 = vdwg.mxu0
    %1778 = vrot.lane.b32.xlu0 %v1643, 96
    %v1779 = vpop.permute.xlu0 %1778
    %1780 = vrot.lane.b32.xlu0 %v1645, 96
    %v1781 = vpop.permute.xlu0 %1780
    %v1783 = vsel %vm174, %v1643, 0
    %v1786 = vsel %vm174, %v1645, 0
    %v1789 = vsel %vm174, %v1779, 0
    %v1792 = vsel %vm174, %v1781, 0
    %1794 = vmatprep.subr.bf16.mxu0 0
    %1795 = vmatpush1.bf16.xpose.msra.mxu0 0
    %1796 = vmatprep.subr.bf16.mxu0 0
    %1797 = vmatpush1.bf16.xpose.msra.mxu0 0
    %1798 = vmatprep.subr.bf16.mxu0 0
    %1799 = vmatpush1.bf16.xpose.msra.mxu0 0
    %1800 = vmatprep.subr.bf16.mxu0 0
    %1801 = vmatpush1.bf16.xpose.msra.mxu0 0
    %1802 = vmatprep.subr.bf16.mxu0 0
    %1803 = vmatpush1.bf16.xpose.msra.mxu0 0
    %1804 = vmatprep.subr.bf16.mxu0 0
    %1805 = vmatpush1.bf16.xpose.msra.mxu0 0
    %1806 = vmatprep.subr.bf16.mxu0 0
    %1807 = vmatpush1.bf16.xpose.msra.mxu0 %v1792
    %1808 = vmatprep.subr.bf16.mxu0 0
    %1809 = vmatpush1.bf16.xpose.msra.mxu0 %v1789
    %1810 = vmatprep.subr.bf16.mxu0 0
    %1811 = vmatpush2.bf16.xpose.msra.mxu0 0
    %1812 = vmatprep.subr.bf16.mxu0 0
    %1813 = vmatpush2.bf16.xpose.msra.mxu0 0
    %1814 = vmatprep.subr.bf16.mxu0 0
    %1815 = vmatpush2.bf16.xpose.msra.mxu0 0
    %1816 = vmatprep.subr.bf16.mxu0 0
    %1817 = vmatpush2.bf16.xpose.msra.mxu0 0
    %1818 = vmatprep.subr.bf16.mxu0 0
    %1819 = vmatpush2.bf16.xpose.msra.mxu0 0
    %1820 = vmatprep.subr.bf16.mxu0 0
    %1821 = vmatpush2.bf16.xpose.msra.mxu0 0
    %1822 = vmatprep.subr.bf16.mxu0 0
    %1823 = vmatpush2.bf16.xpose.msra.mxu0 0
    %1824 = vmatprep.subr.bf16.mxu0 0
    %1825 = vmatpush2.bf16.xpose.msra.mxu0 0
    %1826 = vmatprep.mubr.bf16.mxu0 0
    %1827 = vmatmul.mubr.bf16.gmra.mxu0 %v1783
    %v1828 = vpop.f32.mrf.mxu0
    %v1829 = vadd.f32 0.0, %v1828
    %v1830 = vpop.f32.mrf.mxu0
    %v1831 = vpop.f32.mrf.mxu0
    %v1832 = vadd.f32 0.0, %v1831
    %v1833 = vpop.f32.mrf.mxu0
    %1834 = vmatprep.mubr.bf16.mxu0 0
    %1835 = vmatmul.mubr.bf16.gmra.mxu0 %v1786
    %v1836 = vpop.f32.mrf.mxu0
    %v1837 = vadd.f32 0.0, %v1836
    %v1838 = vpop.f32.mrf.mxu0
    %v1839 = vpop.f32.mrf.mxu0
    %v1840 = vpop.f32.mrf.mxu0
    %1841 = vdwg.mxu0
    %1842 = vrot.lane.b32.xlu0 %v1647, 96
    %v1843 = vpop.permute.xlu0 %1842
    %1844 = vrot.lane.b32.xlu0 %v1649, 96
    %v1845 = vpop.permute.xlu0 %1844
    %v1847 = vsel %vm174, %v1647, 0
    %v1850 = vsel %vm174, %v1649, 0
    %v1853 = vsel %vm174, %v1843, 0
    %v1856 = vsel %vm174, %v1845, 0
    %1858 = vmatprep.subr.bf16.mxu0 0
    %1859 = vmatpush1.bf16.xpose.msra.mxu0 0
    %1860 = vmatprep.subr.bf16.mxu0 0
    %1861 = vmatpush1.bf16.xpose.msra.mxu0 0
    %1862 = vmatprep.subr.bf16.mxu0 0
    %1863 = vmatpush1.bf16.xpose.msra.mxu0 0
    %1864 = vmatprep.subr.bf16.mxu0 0
    %1865 = vmatpush1.bf16.xpose.msra.mxu0 0
    %1866 = vmatprep.subr.bf16.mxu0 0
    %1867 = vmatpush1.bf16.xpose.msra.mxu0 0
    %1868 = vmatprep.subr.bf16.mxu0 0
    %1869 = vmatpush1.bf16.xpose.msra.mxu0 0
    %1870 = vmatprep.subr.bf16.mxu0 0
    %1871 = vmatpush1.bf16.xpose.msra.mxu0 %v1856
    %1872 = vmatprep.subr.bf16.mxu0 0
    %1873 = vmatpush1.bf16.xpose.msra.mxu0 %v1853
    %1874 = vmatprep.subr.bf16.mxu0 0
    %1875 = vmatpush2.bf16.xpose.msra.mxu0 0
    %1876 = vmatprep.subr.bf16.mxu0 0
    %1877 = vmatpush2.bf16.xpose.msra.mxu0 0
    %1878 = vmatprep.subr.bf16.mxu0 0
    %1879 = vmatpush2.bf16.xpose.msra.mxu0 0
    %1880 = vmatprep.subr.bf16.mxu0 0
    %1881 = vmatpush2.bf16.xpose.msra.mxu0 0
    %1882 = vmatprep.subr.bf16.mxu0 0
    %1883 = vmatpush2.bf16.xpose.msra.mxu0 0
    %1884 = vmatprep.subr.bf16.mxu0 0
    %1885 = vmatpush2.bf16.xpose.msra.mxu0 0
    %1886 = vmatprep.subr.bf16.mxu0 0
    %1887 = vmatpush2.bf16.xpose.msra.mxu0 0
    %1888 = vmatprep.subr.bf16.mxu0 0
    %1889 = vmatpush2.bf16.xpose.msra.mxu0 0
    %1890 = vmatprep.mubr.bf16.mxu0 0
    %1891 = vmatmul.mubr.bf16.gmra.mxu0 %v1847
    %v1892 = vpop.f32.mrf.mxu0
    %v1893 = vadd.f32 0.0, %v1892
    %v1894 = vpop.f32.mrf.mxu0
    %v1895 = vpop.f32.mrf.mxu0
    %v1896 = vadd.f32 0.0, %v1895
    %v1897 = vpop.f32.mrf.mxu0
    %1898 = vmatprep.mubr.bf16.mxu0 0
    %1899 = vmatmul.mubr.bf16.gmra.mxu0 %v1850
    %v1900 = vpop.f32.mrf.mxu0
    %v1901 = vadd.f32 0.0, %v1900
    %v1902 = vpop.f32.mrf.mxu0
    %v1903 = vpop.f32.mrf.mxu0
    %v1904 = vpop.f32.mrf.mxu0
    %1905 = vdwg.mxu0
    %v1906 = vmul.f32 %v1701, 0.35355338
    %v1907 = vmul.f32 %v1704, 0.35355338
    %v1908 = vmul.f32 %v1709, 0.35355338
    %v1909 = vmul.f32 %v1765, 0.35355338
    %v1910 = vmul.f32 %v1768, 0.35355338
    %v1911 = vmul.f32 %v1773, 0.35355338
    %v1912 = vmul.f32 %v1829, 0.35355338
    %v1913 = vmul.f32 %v1832, 0.35355338
    %v1914 = vmul.f32 %v1837, 0.35355338
    %v1915 = vmul.f32 %v1893, 0.35355338
    %v1916 = vmul.f32 %v1896, 0.35355338
    %v1917 = vmul.f32 %v1901, 0.35355338
    %v1918 = vadd.f32 %v1906, %v645
    %v1919 = vadd.f32 %v1907, %v646
    %v1920 = vadd.f32 %v1908, %v647
    %v1921 = vadd.f32 %v1909, %v648
    %v1922 = vadd.f32 %v1910, %v649
    %v1923 = vadd.f32 %v1911, %v650
    %v1924 = vadd.f32 %v1912, %v651
    %v1925 = vadd.f32 %v1913, %v652
    %v1926 = vadd.f32 %v1914, %v653
    %v1927 = vadd.f32 %v1915, %v654
    %v1928 = vadd.f32 %v1916, %v655
    %v1929 = vadd.f32 %v1917, %v656
    %v1930 = vadd.f32 %v1918, %v290
    %v1931 = vadd.f32 %v1919, %v291
    %v1932 = vadd.f32 %v1920, %v292
    %v1933 = vadd.f32 %v1921, %v290
    %v1934 = vadd.f32 %v1922, %v291
    %v1935 = vadd.f32 %v1923, %v292
    %v1936 = vadd.f32 %v1924, %v290
    %v1937 = vadd.f32 %v1925, %v291
    %v1938 = vadd.f32 %v1926, %v292
    %v1939 = vadd.f32 %v1927, %v290
    %v1940 = vadd.f32 %v1928, %v291
    %v1941 = vadd.f32 %v1929, %v292
    %v1942 = vsel %vm669, %v1930, -inf
    %1943 = vmax.xlane.f32.xlu0 %v1942
    %v1944 = vpop.xlane.xlu0 %1943
    %v1945 = vsel %vm669, %v1931, -inf
    %1946 = vmax.xlane.f32.xlu0 %v1945
    %v1947 = vpop.xlane.xlu0 %1946
    %v1948 = vsel %vm669, %v1932, -inf
    %1949 = vmax.xlane.f32.xlu0 %v1948
    %v1950 = vpop.xlane.xlu0 %1949
    %v1951 = vsel %vm669, %v1933, -inf
    %1952 = vmax.xlane.f32.xlu0 %v1951
    %v1953 = vpop.xlane.xlu0 %1952
    %v1954 = vsel %vm669, %v1934, -inf
    %1955 = vmax.xlane.f32.xlu0 %v1954
    %v1956 = vpop.xlane.xlu0 %1955
    %v1957 = vsel %vm669, %v1935, -inf
    %1958 = vmax.xlane.f32.xlu0 %v1957
    %v1959 = vpop.xlane.xlu0 %1958
    %v1960 = vsel %vm669, %v1936, -inf
    %1961 = vmax.xlane.f32.xlu0 %v1960
    %v1962 = vpop.xlane.xlu0 %1961
    %v1963 = vsel %vm669, %v1937, -inf
    %1964 = vmax.xlane.f32.xlu0 %v1963
    %v1965 = vpop.xlane.xlu0 %1964
    %v1966 = vsel %vm669, %v1938, -inf
    %1967 = vmax.xlane.f32.xlu0 %v1966
    %v1968 = vpop.xlane.xlu0 %1967
    %v1969 = vsel %vm669, %v1939, -inf
    %1970 = vmax.xlane.f32.xlu0 %v1969
    %v1971 = vpop.xlane.xlu0 %1970
    %v1972 = vsel %vm669, %v1940, -inf
    %1973 = vmax.xlane.f32.xlu0 %v1972
    %v1974 = vpop.xlane.xlu0 %1973
    %v1975 = vsel %vm669, %v1941, -inf
    %1976 = vmax.xlane.f32.xlu0 %v1975
    %v1977 = vpop.xlane.xlu0 %1976
    %v1978 = vsub.f32 %v1930, %v1944
    %v1979 = vsub.f32 %v1931, %v1947
    %v1980 = vsub.f32 %v1932, %v1950
    %v1981 = vsub.f32 %v1933, %v1953
    %v1982 = vsub.f32 %v1934, %v1956
    %v1983 = vsub.f32 %v1935, %v1959
    %v1984 = vsub.f32 %v1936, %v1962
    %v1985 = vsub.f32 %v1937, %v1965
    %v1986 = vsub.f32 %v1938, %v1968
    %v1987 = vsub.f32 %v1939, %v1971
    %v1988 = vsub.f32 %v1940, %v1974
    %v1989 = vsub.f32 %v1941, %v1977
    %v1990 = vmul.f32 %v1978, 1.442695
    %v1991 = vpow.pop %v1990
    %v1992 = vmul.f32 %v1979, 1.442695
    %v1993 = vpow.pop %v1992
    %v1994 = vmul.f32 %v1980, 1.442695
    %v1995 = vpow.pop %v1994
    %v1996 = vmul.f32 %v1981, 1.442695
    %v1997 = vpow.pop %v1996
    %v1998 = vmul.f32 %v1982, 1.442695
    %v1999 = vpow.pop %v1998
    %v2000 = vmul.f32 %v1983, 1.442695
    %v2001 = vpow.pop %v2000
    %v2002 = vmul.f32 %v1984, 1.442695
    %v2003 = vpow.pop %v2002
    %v2004 = vmul.f32 %v1985, 1.442695
    %v2005 = vpow.pop %v2004
    %v2006 = vmul.f32 %v1986, 1.442695
    %v2007 = vpow.pop %v2006
    %v2008 = vmul.f32 %v1987, 1.442695
    %v2009 = vpow.pop %v2008
    %v2010 = vmul.f32 %v1988, 1.442695
    %v2011 = vpow.pop %v2010
    %v2012 = vmul.f32 %v1989, 1.442695
    %v2013 = vpow.pop %v2012
    %v2014 = vsel %vm669, %v1991, 0.0
    %2015 = vadd.xlane.f32.xlu0 %v2014
    %v2016 = vpop.xlane.xlu0 %2015
    %v2017 = vsel %vm669, %v1993, 0.0
    %2018 = vadd.xlane.f32.xlu0 %v2017
    %v2019 = vpop.xlane.xlu0 %2018
    %v2020 = vsel %vm669, %v1995, 0.0
    %2021 = vadd.xlane.f32.xlu0 %v2020
    %v2022 = vpop.xlane.xlu0 %2021
    %v2023 = vsel %vm669, %v1997, 0.0
    %2024 = vadd.xlane.f32.xlu0 %v2023
    %v2025 = vpop.xlane.xlu0 %2024
    %v2026 = vsel %vm669, %v1999, 0.0
    %2027 = vadd.xlane.f32.xlu0 %v2026
    %v2028 = vpop.xlane.xlu0 %2027
    %v2029 = vsel %vm669, %v2001, 0.0
    %2030 = vadd.xlane.f32.xlu0 %v2029
    %v2031 = vpop.xlane.xlu0 %2030
    %v2032 = vsel %vm669, %v2003, 0.0
    %2033 = vadd.xlane.f32.xlu0 %v2032
    %v2034 = vpop.xlane.xlu0 %2033
    %v2035 = vsel %vm669, %v2005, 0.0
    %2036 = vadd.xlane.f32.xlu0 %v2035
    %v2037 = vpop.xlane.xlu0 %2036
    %v2038 = vsel %vm669, %v2007, 0.0
    %2039 = vadd.xlane.f32.xlu0 %v2038
    %v2040 = vpop.xlane.xlu0 %2039
    %v2041 = vsel %vm669, %v2009, 0.0
    %2042 = vadd.xlane.f32.xlu0 %v2041
    %v2043 = vpop.xlane.xlu0 %2042
    %v2044 = vsel %vm669, %v2011, 0.0
    %2045 = vadd.xlane.f32.xlu0 %v2044
    %v2046 = vpop.xlane.xlu0 %2045
    %v2047 = vsel %vm669, %v2013, 0.0
    %2048 = vadd.xlane.f32.xlu0 %v2047
    %v2049 = vpop.xlane.xlu0 %2048
    %v2050 = vrcp.pop %v2016
    %v2051 = vrcp.pop %v2019
    %v2052 = vrcp.pop %v2022
    %v2053 = vrcp.pop %v2025
    %v2054 = vrcp.pop %v2028
    %v2055 = vrcp.pop %v2031
    %v2056 = vrcp.pop %v2034
    %v2057 = vrcp.pop %v2037
    %v2058 = vrcp.pop %v2040
    %v2059 = vrcp.pop %v2043
    %v2060 = vrcp.pop %v2046
    %v2061 = vrcp.pop %v2049
    %v2062 = vmul.f32 %v1991, %v2050
    %v2063 = vmul.f32 %v1993, %v2051
    %v2064 = vmul.f32 %v1995, %v2052
    %v2065 = vmul.f32 %v1997, %v2053
    %v2066 = vmul.f32 %v1999, %v2054
    %v2067 = vmul.f32 %v2001, %v2055
    %v2068 = vmul.f32 %v2003, %v2056
    %v2069 = vmul.f32 %v2005, %v2057
    %v2070 = vmul.f32 %v2007, %v2058
    %v2071 = vmul.f32 %v2009, %v2059
    %v2072 = vmul.f32 %v2011, %v2060
    %v2073 = vmul.f32 %v2013, %v2061
    %v2074 = vpack.c.bf16 %v2063, %v2062
    %v2075 = vpack.c.bf16 %v2064, %v2064
    %v2076 = vpack.c.bf16 %v2066, %v2065
    %v2077 = vpack.c.bf16 %v2067, %v2067
    %v2078 = vpack.c.bf16 %v2069, %v2068
    %v2079 = vpack.c.bf16 %v2070, %v2070
    %v2080 = vpack.c.bf16 %v2072, %v2071
    %v2081 = vpack.c.bf16 %v2073, %v2073
    %2082 = vrot.lane.b32.xlu0 %v1634, 64
    %v2083 = vpop.permute.xlu0 %2082
    %2084 = vrot.lane.b32.xlu0 %v1635, 64
    %v2085 = vpop.permute.xlu0 %2084
    %v2088 = vsel %vm669, %v2074, 0
    %v2091 = vsel %vm669, %v2075, 0
    %v2094 = vsel %vm181, %v2085, 0
    %2096 = vmatprep.subr.bf16.mxu0 0
    %2097 = vmatpush1.bf16.msra.mxu0 0
    %2098 = vmatprep.subr.bf16.mxu0 0
    %2099 = vmatpush1.bf16.msra.mxu0 0
    %2100 = vmatprep.subr.bf16.mxu0 0
    %2101 = vmatpush1.bf16.msra.mxu0 0
    %2102 = vmatprep.subr.bf16.mxu0 0
    %2103 = vmatpush1.bf16.msra.mxu0 0
    %2104 = vmatprep.subr.bf16.mxu0 0
    %2105 = vmatpush1.bf16.msra.mxu0 0
    %2106 = vmatprep.subr.bf16.mxu0 0
    %2107 = vmatpush1.bf16.msra.mxu0 0
    %2108 = vmatprep.subr.bf16.mxu0 0
    %2109 = vmatpush1.bf16.msra.mxu0 %v2094
    %2110 = vmatprep.subr.bf16.mxu0 0
    %2111 = vmatpush1.bf16.msra.mxu0 %v2083
    %2112 = vmatprep.subr.bf16.mxu0 0
    %2113 = vmatpush2.bf16.msra.mxu0 0
    %2114 = vmatprep.subr.bf16.mxu0 0
    %2115 = vmatpush2.bf16.msra.mxu0 0
    %2116 = vmatprep.subr.bf16.mxu0 0
    %2117 = vmatpush2.bf16.msra.mxu0 0
    %2118 = vmatprep.subr.bf16.mxu0 0
    %2119 = vmatpush2.bf16.msra.mxu0 0
    %2120 = vmatprep.subr.bf16.mxu0 0
    %2121 = vmatpush2.bf16.msra.mxu0 0
    %2122 = vmatprep.subr.bf16.mxu0 0
    %2123 = vmatpush2.bf16.msra.mxu0 0
    %2124 = vmatprep.subr.bf16.mxu0 0
    %2125 = vmatpush2.bf16.msra.mxu0 0
    %2126 = vmatprep.subr.bf16.mxu0 0
    %2127 = vmatpush2.bf16.msra.mxu0 0
    %2128 = vmatprep.mubr.bf16.mxu0 0
    %2129 = vmatmul.mubr.bf16.gmra.mxu0 %v2088
    %v2130 = vpop.f32.mrf.mxu0
    %v2131 = vadd.f32 0.0, %v2130
    %v2132 = vpop.f32.mrf.mxu0
    %v2133 = vpop.f32.mrf.mxu0
    %v2134 = vadd.f32 0.0, %v2133
    %v2135 = vpop.f32.mrf.mxu0
    %2136 = vmatprep.mubr.bf16.mxu0 0
    %2137 = vmatmul.mubr.bf16.gmra.mxu0 %v2091
    %v2138 = vpop.f32.mrf.mxu0
    %v2139 = vadd.f32 0.0, %v2138
    %v2140 = vpop.f32.mrf.mxu0
    %v2141 = vpop.f32.mrf.mxu0
    %v2142 = vpop.f32.mrf.mxu0
    %2143 = vdwg.mxu0
    %2144 = vrot.lane.b32.xlu0 %v1639, 64
    %v2145 = vpop.permute.xlu0 %2144
    %2146 = vrot.lane.b32.xlu0 %v1641, 64
    %v2147 = vpop.permute.xlu0 %2146
    %v2150 = vsel %vm669, %v2076, 0
    %v2153 = vsel %vm669, %v2077, 0
    %v2156 = vsel %vm181, %v2147, 0
    %2158 = vmatprep.subr.bf16.mxu0 0
    %2159 = vmatpush1.bf16.msra.mxu0 0
    %2160 = vmatprep.subr.bf16.mxu0 0
    %2161 = vmatpush1.bf16.msra.mxu0 0
    %2162 = vmatprep.subr.bf16.mxu0 0
    %2163 = vmatpush1.bf16.msra.mxu0 0
    %2164 = vmatprep.subr.bf16.mxu0 0
    %2165 = vmatpush1.bf16.msra.mxu0 0
    %2166 = vmatprep.subr.bf16.mxu0 0
    %2167 = vmatpush1.bf16.msra.mxu0 0
    %2168 = vmatprep.subr.bf16.mxu0 0
    %2169 = vmatpush1.bf16.msra.mxu0 0
    %2170 = vmatprep.subr.bf16.mxu0 0
    %2171 = vmatpush1.bf16.msra.mxu0 %v2156
    %2172 = vmatprep.subr.bf16.mxu0 0
    %2173 = vmatpush1.bf16.msra.mxu0 %v2145
    %2174 = vmatprep.subr.bf16.mxu0 0
    %2175 = vmatpush2.bf16.msra.mxu0 0
    %2176 = vmatprep.subr.bf16.mxu0 0
    %2177 = vmatpush2.bf16.msra.mxu0 0
    %2178 = vmatprep.subr.bf16.mxu0 0
    %2179 = vmatpush2.bf16.msra.mxu0 0
    %2180 = vmatprep.subr.bf16.mxu0 0
    %2181 = vmatpush2.bf16.msra.mxu0 0
    %2182 = vmatprep.subr.bf16.mxu0 0
    %2183 = vmatpush2.bf16.msra.mxu0 0
    %2184 = vmatprep.subr.bf16.mxu0 0
    %2185 = vmatpush2.bf16.msra.mxu0 0
    %2186 = vmatprep.subr.bf16.mxu0 0
    %2187 = vmatpush2.bf16.msra.mxu0 0
    %2188 = vmatprep.subr.bf16.mxu0 0
    %2189 = vmatpush2.bf16.msra.mxu0 0
    %2190 = vmatprep.mubr.bf16.mxu0 0
    %2191 = vmatmul.mubr.bf16.gmra.mxu0 %v2150
    %v2192 = vpop.f32.mrf.mxu0
    %v2193 = vadd.f32 0.0, %v2192
    %v2194 = vpop.f32.mrf.mxu0
    %v2195 = vpop.f32.mrf.mxu0
    %v2196 = vadd.f32 0.0, %v2195
    %v2197 = vpop.f32.mrf.mxu0
    %2198 = vmatprep.mubr.bf16.mxu0 0
    %2199 = vmatmul.mubr.bf16.gmra.mxu0 %v2153
    %v2200 = vpop.f32.mrf.mxu0
    %v2201 = vadd.f32 0.0, %v2200
    %v2202 = vpop.f32.mrf.mxu0
    %v2203 = vpop.f32.mrf.mxu0
    %v2204 = vpop.f32.mrf.mxu0
    %2205 = vdwg.mxu0
    %2206 = vrot.lane.b32.xlu0 %v1643, 64
    %v2207 = vpop.permute.xlu0 %2206
    %2208 = vrot.lane.b32.xlu0 %v1645, 64
    %v2209 = vpop.permute.xlu0 %2208
    %v2212 = vsel %vm669, %v2078, 0
    %v2215 = vsel %vm669, %v2079, 0
    %v2218 = vsel %vm181, %v2209, 0
    %2220 = vmatprep.subr.bf16.mxu0 0
    %2221 = vmatpush1.bf16.msra.mxu0 0
    %2222 = vmatprep.subr.bf16.mxu0 0
    %2223 = vmatpush1.bf16.msra.mxu0 0
    %2224 = vmatprep.subr.bf16.mxu0 0
    %2225 = vmatpush1.bf16.msra.mxu0 0
    %2226 = vmatprep.subr.bf16.mxu0 0
    %2227 = vmatpush1.bf16.msra.mxu0 0
    %2228 = vmatprep.subr.bf16.mxu0 0
    %2229 = vmatpush1.bf16.msra.mxu0 0
    %2230 = vmatprep.subr.bf16.mxu0 0
    %2231 = vmatpush1.bf16.msra.mxu0 0
    %2232 = vmatprep.subr.bf16.mxu0 0
    %2233 = vmatpush1.bf16.msra.mxu0 %v2218
    %2234 = vmatprep.subr.bf16.mxu0 0
    %2235 = vmatpush1.bf16.msra.mxu0 %v2207
    %2236 = vmatprep.subr.bf16.mxu0 0
    %2237 = vmatpush2.bf16.msra.mxu0 0
    %2238 = vmatprep.subr.bf16.mxu0 0
    %2239 = vmatpush2.bf16.msra.mxu0 0
    %2240 = vmatprep.subr.bf16.mxu0 0
    %2241 = vmatpush2.bf16.msra.mxu0 0
    %2242 = vmatprep.subr.bf16.mxu0 0
    %2243 = vmatpush2.bf16.msra.mxu0 0
    %2244 = vmatprep.subr.bf16.mxu0 0
    %2245 = vmatpush2.bf16.msra.mxu0 0
    %2246 = vmatprep.subr.bf16.mxu0 0
    %2247 = vmatpush2.bf16.msra.mxu0 0
    %2248 = vmatprep.subr.bf16.mxu0 0
    %2249 = vmatpush2.bf16.msra.mxu0 0
    %2250 = vmatprep.subr.bf16.mxu0 0
    %2251 = vmatpush2.bf16.msra.mxu0 0
    %2252 = vmatprep.mubr.bf16.mxu0 0
    %2253 = vmatmul.mubr.bf16.gmra.mxu0 %v2212
    %v2254 = vpop.f32.mrf.mxu0
    %v2255 = vadd.f32 0.0, %v2254
    %v2256 = vpop.f32.mrf.mxu0
    %v2257 = vpop.f32.mrf.mxu0
    %v2258 = vadd.f32 0.0, %v2257
    %v2259 = vpop.f32.mrf.mxu0
    %2260 = vmatprep.mubr.bf16.mxu0 0
    %2261 = vmatmul.mubr.bf16.gmra.mxu0 %v2215
    %v2262 = vpop.f32.mrf.mxu0
    %v2263 = vadd.f32 0.0, %v2262
    %v2264 = vpop.f32.mrf.mxu0
    %v2265 = vpop.f32.mrf.mxu0
    %v2266 = vpop.f32.mrf.mxu0
    %2267 = vdwg.mxu0
    %2268 = vrot.lane.b32.xlu0 %v1647, 64
    %v2269 = vpop.permute.xlu0 %2268
    %2270 = vrot.lane.b32.xlu0 %v1649, 64
    %v2271 = vpop.permute.xlu0 %2270
    %v2274 = vsel %vm669, %v2080, 0
    %v2277 = vsel %vm669, %v2081, 0
    %v2280 = vsel %vm181, %v2271, 0
    %2282 = vmatprep.subr.bf16.mxu0 0
    %2283 = vmatpush1.bf16.msra.mxu0 0
    %2284 = vmatprep.subr.bf16.mxu0 0
    %2285 = vmatpush1.bf16.msra.mxu0 0
    %2286 = vmatprep.subr.bf16.mxu0 0
    %2287 = vmatpush1.bf16.msra.mxu0 0
    %2288 = vmatprep.subr.bf16.mxu0 0
    %2289 = vmatpush1.bf16.msra.mxu0 0
    %2290 = vmatprep.subr.bf16.mxu0 0
    %2291 = vmatpush1.bf16.msra.mxu0 0
    %2292 = vmatprep.subr.bf16.mxu0 0
    %2293 = vmatpush1.bf16.msra.mxu0 0
    %2294 = vmatprep.subr.bf16.mxu0 0
    %2295 = vmatpush1.bf16.msra.mxu0 %v2280
    %2296 = vmatprep.subr.bf16.mxu0 0
    %2297 = vmatpush1.bf16.msra.mxu0 %v2269
    %2298 = vmatprep.subr.bf16.mxu0 0
    %2299 = vmatpush2.bf16.msra.mxu0 0
    %2300 = vmatprep.subr.bf16.mxu0 0
    %2301 = vmatpush2.bf16.msra.mxu0 0
    %2302 = vmatprep.subr.bf16.mxu0 0
    %2303 = vmatpush2.bf16.msra.mxu0 0
    %2304 = vmatprep.subr.bf16.mxu0 0
    %2305 = vmatpush2.bf16.msra.mxu0 0
    %2306 = vmatprep.subr.bf16.mxu0 0
    %2307 = vmatpush2.bf16.msra.mxu0 0
    %2308 = vmatprep.subr.bf16.mxu0 0
    %2309 = vmatpush2.bf16.msra.mxu0 0
    %2310 = vmatprep.subr.bf16.mxu0 0
    %2311 = vmatpush2.bf16.msra.mxu0 0
    %2312 = vmatprep.subr.bf16.mxu0 0
    %2313 = vmatpush2.bf16.msra.mxu0 0
    %2314 = vmatprep.mubr.bf16.mxu0 0
    %2315 = vmatmul.mubr.bf16.gmra.mxu0 %v2274
    %v2316 = vpop.f32.mrf.mxu0
    %v2317 = vadd.f32 0.0, %v2316
    %v2318 = vpop.f32.mrf.mxu0
    %v2319 = vpop.f32.mrf.mxu0
    %v2320 = vadd.f32 0.0, %v2319
    %v2321 = vpop.f32.mrf.mxu0
    %2322 = vmatprep.mubr.bf16.mxu0 0
    %2323 = vmatmul.mubr.bf16.gmra.mxu0 %v2277
    %v2324 = vpop.f32.mrf.mxu0
    %v2325 = vadd.f32 0.0, %v2324
    %v2326 = vpop.f32.mrf.mxu0
    %v2327 = vpop.f32.mrf.mxu0
    %v2328 = vpop.f32.mrf.mxu0
    %2329 = vdwg.mxu0
    %s2330 = scalar_lea.vmem %s7, 16
    %v2331 = vld [vmem:[%s2330] sm:$0xf]
    %v2332 = vld [vmem:[%s2330 + $0x4] sm:$0xf]
    %v2333 = vld [vmem:[%s2330 + $0x8] sm:$0xf]
    %v2334 = vld [vmem:[%s2330 + $0xc] sm:$0xf]
    %v2335 = vpack.c.bf16 %v2134, %v2131
    %v2336 = vpack.c.bf16 %v2139, %v2139
    %v2337 = vpack.c.bf16 %v2196, %v2193
    %v2338 = vpack.c.bf16 %v2201, %v2201
    %v2339 = vpack.c.bf16 %v2258, %v2255
    %v2340 = vpack.c.bf16 %v2263, %v2263
    %v2341 = vpack.c.bf16 %v2320, %v2317
    %v2342 = vpack.c.bf16 %v2325, %v2325
    %v2344 = vsel %vm174, %v2335, 0
    %v2347 = vsel %vm174, %v2336, 0
    %v2350 = vsel %vm181, %v2331, 0
    %2352 = vmatprep.subr.bf16.mxu0 0
    %2353 = vmatpush1.bf16.msra.mxu0 0
    %2354 = vmatprep.subr.bf16.mxu0 0
    %2355 = vmatpush1.bf16.msra.mxu0 0
    %2356 = vmatprep.subr.bf16.mxu0 0
    %2357 = vmatpush1.bf16.msra.mxu0 0
    %2358 = vmatprep.subr.bf16.mxu0 0
    %2359 = vmatpush1.bf16.msra.mxu0 0
    %2360 = vmatprep.subr.bf16.mxu0 0
    %2361 = vmatpush1.bf16.msra.mxu0 0
    %2362 = vmatprep.subr.bf16.mxu0 0
    %2363 = vmatpush1.bf16.msra.mxu0 0
    %2364 = vmatprep.subr.bf16.mxu0 0
    %2365 = vmatpush1.bf16.msra.mxu0 0
    %2366 = vmatprep.subr.bf16.mxu0 0
    %2367 = vmatpush1.bf16.msra.mxu0 %v2350
    %2368 = vmatprep.subr.bf16.mxu0 0
    %2369 = vmatpush2.bf16.msra.mxu0 0
    %2370 = vmatprep.subr.bf16.mxu0 0
    %2371 = vmatpush2.bf16.msra.mxu0 0
    %2372 = vmatprep.subr.bf16.mxu0 0
    %2373 = vmatpush2.bf16.msra.mxu0 0
    %2374 = vmatprep.subr.bf16.mxu0 0
    %2375 = vmatpush2.bf16.msra.mxu0 0
    %2376 = vmatprep.subr.bf16.mxu0 0
    %2377 = vmatpush2.bf16.msra.mxu0 0
    %2378 = vmatprep.subr.bf16.mxu0 0
    %2379 = vmatpush2.bf16.msra.mxu0 0
    %2380 = vmatprep.subr.bf16.mxu0 0
    %2381 = vmatpush2.bf16.msra.mxu0 0
    %2382 = vmatprep.subr.bf16.mxu0 0
    %2383 = vmatpush2.bf16.msra.mxu0 0
    %2384 = vmatprep.mubr.bf16.mxu0 0
    %2385 = vmatmul.mubr.bf16.gmra.mxu0 %v2344
    %v2386 = vpop.f32.mrf.mxu0
    %v2387 = vadd.f32 0.0, %v2386
    %v2388 = vpop.f32.mrf.mxu0
    %v2389 = vpop.f32.mrf.mxu0
    %v2390 = vadd.f32 0.0, %v2389
    %v2391 = vpop.f32.mrf.mxu0
    %2392 = vmatprep.mubr.bf16.mxu0 0
    %2393 = vmatmul.mubr.bf16.gmra.mxu0 %v2347
    %v2394 = vpop.f32.mrf.mxu0
    %v2395 = vadd.f32 0.0, %v2394
    %v2396 = vpop.f32.mrf.mxu0
    %v2397 = vpop.f32.mrf.mxu0
    %v2398 = vpop.f32.mrf.mxu0
    %2399 = vdwg.mxu0
    %v2401 = vsel %vm174, %v2337, 0
    %v2404 = vsel %vm174, %v2338, 0
    %v2407 = vsel %vm181, %v2332, 0
    %2409 = vmatprep.subr.bf16.mxu0 0
    %2410 = vmatpush1.bf16.msra.mxu0 0
    %2411 = vmatprep.subr.bf16.mxu0 0
    %2412 = vmatpush1.bf16.msra.mxu0 0
    %2413 = vmatprep.subr.bf16.mxu0 0
    %2414 = vmatpush1.bf16.msra.mxu0 0
    %2415 = vmatprep.subr.bf16.mxu0 0
    %2416 = vmatpush1.bf16.msra.mxu0 0
    %2417 = vmatprep.subr.bf16.mxu0 0
    %2418 = vmatpush1.bf16.msra.mxu0 0
    %2419 = vmatprep.subr.bf16.mxu0 0
    %2420 = vmatpush1.bf16.msra.mxu0 0
    %2421 = vmatprep.subr.bf16.mxu0 0
    %2422 = vmatpush1.bf16.msra.mxu0 0
    %2423 = vmatprep.subr.bf16.mxu0 0
    %2424 = vmatpush1.bf16.msra.mxu0 %v2407
    %2425 = vmatprep.subr.bf16.mxu0 0
    %2426 = vmatpush2.bf16.msra.mxu0 0
    %2427 = vmatprep.subr.bf16.mxu0 0
    %2428 = vmatpush2.bf16.msra.mxu0 0
    %2429 = vmatprep.subr.bf16.mxu0 0
    %2430 = vmatpush2.bf16.msra.mxu0 0
    %2431 = vmatprep.subr.bf16.mxu0 0
    %2432 = vmatpush2.bf16.msra.mxu0 0
    %2433 = vmatprep.subr.bf16.mxu0 0
    %2434 = vmatpush2.bf16.msra.mxu0 0
    %2435 = vmatprep.subr.bf16.mxu0 0
    %2436 = vmatpush2.bf16.msra.mxu0 0
    %2437 = vmatprep.subr.bf16.mxu0 0
    %2438 = vmatpush2.bf16.msra.mxu0 0
    %2439 = vmatprep.subr.bf16.mxu0 0
    %2440 = vmatpush2.bf16.msra.mxu0 0
    %2441 = vmatprep.mubr.bf16.mxu0 0
    %2442 = vmatmul.mubr.bf16.gmra.mxu0 %v2401
    %v2443 = vpop.f32.mrf.mxu0
    %v2444 = vadd.f32 0.0, %v2443
    %v2445 = vpop.f32.mrf.mxu0
    %v2446 = vpop.f32.mrf.mxu0
    %v2447 = vadd.f32 0.0, %v2446
    %v2448 = vpop.f32.mrf.mxu0
    %2449 = vmatprep.mubr.bf16.mxu0 0
    %2450 = vmatmul.mubr.bf16.gmra.mxu0 %v2404
    %v2451 = vpop.f32.mrf.mxu0
    %v2452 = vadd.f32 0.0, %v2451
    %v2453 = vpop.f32.mrf.mxu0
    %v2454 = vpop.f32.mrf.mxu0
    %v2455 = vpop.f32.mrf.mxu0
    %2456 = vdwg.mxu0
    %v2458 = vsel %vm174, %v2339, 0
    %v2461 = vsel %vm174, %v2340, 0
    %v2464 = vsel %vm181, %v2333, 0
    %2466 = vmatprep.subr.bf16.mxu0 0
    %2467 = vmatpush1.bf16.msra.mxu0 0
    %2468 = vmatprep.subr.bf16.mxu0 0
    %2469 = vmatpush1.bf16.msra.mxu0 0
    %2470 = vmatprep.subr.bf16.mxu0 0
    %2471 = vmatpush1.bf16.msra.mxu0 0
    %2472 = vmatprep.subr.bf16.mxu0 0
    %2473 = vmatpush1.bf16.msra.mxu0 0
    %2474 = vmatprep.subr.bf16.mxu0 0
    %2475 = vmatpush1.bf16.msra.mxu0 0
    %2476 = vmatprep.subr.bf16.mxu0 0
    %2477 = vmatpush1.bf16.msra.mxu0 0
    %2478 = vmatprep.subr.bf16.mxu0 0
    %2479 = vmatpush1.bf16.msra.mxu0 0
    %2480 = vmatprep.subr.bf16.mxu0 0
    %2481 = vmatpush1.bf16.msra.mxu0 %v2464
    %2482 = vmatprep.subr.bf16.mxu0 0
    %2483 = vmatpush2.bf16.msra.mxu0 0
    %2484 = vmatprep.subr.bf16.mxu0 0
    %2485 = vmatpush2.bf16.msra.mxu0 0
    %2486 = vmatprep.subr.bf16.mxu0 0
    %2487 = vmatpush2.bf16.msra.mxu0 0
    %2488 = vmatprep.subr.bf16.mxu0 0
    %2489 = vmatpush2.bf16.msra.mxu0 0
    %2490 = vmatprep.subr.bf16.mxu0 0
    %2491 = vmatpush2.bf16.msra.mxu0 0
    %2492 = vmatprep.subr.bf16.mxu0 0
    %2493 = vmatpush2.bf16.msra.mxu0 0
    %2494 = vmatprep.subr.bf16.mxu0 0
    %2495 = vmatpush2.bf16.msra.mxu0 0
    %2496 = vmatprep.subr.bf16.mxu0 0
    %2497 = vmatpush2.bf16.msra.mxu0 0
    %2498 = vmatprep.mubr.bf16.mxu0 0
    %2499 = vmatmul.mubr.bf16.gmra.mxu0 %v2458
    %v2500 = vpop.f32.mrf.mxu0
    %v2501 = vadd.f32 0.0, %v2500
    %v2502 = vpop.f32.mrf.mxu0
    %v2503 = vpop.f32.mrf.mxu0
    %v2504 = vadd.f32 0.0, %v2503
    %v2505 = vpop.f32.mrf.mxu0
    %2506 = vmatprep.mubr.bf16.mxu0 0
    %2507 = vmatmul.mubr.bf16.gmra.mxu0 %v2461
    %v2508 = vpop.f32.mrf.mxu0
    %v2509 = vadd.f32 0.0, %v2508
    %v2510 = vpop.f32.mrf.mxu0
    %v2511 = vpop.f32.mrf.mxu0
    %v2512 = vpop.f32.mrf.mxu0
    %2513 = vdwg.mxu0
    %v2515 = vsel %vm174, %v2341, 0
    %v2518 = vsel %vm174, %v2342, 0
    %v2521 = vsel %vm181, %v2334, 0
    %2523 = vmatprep.subr.bf16.mxu0 0
    %2524 = vmatpush1.bf16.msra.mxu0 0
    %2525 = vmatprep.subr.bf16.mxu0 0
    %2526 = vmatpush1.bf16.msra.mxu0 0
    %2527 = vmatprep.subr.bf16.mxu0 0
    %2528 = vmatpush1.bf16.msra.mxu0 0
    %2529 = vmatprep.subr.bf16.mxu0 0
    %2530 = vmatpush1.bf16.msra.mxu0 0
    %2531 = vmatprep.subr.bf16.mxu0 0
    %2532 = vmatpush1.bf16.msra.mxu0 0
    %2533 = vmatprep.subr.bf16.mxu0 0
    %2534 = vmatpush1.bf16.msra.mxu0 0
    %2535 = vmatprep.subr.bf16.mxu0 0
    %2536 = vmatpush1.bf16.msra.mxu0 0
    %2537 = vmatprep.subr.bf16.mxu0 0
    %2538 = vmatpush1.bf16.msra.mxu0 %v2521
    %2539 = vmatprep.subr.bf16.mxu0 0
    %2540 = vmatpush2.bf16.msra.mxu0 0
    %2541 = vmatprep.subr.bf16.mxu0 0
    %2542 = vmatpush2.bf16.msra.mxu0 0
    %2543 = vmatprep.subr.bf16.mxu0 0
    %2544 = vmatpush2.bf16.msra.mxu0 0
    %2545 = vmatprep.subr.bf16.mxu0 0
    %2546 = vmatpush2.bf16.msra.mxu0 0
    %2547 = vmatprep.subr.bf16.mxu0 0
    %2548 = vmatpush2.bf16.msra.mxu0 0
    %2549 = vmatprep.subr.bf16.mxu0 0
    %2550 = vmatpush2.bf16.msra.mxu0 0
    %2551 = vmatprep.subr.bf16.mxu0 0
    %2552 = vmatpush2.bf16.msra.mxu0 0
    %2553 = vmatprep.subr.bf16.mxu0 0
    %2554 = vmatpush2.bf16.msra.mxu0 0
    %2555 = vmatprep.mubr.bf16.mxu0 0
    %2556 = vmatmul.mubr.bf16.gmra.mxu0 %v2515
    %v2557 = vpop.f32.mrf.mxu0
    %v2558 = vadd.f32 0.0, %v2557
    %v2559 = vpop.f32.mrf.mxu0
    %v2560 = vpop.f32.mrf.mxu0
    %v2561 = vadd.f32 0.0, %v2560
    %v2562 = vpop.f32.mrf.mxu0
    %2563 = vmatprep.mubr.bf16.mxu0 0
    %2564 = vmatmul.mubr.bf16.gmra.mxu0 %v2518
    %v2565 = vpop.f32.mrf.mxu0
    %v2566 = vadd.f32 0.0, %v2565
    %v2567 = vpop.f32.mrf.mxu0
    %v2568 = vpop.f32.mrf.mxu0
    %v2569 = vpop.f32.mrf.mxu0
    %2570 = vdwg.mxu0
    %v2571 = vsel %vm318, %v2387, 0.0
    %v2572 = vsel %vm318, %v2444, 0.0
    %v2573 = vadd.f32 %v2571, %v2572
    %v2574 = vsel %vm318, %v2501, 0.0
    %v2575 = vadd.f32 %v2573, %v2574
    %v2576 = vsel %vm318, %v2558, 0.0
    %v2577 = vadd.f32 %v2575, %v2576
    %v2578 = vsel %vm318, %v2390, 0.0
    %v2579 = vsel %vm318, %v2447, 0.0
    %v2580 = vadd.f32 %v2578, %v2579
    %v2581 = vsel %vm318, %v2504, 0.0
    %v2582 = vadd.f32 %v2580, %v2581
    %v2583 = vsel %vm318, %v2561, 0.0
    %v2584 = vadd.f32 %v2582, %v2583
    %v2585 = vsel %vm318, %v2395, 0.0
    %v2586 = vsel %vm318, %v2452, 0.0
    %v2587 = vadd.f32 %v2585, %v2586
    %v2588 = vsel %vm318, %v2509, 0.0
    %v2589 = vadd.f32 %v2587, %v2588
    %v2590 = vsel %vm318, %v2566, 0.0
    %v2591 = vadd.f32 %v2589, %v2590
    %s2592 = scalar_lea.vmem [#allocation7], 1
    %v2593 = vld [vmem:[%s2592] sm:$0x1]
    %v2595 = vlaneseq
    %v2596 = vshrl.u32 %v2595, 7
    %v2597 = vsub.s32 0, %v2596
    %v2598 = vrot.slane %v2593, %v2597
    %v2600 = vadd.f32 %v2577, %v2598
    %v2601 = vadd.f32 %v2584, %v2598
    %v2602 = vadd.f32 %v2591, %v2598
    %v2603 = vadd.f32 %v1550, %v2600
    %v2604 = vadd.f32 %v1551, %v2601
    %v2605 = vadd.f32 %v1552, %v2602
    %s2606 = scalar_lea.vmem [#allocation8], 1
    %v2607 = vld [vmem:[%s2606] sm:$0x1]
    %v2609 = vlaneseq
    %v2610 = vshrl.u32 %v2609, 7
    %v2611 = vsub.s32 0, %v2610
    %v2612 = vrot.slane %v2607, %v2611
    %v2614 = vmul.f32 %v2603, %v2612
    %v2615 = vmul.f32 %v2604, %v2612
    %v2616 = vmul.f32 %v2605, %v2612
    %s2617 = scalar_lea.vmem [#allocation10], 1
    %v2618 = vld [vmem:[%s2617] sm:$0x1]
    %v2620 = vlaneseq
    %v2621 = vshrl.u32 %v2620, 7
    %v2622 = vsub.s32 0, %v2621
    %v2623 = vrot.slane %v2618, %v2622
    %v2625 = vadd.f32 %v2614, %v2623
    %v2626 = vadd.f32 %v2615, %v2623
    %v2627 = vadd.f32 %v2616, %v2623
    %v2628 = vpack.c.bf16 %v2626, %v2625
    %v2629 = vpack.c.bf16 %v2627, %v2627
    %s2630 = scalar_lea.vmem [#allocation11], 16
    %v2631 = vld [vmem:[%s2630] sm:$0xf]
    %v2632 = vld [vmem:[%s2630 + $0x4] sm:$0xf]
    %v2633 = vld [vmem:[%s2630 + $0x8] sm:$0xf]
    %v2634 = vld [vmem:[%s2630 + $0xc] sm:$0xf]
    %s2635 = scalar_lea.vmem [#allocation13], 1
    %v2636 = vld [vmem:[%s2635] sm:$0x1]
    %v2638 = vlaneseq
    %v2639 = vshrl.u32 %v2638, 7
    %v2640 = vsub.s32 0, %v2639
    %v2641 = vrot.slane %v2636, %v2640
    %v2647 = vunpack.c.l.b16 %v2631
    %v2648 = vunpack.c.l.b16 %v2632
    %v2649 = vunpack.c.l.b16 %v2633
    %v2650 = vunpack.c.l.b16 %v2634
    %v2651 = vpack.c.b16 %v2648, %v2647
    %v2652 = vpack.c.b16 %v2650, %v2649
    %v2656 = vsel %vm318, %v2628, 0
    %v2659 = vsel %vm318, %v2629, 0
    %2661 = vmatprep.subr.bf16.mxu0 0
    %2662 = vmatpush1.bf16.msra.mxu0 0
    %2663 = vmatprep.subr.bf16.mxu0 0
    %2664 = vmatpush1.bf16.msra.mxu0 0
    %2665 = vmatprep.subr.bf16.mxu0 0
    %2666 = vmatpush1.bf16.msra.mxu0 0
    %2667 = vmatprep.subr.bf16.mxu0 0
    %2668 = vmatpush1.bf16.msra.mxu0 0
    %2669 = vmatprep.subr.bf16.mxu0 0
    %2670 = vmatpush1.bf16.msra.mxu0 0
    %2671 = vmatprep.subr.bf16.mxu0 0
    %2672 = vmatpush1.bf16.msra.mxu0 0
    %2673 = vmatprep.subr.bf16.mxu0 0
    %2674 = vmatpush1.bf16.msra.mxu0 %v2652
    %2675 = vmatprep.subr.bf16.mxu0 0
    %2676 = vmatpush1.bf16.msra.mxu0 %v2651
    %2677 = vmatprep.subr.bf16.mxu0 0
    %2678 = vmatpush2.bf16.msra.mxu0 0
    %2679 = vmatprep.subr.bf16.mxu0 0
    %2680 = vmatpush2.bf16.msra.mxu0 0
    %2681 = vmatprep.subr.bf16.mxu0 0
    %2682 = vmatpush2.bf16.msra.mxu0 0
    %2683 = vmatprep.subr.bf16.mxu0 0
    %2684 = vmatpush2.bf16.msra.mxu0 0
    %2685 = vmatprep.subr.bf16.mxu0 0
    %2686 = vmatpush2.bf16.msra.mxu0 0
    %2687 = vmatprep.subr.bf16.mxu0 0
    %2688 = vmatpush2.bf16.msra.mxu0 0
    %2689 = vmatprep.subr.bf16.mxu0 0
    %2690 = vmatpush2.bf16.msra.mxu0 0
    %2691 = vmatprep.subr.bf16.mxu0 0
    %2692 = vmatpush2.bf16.msra.mxu0 0
    %2693 = vmatprep.mubr.bf16.mxu0 0
    %2694 = vmatmul.mubr.bf16.gmra.mxu0 %v2656
    %v2695 = vpop.f32.mrf.mxu0
    %v2696 = vadd.f32 %v2641, %v2695
    %v2697 = vpop.f32.mrf.mxu0
    %v2698 = vpop.f32.mrf.mxu0
    %v2699 = vadd.f32 %v2641, %v2698
    %v2700 = vpop.f32.mrf.mxu0
    %2701 = vmatprep.mubr.bf16.mxu0 0
    %2702 = vmatmul.mubr.bf16.gmra.mxu0 %v2659
    %v2703 = vpop.f32.mrf.mxu0
    %v2704 = vadd.f32 %v2641, %v2703
    %v2705 = vpop.f32.mrf.mxu0
    %v2706 = vpop.f32.mrf.mxu0
    %v2707 = vpop.f32.mrf.mxu0
    %2708 = vdwg.mxu0
    %v2709 = vmax.f32 %v2696, 0.0
    %v2710 = vmax.f32 %v2699, 0.0
    %v2711 = vmax.f32 %v2704, 0.0
    %v2712 = vpack.c.bf16 %v2710, %v2709
    %v2713 = vpack.c.bf16 %v2711, %v2711
    %s2714 = scalar_lea.vmem %s13, 32
    %v2715 = vld [vmem:[%s2714] sm:$0xf]
    %v2716 = vld [vmem:[%s2714 + $0x4] sm:$0xf]
    %v2717 = vld [vmem:[%s2714 + $0x8] sm:$0xf]
    %v2718 = vld [vmem:[%s2714 + $0xc] sm:$0xf]
    %v2719 = vld [vmem:[%s2714 + $0x10] sm:$0xf]
    %v2720 = vld [vmem:[%s2714 + $0x14] sm:$0xf]
    %v2721 = vld [vmem:[%s2714 + $0x18] sm:$0xf]
    %v2722 = vld [vmem:[%s2714 + $0x1c] sm:$0xf]
    %s2723 = scalar_lea.vmem %s14, 1
    %v2724 = vld [vmem:[%s2723] sm:$0x1]
    %v2726 = vlaneseq
    %v2727 = vshrl.u32 %v2726, 7
    %v2728 = vsub.s32 0, %v2727
    %v2729 = vrot.slane %v2724, %v2728
    %v2739 = vunpack.c.l.b16 %v2715
    %v2740 = vunpack.c.l.b16 %v2716
    %v2741 = vunpack.c.l.b16 %v2717
    %v2742 = vunpack.c.l.b16 %v2718
    %v2743 = vunpack.c.l.b16 %v2719
    %v2744 = vunpack.c.l.b16 %v2720
    %v2745 = vunpack.c.l.b16 %v2721
    %v2746 = vunpack.c.l.b16 %v2722
    %v2747 = vpack.c.b16 %v2740, %v2739
    %v2748 = vpack.c.b16 %v2742, %v2741
    %v2749 = vpack.c.b16 %v2744, %v2743
    %v2750 = vpack.c.b16 %v2746, %v2745
    %v2756 = vsel %vm1475, %v2712, 0
    %v2759 = vsel %vm1475, %v2713, 0
    %2761 = vmatprep.subr.bf16.mxu0 0
    %2762 = vmatpush1.bf16.msra.mxu0 0
    %2763 = vmatprep.subr.bf16.mxu0 0
    %2764 = vmatpush1.bf16.msra.mxu0 0
    %2765 = vmatprep.subr.bf16.mxu0 0
    %2766 = vmatpush1.bf16.msra.mxu0 0
    %2767 = vmatprep.subr.bf16.mxu0 0
    %2768 = vmatpush1.bf16.msra.mxu0 0
    %2769 = vmatprep.subr.bf16.mxu0 0
    %2770 = vmatpush1.bf16.msra.mxu0 %v2750
    %2771 = vmatprep.subr.bf16.mxu0 0
    %2772 = vmatpush1.bf16.msra.mxu0 %v2749
    %2773 = vmatprep.subr.bf16.mxu0 0
    %2774 = vmatpush1.bf16.msra.mxu0 %v2748
    %2775 = vmatprep.subr.bf16.mxu0 0
    %2776 = vmatpush1.bf16.msra.mxu0 %v2747
    %2777 = vmatprep.subr.bf16.mxu0 0
    %2778 = vmatpush2.bf16.msra.mxu0 0
    %2779 = vmatprep.subr.bf16.mxu0 0
    %2780 = vmatpush2.bf16.msra.mxu0 0
    %2781 = vmatprep.subr.bf16.mxu0 0
    %2782 = vmatpush2.bf16.msra.mxu0 0
    %2783 = vmatprep.subr.bf16.mxu0 0
    %2784 = vmatpush2.bf16.msra.mxu0 0
    %2785 = vmatprep.subr.bf16.mxu0 0
    %2786 = vmatpush2.bf16.msra.mxu0 0
    %2787 = vmatprep.subr.bf16.mxu0 0
    %2788 = vmatpush2.bf16.msra.mxu0 0
    %2789 = vmatprep.subr.bf16.mxu0 0
    %2790 = vmatpush2.bf16.msra.mxu0 0
    %2791 = vmatprep.subr.bf16.mxu0 0
    %2792 = vmatpush2.bf16.msra.mxu0 0
    %2793 = vmatprep.mubr.bf16.mxu0 0
    %2794 = vmatmul.mubr.bf16.gmra.mxu0 %v2756
    %v2795 = vpop.f32.mrf.mxu0
    %v2796 = vadd.f32 %v2729, %v2795
    %v2797 = vpop.f32.mrf.mxu0
    %v2798 = vpop.f32.mrf.mxu0
    %v2799 = vadd.f32 %v2729, %v2798
    %v2800 = vpop.f32.mrf.mxu0
    %2801 = vmatprep.mubr.bf16.mxu0 0
    %2802 = vmatmul.mubr.bf16.gmra.mxu0 %v2759
    %v2803 = vpop.f32.mrf.mxu0
    %v2804 = vadd.f32 %v2729, %v2803
    %v2805 = vpop.f32.mrf.mxu0
    %v2806 = vpop.f32.mrf.mxu0
    %v2807 = vpop.f32.mrf.mxu0
    %2808 = vdwg.mxu0
    %v2809 = vadd.f32 %v2625, %v2796
    %v2810 = vadd.f32 %v2626, %v2799
    %v2811 = vadd.f32 %v2627, %v2804
    %s2812 = scalar_lea.vmem %s15, 1
    %v2813 = vld [vmem:[%s2812] sm:$0x1]
    %v2815 = vlaneseq
    %v2816 = vshrl.u32 %v2815, 7
    %v2817 = vsub.s32 0, %v2816
    %v2818 = vrot.slane %v2813, %v2817
    %v2820 = vmul.f32 %v2809, %v2818
    %v2821 = vmul.f32 %v2810, %v2818
    %v2822 = vmul.f32 %v2811, %v2818
    %s2823 = scalar_lea.vmem %s16, 1
    %v2824 = vld [vmem:[%s2823] sm:$0x1]
    %v2826 = vlaneseq
    %v2827 = vshrl.u32 %v2826, 7
    %v2828 = vsub.s32 0, %v2827
    %v2829 = vrot.slane %v2824, %v2828
    %v2831 = vadd.f32 %v2820, %v2829
    %v2832 = vadd.f32 %v2821, %v2829
    %v2833 = vadd.f32 %v2822, %v2829
    %v2834 = vpack.c.bf16 %v2831, %v2831
    %v2835 = vpack.c.bf16 %v2832, %v2832
    %v2836 = vpack.c.bf16 %v2833, %v2833
    %v2837 = vld [vmem:[%s17] sm:$0xf]
    %v2838 = vld [vmem:[%s17 + $0x4] sm:$0xf]
    %v2839 = vld [vmem:[%s17 + $0x8] sm:$0xf]
    %v2840 = vld [vmem:[%s17 + $0xc] sm:$0xf]
    %v2841 = vld [vmem:[%s17 + $0x10] sm:$0xf]
    %v2842 = vld [vmem:[%s17 + $0x14] sm:$0xf]
    %v2843 = vld [vmem:[%s17 + $0x18] sm:$0xf]
    %v2844 = vld [vmem:[%s17 + $0x1c] sm:$0xf]
    %v2845 = vld [vmem:[%s17 + $0x20] sm:$0xf]
    %v2846 = vld [vmem:[%s17 + $0x24] sm:$0xf]
    %v2847 = vld [vmem:[%s17 + $0x28] sm:$0xf]
    %v2848 = vld [vmem:[%s17 + $0x2c] sm:$0xf]
    %v2853 = vunpack.c.l.b16 %v2837
    %v2854 = vunpack.c.l.b16 %v2838
    %v2855 = vunpack.c.l.b16 %v2839
    %v2856 = vunpack.c.l.b16 %v2840
    %v2857 = vpack.c.b16 %v2854, %v2853
    %v2858 = vpack.c.b16 %v2856, %v2855
    %v2862 = vsel %vm318, %v2834, 0
    %2864 = vmatprep.subr.bf16.mxu0 0
    %2865 = vmatpush1.bf16.msra.mxu0 0
    %2866 = vmatprep.subr.bf16.mxu0 0
    %2867 = vmatpush1.bf16.msra.mxu0 0
    %2868 = vmatprep.subr.bf16.mxu0 0
    %2869 = vmatpush1.bf16.msra.mxu0 0
    %2870 = vmatprep.subr.bf16.mxu0 0
    %2871 = vmatpush1.bf16.msra.mxu0 0
    %2872 = vmatprep.subr.bf16.mxu0 0
    %2873 = vmatpush1.bf16.msra.mxu0 0
    %2874 = vmatprep.subr.bf16.mxu0 0
    %2875 = vmatpush1.bf16.msra.mxu0 0
    %2876 = vmatprep.subr.bf16.mxu0 0
    %2877 = vmatpush1.bf16.msra.mxu0 %v2858
    %2878 = vmatprep.subr.bf16.mxu0 0
    %2879 = vmatpush1.bf16.msra.mxu0 %v2857
    %2880 = vmatprep.subr.bf16.mxu0 0
    %2881 = vmatpush2.bf16.msra.mxu0 0
    %2882 = vmatprep.subr.bf16.mxu0 0
    %2883 = vmatpush2.bf16.msra.mxu0 0
    %2884 = vmatprep.subr.bf16.mxu0 0
    %2885 = vmatpush2.bf16.msra.mxu0 0
    %2886 = vmatprep.subr.bf16.mxu0 0
    %2887 = vmatpush2.bf16.msra.mxu0 0
    %2888 = vmatprep.subr.bf16.mxu0 0
    %2889 = vmatpush2.bf16.msra.mxu0 0
    %2890 = vmatprep.subr.bf16.mxu0 0
    %2891 = vmatpush2.bf16.msra.mxu0 0
    %2892 = vmatprep.subr.bf16.mxu0 0
    %2893 = vmatpush2.bf16.msra.mxu0 0
    %2894 = vmatprep.subr.bf16.mxu0 0
    %2895 = vmatpush2.bf16.msra.mxu0 0
    %2896 = vmatprep.mubr.bf16.mxu0 0
    %2897 = vmatmul.mubr.bf16.gmra.mxu0 %v2862
    %v2898 = vpop.f32.mrf.mxu0
    %v2899 = vadd.f32 0.0, %v2898
    %v2900 = vpop.f32.mrf.mxu0
    %v2901 = vpop.f32.mrf.mxu0
    %v2902 = vpop.f32.mrf.mxu0
    %2903 = vdwg.mxu0
    %v2908 = vunpack.c.l.b16 %v2841
    %v2909 = vunpack.c.l.b16 %v2842
    %v2910 = vunpack.c.l.b16 %v2843
    %v2911 = vunpack.c.l.b16 %v2844
    %v2912 = vpack.c.b16 %v2909, %v2908
    %v2913 = vpack.c.b16 %v2911, %v2910
    %v2917 = vsel %vm318, %v2835, 0
    %2919 = vmatprep.subr.bf16.mxu0 0
    %2920 = vmatpush1.bf16.msra.mxu0 0
    %2921 = vmatprep.subr.bf16.mxu0 0
    %2922 = vmatpush1.bf16.msra.mxu0 0
    %2923 = vmatprep.subr.bf16.mxu0 0
    %2924 = vmatpush1.bf16.msra.mxu0 0
    %2925 = vmatprep.subr.bf16.mxu0 0
    %2926 = vmatpush1.bf16.msra.mxu0 0
    %2927 = vmatprep.subr.bf16.mxu0 0
    %2928 = vmatpush1.bf16.msra.mxu0 0
    %2929 = vmatprep.subr.bf16.mxu0 0
    %2930 = vmatpush1.bf16.msra.mxu0 0
    %2931 = vmatprep.subr.bf16.mxu0 0
    %2932 = vmatpush1.bf16.msra.mxu0 %v2913
    %2933 = vmatprep.subr.bf16.mxu0 0
    %2934 = vmatpush1.bf16.msra.mxu0 %v2912
    %2935 = vmatprep.subr.bf16.mxu0 0
    %2936 = vmatpush2.bf16.msra.mxu0 0
    %2937 = vmatprep.subr.bf16.mxu0 0
    %2938 = vmatpush2.bf16.msra.mxu0 0
    %2939 = vmatprep.subr.bf16.mxu0 0
    %2940 = vmatpush2.bf16.msra.mxu0 0
    %2941 = vmatprep.subr.bf16.mxu0 0
    %2942 = vmatpush2.bf16.msra.mxu0 0
    %2943 = vmatprep.subr.bf16.mxu0 0
    %2944 = vmatpush2.bf16.msra.mxu0 0
    %2945 = vmatprep.subr.bf16.mxu0 0
    %2946 = vmatpush2.bf16.msra.mxu0 0
    %2947 = vmatprep.subr.bf16.mxu0 0
    %2948 = vmatpush2.bf16.msra.mxu0 0
    %2949 = vmatprep.subr.bf16.mxu0 0
    %2950 = vmatpush2.bf16.msra.mxu0 0
    %2951 = vmatprep.mubr.bf16.mxu0 0
    %2952 = vmatmul.mubr.bf16.gmra.mxu0 %v2917
    %v2953 = vpop.f32.mrf.mxu0
    %v2954 = vadd.f32 0.0, %v2953
    %v2955 = vpop.f32.mrf.mxu0
    %v2956 = vpop.f32.mrf.mxu0
    %v2957 = vpop.f32.mrf.mxu0
    %2958 = vdwg.mxu0
    %v2963 = vunpack.c.l.b16 %v2845
    %v2964 = vunpack.c.l.b16 %v2846
    %v2965 = vunpack.c.l.b16 %v2847
    %v2966 = vunpack.c.l.b16 %v2848
    %v2967 = vpack.c.b16 %v2964, %v2963
    %v2968 = vpack.c.b16 %v2966, %v2965
    %v2972 = vsel %vm318, %v2836, 0
    %2974 = vmatprep.subr.bf16.mxu0 0
    %2975 = vmatpush1.bf16.msra.mxu0 0
    %2976 = vmatprep.subr.bf16.mxu0 0
    %2977 = vmatpush1.bf16.msra.mxu0 0
    %2978 = vmatprep.subr.bf16.mxu0 0
    %2979 = vmatpush1.bf16.msra.mxu0 0
    %2980 = vmatprep.subr.bf16.mxu0 0
    %2981 = vmatpush1.bf16.msra.mxu0 0
    %2982 = vmatprep.subr.bf16.mxu0 0
    %2983 = vmatpush1.bf16.msra.mxu0 0
    %2984 = vmatprep.subr.bf16.mxu0 0
    %2985 = vmatpush1.bf16.msra.mxu0 0
    %2986 = vmatprep.subr.bf16.mxu0 0
    %2987 = vmatpush1.bf16.msra.mxu0 %v2968
    %2988 = vmatprep.subr.bf16.mxu0 0
    %2989 = vmatpush1.bf16.msra.mxu0 %v2967
    %2990 = vmatprep.subr.bf16.mxu0 0
    %2991 = vmatpush2.bf16.msra.mxu0 0
    %2992 = vmatprep.subr.bf16.mxu0 0
    %2993 = vmatpush2.bf16.msra.mxu0 0
    %2994 = vmatprep.subr.bf16.mxu0 0
    %2995 = vmatpush2.bf16.msra.mxu0 0
    %2996 = vmatprep.subr.bf16.mxu0 0
    %2997 = vmatpush2.bf16.msra.mxu0 0
    %2998 = vmatprep.subr.bf16.mxu0 0
    %2999 = vmatpush2.bf16.msra.mxu0 0
    %3000 = vmatprep.subr.bf16.mxu0 0
    %3001 = vmatpush2.bf16.msra.mxu0 0
    %3002 = vmatprep.subr.bf16.mxu0 0
    %3003 = vmatpush2.bf16.msra.mxu0 0
    %3004 = vmatprep.subr.bf16.mxu0 0
    %3005 = vmatpush2.bf16.msra.mxu0 0
    %3006 = vmatprep.mubr.bf16.mxu0 0
    %3007 = vmatmul.mubr.bf16.gmra.mxu0 %v2972
    %v3008 = vpop.f32.mrf.mxu0
    %v3009 = vadd.f32 0.0, %v3008
    %v3010 = vpop.f32.mrf.mxu0
    %v3011 = vpop.f32.mrf.mxu0
    %v3012 = vpop.f32.mrf.mxu0
    %3013 = vdwg.mxu0
    %v3014 = vadd.f32 %v2899, %v2954
    %v3015 = vadd.f32 %v3014, %v3009
    %v3016 = vld [vmem:[%s18] sm:$0x1]
    %v3018 = vlaneseq
    %v3019 = vshrl.u32 %v3018, 7
    %v3020 = vsub.s32 0, %v3019
    %v3021 = vrot.slane %v3016, %v3020
    %v3023 = vadd.f32 %v3015, %v3021
    %v3024 = vld [vmem:[%s2] sm:$0xff]
    %3026 = vset.pattern.permute.xlu0 0
    %3027 = vperm.xlu0 %3026, %v3024
    %v3028 = vpop.permute.xlu0 %3027
    %v3030 = vmul.f32 %v3023, %v3028
    %v3031 = vld [vmem:[%s1] sm:$0xff]
    %3033 = vset.pattern.permute.xlu0 0
    %3034 = vperm.xlu0 %3033, %v3031
    %v3035 = vpop.permute.xlu0 %3034
    %v3037 = vadd.f32 %v3030, %v3035
    %3038 = vst [vmem:[#allocation14] sm:$0xff] %v3037
    // Predicated region
    $region106: #{tpu_custom_call.1} parent=1 // pred_check
      _
    $region107: #{tpu_custom_call.1} parent=1 // pred_check_branch
      %3040 = sbr.rel (0) target = $region109
    $region108: #{tpu_custom_call.1} parent=1 // pred_region
      %s3042 = ssub.s32 128, 128
      %3043 = vsyncadd [#allocation4], %s3042
      %s3045 = sshll.u32 [#allocation14], 4
      %s3046 = int_to_ptr.vmem [resolvable:$true] %s3045
      %3048 = dma.vmem_to_hbm [thread:$0]  %s3046, 128, %s19, [#allocation4]
    $region109: #{tpu_custom_call.1} parent=1 // pred_fallthru
      _
    // Predicated region
    $region110: #{tpu_custom_call.1} parent=1 // pred_check
      _
    $region111: #{tpu_custom_call.1} parent=1 // pred_check_branch
      %3050 = sbr.rel (0) target = $region113
    $region112: #{tpu_custom_call.1} parent=1 // pred_region
      %3051 = dma.done [#allocation4], 128
    $region113: #{tpu_custom_call.1} parent=1 // pred_fallthru
      _
    %3052 = vsyncpa [#allocation3], 1
    %3053 = vsyncpa [#allocation6], 1
    %3054 = vsyncpa [#allocation9], 1
    %3055 = vsyncpa [#allocation12], 1
    %3056 = vsyncpa [#allocation4], 1

</llo_original>
